<compile_context>
chip_gen: v7x
topology: tpu7x:2x2x1
jax: 0.10.0
libtpu: 0.0.40
codegen_flags: <defaults>
</compile_context>

<pallas_src>
import math

import numpy as np
import jax
import jax.numpy as jnp
from jax import lax
from jax.experimental import pallas as pl
from jax.experimental.pallas import tpu as pltpu

POOL_OUT = 14  # hard-coded in LDPProjector: TokenDownLayer((14, 14))


def _gelu_exact(x):
    """Exact (erf-based) GELU == PyTorch nn.GELU() default.

    erf is evaluated with the Abramowitz & Stegun 7.1.26 polynomial (|err| < 1.5e-7)
    so the kernel only needs VPU/EUP ops.
    # TODO(synk): switch to lax.erf once a Mosaic lowering for erf_p is guaranteed.
    """
    z = x * 0.7071067811865476
    a1, a2, a3, a4, a5 = 0.254829592, -0.284496736, 1.421413741, -1.453152027, 1.061405429
    p = 0.3275911
    az = jnp.abs(z)
    t = 1.0 / (1.0 + p * az)
    poly = ((((a5 * t + a4) * t + a3) * t + a2) * t + a1) * t
    erf_abs = 1.0 - poly * jnp.exp(-az * az)
    erf_z = jnp.where(z >= 0, erf_abs, -erf_abs)
    return 0.5 * x * (1.0 + erf_z)


# ---------------- kernel A: Linear(vision_dim -> llm_dim) + GELU (bf16 in/out) ----------------
def mlp1_kernel(x_ref, w1_ref, b1_ref, h_ref):
    acc = jnp.dot(x_ref[...], w1_ref[...], preferred_element_type=jnp.float32)
    acc = acc + b1_ref[...]
    h_ref[...] = _gelu_exact(acc).astype(h_ref.dtype)


# ------ kernel B: Linear(llm->llm) + bias + adaptive-pool(14x14) + dwconv3x3 + residual -------
def tail_kernel(h_ref, w2_ref, b2_ref, m_ref, wc_ref, bc_ref, o_ref, acc_ref, xp_ref):
    """grid = (B, llm_dim//tile_c, llm_dim//tile_c):
       axis 0 (image)           : parallel
       axis 1 (output C tile)   : parallel
       axis 2 (contraction tile): arbitrary -> f32 VMEM accumulator."""
    k = pl.program_id(2)

    @pl.when(k == 0)
    def _init():
        acc_ref[...] = jnp.zeros_like(acc_ref)

    # second linear: bf16 x bf16 operands, f32 accumulation in VMEM scratch
    acc_ref[...] += jnp.dot(h_ref[...], w2_ref[...], preferred_element_type=jnp.float32)

    @pl.when(k == pl.num_programs(2) - 1)
    def _epilogue():
        c = o_ref.shape[-1]
        hp = POOL_OUT + 2
        # Bias, then adaptive-pool + zero-pad in ONE matmul: m_ref is (hp*hp, N) with
        # the conv's zero-padding border rows baked in (all-zero rows).
        y = (acc_ref[...] + b2_ref[...]).astype(m_ref.dtype)                     # (N, c) bf16
        xp_flat = jnp.dot(m_ref[...], y, preferred_element_type=jnp.float32)     # (hp*hp, c)
        # Stage into a (hp, hp, c) VMEM scratch via sublane-aligned row groups so the
        # 3x3 windows below are plain static slices (avoids an in-kernel vector reshape).
        for i in range(hp):
            xp_ref[i] = xp_flat[i * hp:(i + 1) * hp, :]
        xp = xp_ref[...]                                                          # (16,16,c) f32
        w = wc_ref[...]                                                           # (3,3,c)  f32
        # Depthwise 3x3 conv + bias + residual; static window slices (this stage is a
        # negligible fraction of the fused kernel; dj-shifts could move to the XLU via
        # pltpu.roll if it ever shows up in profiles).
        conv = jnp.zeros((POOL_OUT, POOL_OUT, c), jnp.float32)
        for di in range(3):
            for dj in range(3):
                conv = conv + xp[di:di + POOL_OUT, dj:dj + POOL_OUT, :] * w[di:di + 1, dj:dj + 1, :]
        out = conv + bc_ref[...].reshape(1, 1, c) + xp[1:1 + POOL_OUT, 1:1 + POOL_OUT, :]
        o_ref[0] = out.astype(o_ref.dtype)


# ------------------------------------ host-side helpers --------------------------------------
def adaptive_pool_matrix(in_size, out_size):
    """1-D AdaptiveAvgPool matrix P (out_size, in_size): P[i, start_i:end_i] = 1/len."""
    P = np.zeros((out_size, in_size), dtype=np.float32)
    for i in range(out_size):
        s = (i * in_size) // out_size
        e = -((-(i + 1) * in_size) // out_size)   # ceil
        P[i, s:e] = 1.0 / (e - s)
    return P


def build_padded_pool_matrix(in_h, out_h=POOL_OUT):
    """(out_h+2)^2 x in_h^2 matrix: kron(P,P) rows placed at the interior of the
    (out_h+2)x(out_h+2) padded layout; border rows are zero => pool + zero-pad = 1 matmul."""
    P = adaptive_pool_matrix(in_h, out_h)
    M = np.kron(P, P)                                  # (out_h^2, in_h^2)
    hp = out_h + 2
    Mp = np.zeros((hp * hp, in_h * in_h), np.float32)
    for i in range(out_h):
        for j in range(out_h):
            Mp[(i + 1) * hp + (j + 1)] = M[i * out_h + j]
    return Mp


def _pick_tile(total, target, align):
    """Largest multiple of `align` that divides `total` and is <= target; else `total`."""
    t = min(target, total)
    t -= t % align
    while t >= align:
        if total % t == 0:
            return t
        t -= align
    return total


# ---------------------------------------- wrapper ---------------------------------------------
def ldp_projector(img_patches, w1, b1, w2, b2, wc, bc, *, vmem_limit_bytes=None):
    B, N, Dv = img_patches.shape
    hh = int(round(math.sqrt(N)))
    assert hh * hh == N
    Dl = w1.shape[1]
    n_out = POOL_OUT * POOL_OUT
    hp = POOL_OUT + 2

    # Tiles: llm-dim tiles are multiples of 128 (MXU lane width), token tiles multiples
    # of 8 (sublanes).  At production llm_dim this gives ~512-wide channel tiles so the
    # (Dl x Dl) weight is streamed, never fully VMEM-resident.
    tile_m = _pick_tile(B * N, 256, 8)
    tile_c = _pick_tile(Dl, 512, 128)

    def cparams(sem):
        kw = dict(dimension_semantics=sem)
        if vmem_limit_bytes is not None:
            kw["vmem_limit_bytes"] = vmem_limit_bytes
        return pltpu.CompilerParams(**kw)

    # bf16 MXU operands (accumulation stays f32 inside the kernels).
    xb = img_patches.reshape(B * N, Dv).astype(jnp.bfloat16)
    w1b = w1.astype(jnp.bfloat16)
    w2b = w2.astype(jnp.bfloat16)
    m_pad = jnp.asarray(build_padded_pool_matrix(hh, POOL_OUT), dtype=jnp.bfloat16)

    # ---- kernel A: Linear(vision->llm) + GELU; bf16 intermediate in HBM ----
    h = pl.pallas_call(
        mlp1_kernel,
        out_shape=jax.ShapeDtypeStruct((B * N, Dl), jnp.bfloat16),
        grid=(B * N // tile_m, Dl // tile_c),
        in_specs=[pl.BlockSpec((tile_m, Dv), lambda m, j: (m, 0)),
                  pl.BlockSpec((Dv, tile_c), lambda m, j: (0, j)),
                  pl.BlockSpec((1, tile_c), lambda m, j: (0, j))],
        out_specs=pl.BlockSpec((tile_m, tile_c), lambda m, j: (m, j)),
        compiler_params=cparams(("parallel", "parallel")),
    )(xb, w1b, b1)

    # ---- kernel B: Linear(llm->llm) + pool + pad + depthwise conv + residual, fused ----
    out = pl.pallas_call(
        tail_kernel,
        out_shape=jax.ShapeDtypeStruct((B, POOL_OUT, POOL_OUT, Dl), jnp.float32),
        grid=(B, Dl // tile_c, Dl // tile_c),
        in_specs=[pl.BlockSpec((N, tile_c), lambda b, j, k: (b, k)),        # h (bf16)
                  pl.BlockSpec((tile_c, tile_c), lambda b, j, k: (k, j)),   # w2 (bf16)
                  pl.BlockSpec((1, tile_c), lambda b, j, k: (0, j)),        # b2
                  pl.BlockSpec((hp * hp, N), lambda b, j, k: (0, 0)),       # pool+pad matrix
                  pl.BlockSpec((3, 3, tile_c), lambda b, j, k: (0, 0, j)),  # dwconv weight
                  pl.BlockSpec((1, tile_c), lambda b, j, k: (0, j))],       # dwconv bias
        out_specs=pl.BlockSpec((1, POOL_OUT, POOL_OUT, tile_c),
                               lambda b, j, k: (b, 0, 0, j)),
        scratch_shapes=[pltpu.VMEM((N, tile_c), jnp.float32),        # linear2 accumulator
                        pltpu.VMEM((hp, hp, tile_c), jnp.float32)],  # padded pooled image
        compiler_params=cparams(("parallel", "parallel", "arbitrary")),
    )(h, w2b, b2, m_pad, wc, bc)

    return out.reshape(B, n_out, Dl)


# ---------------------------- pure-JAX reference (for checking) ---------------------------
def reference(img_patches, w1, b1, w2, b2, wc, bc):
    h = jnp.dot(img_patches, w1) + b1
    h = jax.nn.gelu(h, approximate=False)
    y = jnp.dot(h, w2) + b2
    B, N, C = y.shape
    ht = int(round(math.sqrt(N)))
    P = jnp.asarray(adaptive_pool_matrix(ht, POOL_OUT))
    img = y.reshape(B, ht, ht, C)
    pooled = jnp.einsum('ip,jq,bpqc->bijc', P, P, img)
    conv = lax.conv_general_dilated(
        pooled, wc.reshape(3, 3, 1, C),
        window_strides=(1, 1), padding=((1, 1), (1, 1)),
        dimension_numbers=('NHWC', 'HWIO', 'NHWC'), feature_group_count=C)
    out = conv + bc.reshape(1, 1, 1, C) + pooled
    return out.reshape(B, POOL_OUT * POOL_OUT, C)


if __name__ == "__main__":
    B, HTOK, VIS_DIM, LLM_DIM = 2, 16, 32, 64
    N = HTOK * HTOK                               # 256 input tokens (16x16 grid)

    key = jax.random.PRNGKey(0)
    ks = jax.random.split(key, 7)
    x = jax.random.normal(ks[0], (B, N, VIS_DIM), jnp.float32)
    w1 = jax.random.normal(ks[1], (VIS_DIM, LLM_DIM), jnp.float32) / math.sqrt(VIS_DIM)
    b1 = jax.random.normal(ks[2], (1, LLM_DIM), jnp.float32) * 0.01
    w2 = jax.random.normal(ks[3], (LLM_DIM, LLM_DIM), jnp.float32) / math.sqrt(LLM_DIM)
    b2 = jax.random.normal(ks[4], (1, LLM_DIM), jnp.float32) * 0.01
    wc = jax.random.normal(ks[5], (3, 3, LLM_DIM), jnp.float32) / 3.0
    bc = jax.random.normal(ks[6], (1, LLM_DIM), jnp.float32) * 0.01

    out = jax.jit(ldp_projector)(x, w1, b1, w2, b2, wc, bc)
    out = jax.block_until_ready(out)

    ref = reference(x, w1, b1, w2, b2, wc, bc)
    assert out.shape == (B, POOL_OUT * POOL_OUT, LLM_DIM), out.shape
    out_np = np.asarray(out)
    assert np.isfinite(out_np).all()
    # bf16 MXU operands vs f32 reference -> bf16-appropriate tolerance.
    np.testing.assert_allclose(out_np, np.asarray(ref), atol=5e-2, rtol=5e-2)
    print("KERNEL_OK")
</pallas_src>

<mosaic_0001>
module attributes {stable_mosaic.version = 11 : i64} {
  func.func @tail_kernel(%arg0: i32, %arg1: i32, %arg2: i32, %arg3: memref<256x64xbf16, #tpu.memory_space<vmem>>, %arg4: memref<64x64xbf16, #tpu.memory_space<vmem>>, %arg5: memref<1x64xf32, #tpu.memory_space<vmem>>, %arg6: memref<256x256xbf16, #tpu.memory_space<vmem>>, %arg7: memref<3x3x64xf32, #tpu.memory_space<vmem>>, %arg8: memref<1x64xf32, #tpu.memory_space<vmem>>, %arg9: memref<1x14x14x64xf32, #tpu.memory_space<vmem>>, %arg10: memref<256x64xf32, #tpu.memory_space<vmem>>, %arg11: memref<16x16x64xf32, #tpu.memory_space<vmem>>) attributes {dimension_semantics = [#tpu.dimension_semantics<parallel>, #tpu.dimension_semantics<parallel>, #tpu.dimension_semantics<arbitrary>], iteration_bounds = array<i64: 2, 1, 1>, scalar_prefetch = 0 : i64, scratch_operands = 2 : i64, tpu.core_type = #tpu.core_type<tc>, window_params = [{transform_indices = @transform_0, window_bounds = array<i64: 256, 64>}, {transform_indices = @transform_1, window_bounds = array<i64: 64, 64>}, {transform_indices = @transform_2, window_bounds = array<i64: 1, 64>}, {pipeline_mode = #tpu.pipeline_mode<synchronous>, transform_indices = @transform_3, window_bounds = array<i64: 256, 256>}, {transform_indices = @transform_4, window_bounds = array<i64: 3, 3, 64>}, {transform_indices = @transform_5, window_bounds = array<i64: 1, 64>}, {transform_indices = @transform_6, window_bounds = array<i64: 1, 14, 14, 64>}]} {
    %c0_i32 = arith.constant 0 : i32
    %0 = arith.cmpi eq, %arg2, %c0_i32 : i32
    %1 = arith.extui %0 : i1 to i32
    %c0_i32_0 = arith.constant 0 : i32
    %2 = arith.cmpi ne, %1, %c0_i32_0 : i32
    scf.if %2 {
      %cst_10 = arith.constant 0.000000e+00 : f32
      %12 = vector.broadcast %cst_10 : f32 to vector<256x64xf32>
      %c0_11 = arith.constant 0 : index
      %c0_12 = arith.constant 0 : index
      %13 = vector.load %arg10[%c0_11, %c0_12] : memref<256x64xf32, #tpu.memory_space<vmem>>, vector<256x64xf32>
      tpu.vector_store %arg10[%c0_11, %c0_12], %12 {strides = array<i32>} : memref<256x64xf32, #tpu.memory_space<vmem>>, vector<256x64xf32>,
    } else {
    }
    %c0 = arith.constant 0 : index
    %c0_1 = arith.constant 0 : index
    %3 = vector.load %arg10[%c0, %c0_1] : memref<256x64xf32, #tpu.memory_space<vmem>>, vector<256x64xf32>
    %c0_2 = arith.constant 0 : index
    %c0_3 = arith.constant 0 : index
    %4 = vector.load %arg3[%c0_2, %c0_3] : memref<256x64xbf16, #tpu.memory_space<vmem>>, vector<256x64xbf16>
    %c0_4 = arith.constant 0 : index
    %c0_5 = arith.constant 0 : index
    %5 = vector.load %arg4[%c0_4, %c0_5] : memref<64x64xbf16, #tpu.memory_space<vmem>>, vector<64x64xbf16>
    %cst = arith.constant dense<0.000000e+00> : vector<256x64xf32>
    %6 = tpu.matmul %4, %5, %cst {dimension_numbers = #tpu.dot_dimension_numbers<[1], [0], [0], [1], [0, 0, 1, 1], [], []>} : vector<256x64xbf16>, vector<64x64xbf16>, vector<256x64xf32> -> vector<256x64xf32>
    %7 = arith.addf %3, %6 : vector<256x64xf32>
    %c0_6 = arith.constant 0 : index
    %c0_7 = arith.constant 0 : index
    %8 = vector.load %arg10[%c0_6, %c0_7] : memref<256x64xf32, #tpu.memory_space<vmem>>, vector<256x64xf32>
    tpu.vector_store %arg10[%c0_6, %c0_7], %7 {strides = array<i32>} : memref<256x64xf32, #tpu.memory_space<vmem>>, vector<256x64xf32>,
    %c0_i32_8 = arith.constant 0 : i32
    %9 = arith.cmpi eq, %arg2, %c0_i32_8 : i32
    %10 = arith.extui %9 : i1 to i32
    %c0_i32_9 = arith.constant 0 : i32
    %11 = arith.cmpi ne, %10, %c0_i32_9 : i32
    scf.if %11 {
      %c0_10 = arith.constant 0 : index
      %c0_11 = arith.constant 0 : index
      %12 = vector.load %arg10[%c0_10, %c0_11] : memref<256x64xf32, #tpu.memory_space<vmem>>, vector<256x64xf32>
      %c0_12 = arith.constant 0 : index
      %c0_13 = arith.constant 0 : index
      %13 = vector.load %arg5[%c0_12, %c0_13] : memref<1x64xf32, #tpu.memory_space<vmem>>, vector<1x64xf32>
      %14 = vector.broadcast %13 : vector<1x64xf32> to vector<256x64xf32>
      %15 = arith.addf %12, %14 : vector<256x64xf32>
      %16 = arith.truncf %15 : vector<256x64xf32> to vector<256x64xbf16>
      %c0_14 = arith.constant 0 : index
      %c0_15 = arith.constant 0 : index
      %17 = vector.load %arg6[%c0_14, %c0_15] : memref<256x256xbf16, #tpu.memory_space<vmem>>, vector<256x256xbf16>
      %cst_16 = arith.constant dense<0.000000e+00> : vector<256x64xf32>
      %18 = tpu.matmul %17, %16, %cst_16 {dimension_numbers = #tpu.dot_dimension_numbers<[1], [0], [0], [1], [0, 0, 1, 1], [], []>} : vector<256x256xbf16>, vector<256x64xbf16>, vector<256x64xf32> -> vector<256x64xf32>
      %19 = vector.extract_strided_slice %18 {offsets = [0, 0], sizes = [16, 64], strides = [1, 1]} : vector<256x64xf32> to vector<16x64xf32>
      %c0_17 = arith.constant 0 : index
      %c0_18 = arith.constant 0 : index
      %c0_19 = arith.constant 0 : index
      %20 = vector.load %arg11[%c0_17, %c0_18, %c0_19] : memref<16x16x64xf32, #tpu.memory_space<vmem>>, vector<1x16x64xf32>
      %21 = vector.shape_cast %20 : vector<1x16x64xf32> to vector<16x64xf32>
      %22 = vector.shape_cast %19 : vector<16x64xf32> to vector<1x16x64xf32>
      tpu.vector_store %arg11[%c0_17, %c0_18, %c0_19], %22 {strides = array<i32>} : memref<16x16x64xf32, #tpu.memory_space<vmem>>, vector<1x16x64xf32>,
      %23 = vector.extract_strided_slice %18 {offsets = [16, 0], sizes = [16, 64], strides = [1, 1]} : vector<256x64xf32> to vector<16x64xf32>
      %c1 = arith.constant 1 : index
      %c0_20 = arith.constant 0 : index
      %c0_21 = arith.constant 0 : index
      %24 = vector.load %arg11[%c1, %c0_20, %c0_21] : memref<16x16x64xf32, #tpu.memory_space<vmem>>, vector<1x16x64xf32>
      %25 = vector.shape_cast %24 : vector<1x16x64xf32> to vector<16x64xf32>
      %26 = vector.shape_cast %23 : vector<16x64xf32> to vector<1x16x64xf32>
      tpu.vector_store %arg11[%c1, %c0_20, %c0_21], %26 {strides = array<i32>} : memref<16x16x64xf32, #tpu.memory_space<vmem>>, vector<1x16x64xf32>,
      %27 = vector.extract_strided_slice %18 {offsets = [32, 0], sizes = [16, 64], strides = [1, 1]} : vector<256x64xf32> to vector<16x64xf32>
      %c2 = arith.constant 2 : index
      %c0_22 = arith.constant 0 : index
      %c0_23 = arith.constant 0 : index
      %28 = vector.load %arg11[%c2, %c0_22, %c0_23] : memref<16x16x64xf32, #tpu.memory_space<vmem>>, vector<1x16x64xf32>
      %29 = vector.shape_cast %28 : vector<1x16x64xf32> to vector<16x64xf32>
      %30 = vector.shape_cast %27 : vector<16x64xf32> to vector<1x16x64xf32>
      tpu.vector_store %arg11[%c2, %c0_22, %c0_23], %30 {strides = array<i32>} : memref<16x16x64xf32, #tpu.memory_space<vmem>>, vector<1x16x64xf32>,
      %31 = vector.extract_strided_slice %18 {offsets = [48, 0], sizes = [16, 64], strides = [1, 1]} : vector<256x64xf32> to vector<16x64xf32>
      %c3 = arith.constant 3 : index
      %c0_24 = arith.constant 0 : index
      %c0_25 = arith.constant 0 : index
      %32 = vector.load %arg11[%c3, %c0_24, %c0_25] : memref<16x16x64xf32, #tpu.memory_space<vmem>>, vector<1x16x64xf32>
      %33 = vector.shape_cast %32 : vector<1x16x64xf32> to vector<16x64xf32>
      %34 = vector.shape_cast %31 : vector<16x64xf32> to vector<1x16x64xf32>
      tpu.vector_store %arg11[%c3, %c0_24, %c0_25], %34 {strides = array<i32>} : memref<16x16x64xf32, #tpu.memory_space<vmem>>, vector<1x16x64xf32>,
      %35 = vector.extract_strided_slice %18 {offsets = [64, 0], sizes = [16, 64], strides = [1, 1]} : vector<256x64xf32> to vector<16x64xf32>
      %c4 = arith.constant 4 : index
      %c0_26 = arith.constant 0 : index
      %c0_27 = arith.constant 0 : index
      %36 = vector.load %arg11[%c4, %c0_26, %c0_27] : memref<16x16x64xf32, #tpu.memory_space<vmem>>, vector<1x16x64xf32>
      %37 = vector.shape_cast %36 : vector<1x16x64xf32> to vector<16x64xf32>
      %38 = vector.shape_cast %35 : vector<16x64xf32> to vector<1x16x64xf32>
      tpu.vector_store %arg11[%c4, %c0_26, %c0_27], %38 {strides = array<i32>} : memref<16x16x64xf32, #tpu.memory_space<vmem>>, vector<1x16x64xf32>,
      %39 = vector.extract_strided_slice %18 {offsets = [80, 0], sizes = [16, 64], strides = [1, 1]} : vector<256x64xf32> to vector<16x64xf32>
      %c5 = arith.constant 5 : index
      %c0_28 = arith.constant 0 : index
      %c0_29 = arith.constant 0 : index
      %40 = vector.load %arg11[%c5, %c0_28, %c0_29] : memref<16x16x64xf32, #tpu.memory_space<vmem>>, vector<1x16x64xf32>
      %41 = vector.shape_cast %40 : vector<1x16x64xf32> to vector<16x64xf32>
      %42 = vector.shape_cast %39 : vector<16x64xf32> to vector<1x16x64xf32>
      tpu.vector_store %arg11[%c5, %c0_28, %c0_29], %42 {strides = array<i32>} : memref<16x16x64xf32, #tpu.memory_space<vmem>>, vector<1x16x64xf32>,
      %43 = vector.extract_strided_slice %18 {offsets = [96, 0], sizes = [16, 64], strides = [1, 1]} : vector<256x64xf32> to vector<16x64xf32>
      %c6 = arith.constant 6 : index
      %c0_30 = arith.constant 0 : index
      %c0_31 = arith.constant 0 : index
      %44 = vector.load %arg11[%c6, %c0_30, %c0_31] : memref<16x16x64xf32, #tpu.memory_space<vmem>>, vector<1x16x64xf32>
      %45 = vector.shape_cast %44 : vector<1x16x64xf32> to vector<16x64xf32>
      %46 = vector.shape_cast %43 : vector<16x64xf32> to vector<1x16x64xf32>
      tpu.vector_store %arg11[%c6, %c0_30, %c0_31], %46 {strides = array<i32>} : memref<16x16x64xf32, #tpu.memory_space<vmem>>, vector<1x16x64xf32>,
      %47 = vector.extract_strided_slice %18 {offsets = [112, 0], sizes = [16, 64], strides = [1, 1]} : vector<256x64xf32> to vector<16x64xf32>
      %c7 = arith.constant 7 : index
      %c0_32 = arith.constant 0 : index
      %c0_33 = arith.constant 0 : index
      %48 = vector.load %arg11[%c7, %c0_32, %c0_33] : memref<16x16x64xf32, #tpu.memory_space<vmem>>, vector<1x16x64xf32>
      %49 = vector.shape_cast %48 : vector<1x16x64xf32> to vector<16x64xf32>
      %50 = vector.shape_cast %47 : vector<16x64xf32> to vector<1x16x64xf32>
      tpu.vector_store %arg11[%c7, %c0_32, %c0_33], %50 {strides = array<i32>} : memref<16x16x64xf32, #tpu.memory_space<vmem>>, vector<1x16x64xf32>,
      %51 = vector.extract_strided_slice %18 {offsets = [128, 0], sizes = [16, 64], strides = [1, 1]} : vector<256x64xf32> to vector<16x64xf32>
      %c8 = arith.constant 8 : index
      %c0_34 = arith.constant 0 : index
      %c0_35 = arith.constant 0 : index
      %52 = vector.load %arg11[%c8, %c0_34, %c0_35] : memref<16x16x64xf32, #tpu.memory_space<vmem>>, vector<1x16x64xf32>
      %53 = vector.shape_cast %52 : vector<1x16x64xf32> to vector<16x64xf32>
      %54 = vector.shape_cast %51 : vector<16x64xf32> to vector<1x16x64xf32>
      tpu.vector_store %arg11[%c8, %c0_34, %c0_35], %54 {strides = array<i32>} : memref<16x16x64xf32, #tpu.memory_space<vmem>>, vector<1x16x64xf32>,
      %55 = vector.extract_strided_slice %18 {offsets = [144, 0], sizes = [16, 64], strides = [1, 1]} : vector<256x64xf32> to vector<16x64xf32>
      %c9 = arith.constant 9 : index
      %c0_36 = arith.constant 0 : index
      %c0_37 = arith.constant 0 : index
      %56 = vector.load %arg11[%c9, %c0_36, %c0_37] : memref<16x16x64xf32, #tpu.memory_space<vmem>>, vector<1x16x64xf32>
      %57 = vector.shape_cast %56 : vector<1x16x64xf32> to vector<16x64xf32>
      %58 = vector.shape_cast %55 : vector<16x64xf32> to vector<1x16x64xf32>
      tpu.vector_store %arg11[%c9, %c0_36, %c0_37], %58 {strides = array<i32>} : memref<16x16x64xf32, #tpu.memory_space<vmem>>, vector<1x16x64xf32>,
      %59 = vector.extract_strided_slice %18 {offsets = [160, 0], sizes = [16, 64], strides = [1, 1]} : vector<256x64xf32> to vector<16x64xf32>
      %c10 = arith.constant 10 : index
      %c0_38 = arith.constant 0 : index
      %c0_39 = arith.constant 0 : index
      %60 = vector.load %arg11[%c10, %c0_38, %c0_39] : memref<16x16x64xf32, #tpu.memory_space<vmem>>, vector<1x16x64xf32>
      %61 = vector.shape_cast %60 : vector<1x16x64xf32> to vector<16x64xf32>
      %62 = vector.shape_cast %59 : vector<16x64xf32> to vector<1x16x64xf32>
      tpu.vector_store %arg11[%c10, %c0_38, %c0_39], %62 {strides = array<i32>} : memref<16x16x64xf32, #tpu.memory_space<vmem>>, vector<1x16x64xf32>,
      %63 = vector.extract_strided_slice %18 {offsets = [176, 0], sizes = [16, 64], strides = [1, 1]} : vector<256x64xf32> to vector<16x64xf32>
      %c11 = arith.constant 11 : index
      %c0_40 = arith.constant 0 : index
      %c0_41 = arith.constant 0 : index
      %64 = vector.load %arg11[%c11, %c0_40, %c0_41] : memref<16x16x64xf32, #tpu.memory_space<vmem>>, vector<1x16x64xf32>
      %65 = vector.shape_cast %64 : vector<1x16x64xf32> to vector<16x64xf32>
      %66 = vector.shape_cast %63 : vector<16x64xf32> to vector<1x16x64xf32>
      tpu.vector_store %arg11[%c11, %c0_40, %c0_41], %66 {strides = array<i32>} : memref<16x16x64xf32, #tpu.memory_space<vmem>>, vector<1x16x64xf32>,
      %67 = vector.extract_strided_slice %18 {offsets = [192, 0], sizes = [16, 64], strides = [1, 1]} : vector<256x64xf32> to vector<16x64xf32>
      %c12 = arith.constant 12 : index
      %c0_42 = arith.constant 0 : index
      %c0_43 = arith.constant 0 : index
      %68 = vector.load %arg11[%c12, %c0_42, %c0_43] : memref<16x16x64xf32, #tpu.memory_space<vmem>>, vector<1x16x64xf32>
      %69 = vector.shape_cast %68 : vector<1x16x64xf32> to vector<16x64xf32>
      %70 = vector.shape_cast %67 : vector<16x64xf32> to vector<1x16x64xf32>
      tpu.vector_store %arg11[%c12, %c0_42, %c0_43], %70 {strides = array<i32>} : memref<16x16x64xf32, #tpu.memory_space<vmem>>, vector<1x16x64xf32>,
      %71 = vector.extract_strided_slice %18 {offsets = [208, 0], sizes = [16, 64], strides = [1, 1]} : vector<256x64xf32> to vector<16x64xf32>
      %c13 = arith.constant 13 : index
      %c0_44 = arith.constant 0 : index
      %c0_45 = arith.constant 0 : index
      %72 = vector.load %arg11[%c13, %c0_44, %c0_45] : memref<16x16x64xf32, #tpu.memory_space<vmem>>, vector<1x16x64xf32>
      %73 = vector.shape_cast %72 : vector<1x16x64xf32> to vector<16x64xf32>
      %74 = vector.shape_cast %71 : vector<16x64xf32> to vector<1x16x64xf32>
      tpu.vector_store %arg11[%c13, %c0_44, %c0_45], %74 {strides = array<i32>} : memref<16x16x64xf32, #tpu.memory_space<vmem>>, vector<1x16x64xf32>,
      %75 = vector.extract_strided_slice %18 {offsets = [224, 0], sizes = [16, 64], strides = [1, 1]} : vector<256x64xf32> to vector<16x64xf32>
      %c14 = arith.constant 14 : index
      %c0_46 = arith.constant 0 : index
      %c0_47 = arith.constant 0 : index
      %76 = vector.load %arg11[%c14, %c0_46, %c0_47] : memref<16x16x64xf32, #tpu.memory_space<vmem>>, vector<1x16x64xf32>
      %77 = vector.shape_cast %76 : vector<1x16x64xf32> to vector<16x64xf32>
      %78 = vector.shape_cast %75 : vector<16x64xf32> to vector<1x16x64xf32>
      tpu.vector_store %arg11[%c14, %c0_46, %c0_47], %78 {strides = array<i32>} : memref<16x16x64xf32, #tpu.memory_space<vmem>>, vector<1x16x64xf32>,
      %79 = vector.extract_strided_slice %18 {offsets = [240, 0], sizes = [16, 64], strides = [1, 1]} : vector<256x64xf32> to vector<16x64xf32>
      %c15 = arith.constant 15 : index
      %c0_48 = arith.constant 0 : index
      %c0_49 = arith.constant 0 : index
      %80 = vector.load %arg11[%c15, %c0_48, %c0_49] : memref<16x16x64xf32, #tpu.memory_space<vmem>>, vector<1x16x64xf32>
      %81 = vector.shape_cast %80 : vector<1x16x64xf32> to vector<16x64xf32>
      %82 = vector.shape_cast %79 : vector<16x64xf32> to vector<1x16x64xf32>
      tpu.vector_store %arg11[%c15, %c0_48, %c0_49], %82 {strides = array<i32>} : memref<16x16x64xf32, #tpu.memory_space<vmem>>, vector<1x16x64xf32>,
      %c0_50 = arith.constant 0 : index
      %c0_51 = arith.constant 0 : index
      %c0_52 = arith.constant 0 : index
      %83 = vector.load %arg11[%c0_50, %c0_51, %c0_52] : memref<16x16x64xf32, #tpu.memory_space<vmem>>, vector<16x16x64xf32>
      %c0_53 = arith.constant 0 : index
      %c0_54 = arith.constant 0 : index
      %c0_55 = arith.constant 0 : index
      %84 = vector.load %arg7[%c0_53, %c0_54, %c0_55] : memref<3x3x64xf32, #tpu.memory_space<vmem>>, vector<3x3x64xf32>
      %cst_56 = arith.constant 0.000000e+00 : f32
      %85 = vector.broadcast %cst_56 : f32 to vector<14x14x64xf32>
      %86 = vector.extract_strided_slice %83 {offsets = [0, 0, 0], sizes = [14, 14, 64], strides = [1, 1, 1]} : vector<16x16x64xf32> to vector<14x14x64xf32>
      %87 = vector.extract_strided_slice %84 {offsets = [0, 0, 0], sizes = [1, 1, 64], strides = [1, 1, 1]} : vector<3x3x64xf32> to vector<1x1x64xf32>
      %88 = vector.broadcast %87 : vector<1x1x64xf32> to vector<14x14x64xf32>
      %89 = arith.mulf %86, %88 : vector<14x14x64xf32>
      %90 = arith.addf %85, %89 : vector<14x14x64xf32>
      %91 = vector.extract_strided_slice %83 {offsets = [0, 1, 0], sizes = [14, 14, 64], strides = [1, 1, 1]} : vector<16x16x64xf32> to vector<14x14x64xf32>
      %92 = vector.extract_strided_slice %84 {offsets = [0, 1, 0], sizes = [1, 1, 64], strides = [1, 1, 1]} : vector<3x3x64xf32> to vector<1x1x64xf32>
      %93 = vector.broadcast %92 : vector<1x1x64xf32> to vector<14x14x64xf32>
      %94 = arith.mulf %91, %93 : vector<14x14x64xf32>
      %95 = arith.addf %90, %94 : vector<14x14x64xf32>
      %96 = vector.extract_strided_slice %83 {offsets = [0, 2, 0], sizes = [14, 14, 64], strides = [1, 1, 1]} : vector<16x16x64xf32> to vector<14x14x64xf32>
      %97 = vector.extract_strided_slice %84 {offsets = [0, 2, 0], sizes = [1, 1, 64], strides = [1, 1, 1]} : vector<3x3x64xf32> to vector<1x1x64xf32>
      %98 = vector.broadcast %97 : vector<1x1x64xf32> to vector<14x14x64xf32>
      %99 = arith.mulf %96, %98 : vector<14x14x64xf32>
      %100 = arith.addf %95, %99 : vector<14x14x64xf32>
      %101 = vector.extract_strided_slice %83 {offsets = [1, 0, 0], sizes = [14, 14, 64], strides = [1, 1, 1]} : vector<16x16x64xf32> to vector<14x14x64xf32>
      %102 = vector.extract_strided_slice %84 {offsets = [1, 0, 0], sizes = [1, 1, 64], strides = [1, 1, 1]} : vector<3x3x64xf32> to vector<1x1x64xf32>
      %103 = vector.broadcast %102 : vector<1x1x64xf32> to vector<14x14x64xf32>
      %104 = arith.mulf %101, %103 : vector<14x14x64xf32>
      %105 = arith.addf %100, %104 : vector<14x14x64xf32>
      %106 = vector.extract_strided_slice %83 {offsets = [1, 1, 0], sizes = [14, 14, 64], strides = [1, 1, 1]} : vector<16x16x64xf32> to vector<14x14x64xf32>
      %107 = vector.extract_strided_slice %84 {offsets = [1, 1, 0], sizes = [1, 1, 64], strides = [1, 1, 1]} : vector<3x3x64xf32> to vector<1x1x64xf32>
      %108 = vector.broadcast %107 : vector<1x1x64xf32> to vector<14x14x64xf32>
      %109 = arith.mulf %106, %108 : vector<14x14x64xf32>
      %110 = arith.addf %105, %109 : vector<14x14x64xf32>
      %111 = vector.extract_strided_slice %83 {offsets = [1, 2, 0], sizes = [14, 14, 64], strides = [1, 1, 1]} : vector<16x16x64xf32> to vector<14x14x64xf32>
      %112 = vector.extract_strided_slice %84 {offsets = [1, 2, 0], sizes = [1, 1, 64], strides = [1, 1, 1]} : vector<3x3x64xf32> to vector<1x1x64xf32>
      %113 = vector.broadcast %112 : vector<1x1x64xf32> to vector<14x14x64xf32>
      %114 = arith.mulf %111, %113 : vector<14x14x64xf32>
      %115 = arith.addf %110, %114 : vector<14x14x64xf32>
      %116 = vector.extract_strided_slice %83 {offsets = [2, 0, 0], sizes = [14, 14, 64], strides = [1, 1, 1]} : vector<16x16x64xf32> to vector<14x14x64xf32>
      %117 = vector.extract_strided_slice %84 {offsets = [2, 0, 0], sizes = [1, 1, 64], strides = [1, 1, 1]} : vector<3x3x64xf32> to vector<1x1x64xf32>
      %118 = vector.broadcast %117 : vector<1x1x64xf32> to vector<14x14x64xf32>
      %119 = arith.mulf %116, %118 : vector<14x14x64xf32>
      %120 = arith.addf %115, %119 : vector<14x14x64xf32>
      %121 = vector.extract_strided_slice %83 {offsets = [2, 1, 0], sizes = [14, 14, 64], strides = [1, 1, 1]} : vector<16x16x64xf32> to vector<14x14x64xf32>
      %122 = vector.extract_strided_slice %84 {offsets = [2, 1, 0], sizes = [1, 1, 64], strides = [1, 1, 1]} : vector<3x3x64xf32> to vector<1x1x64xf32>
      %123 = vector.broadcast %122 : vector<1x1x64xf32> to vector<14x14x64xf32>
      %124 = arith.mulf %121, %123 : vector<14x14x64xf32>
      %125 = arith.addf %120, %124 : vector<14x14x64xf32>
      %126 = vector.extract_strided_slice %83 {offsets = [2, 2, 0], sizes = [14, 14, 64], strides = [1, 1, 1]} : vector<16x16x64xf32> to vector<14x14x64xf32>
      %127 = vector.extract_strided_slice %84 {offsets = [2, 2, 0], sizes = [1, 1, 64], strides = [1, 1, 1]} : vector<3x3x64xf32> to vector<1x1x64xf32>
      %128 = vector.broadcast %127 : vector<1x1x64xf32> to vector<14x14x64xf32>
      %129 = arith.mulf %126, %128 : vector<14x14x64xf32>
      %130 = arith.addf %125, %129 : vector<14x14x64xf32>
      %c0_57 = arith.constant 0 : index
      %c0_58 = arith.constant 0 : index
      %131 = vector.load %arg8[%c0_57, %c0_58] : memref<1x64xf32, #tpu.memory_space<vmem>>, vector<1x64xf32>
      %132 = vector.shape_cast %131 : vector<1x64xf32> to vector<1x1x64xf32>
      %133 = vector.broadcast %132 : vector<1x1x64xf32> to vector<14x14x64xf32>
      %134 = arith.addf %130, %133 : vector<14x14x64xf32>
      %135 = vector.extract_strided_slice %83 {offsets = [1, 1, 0], sizes = [14, 14, 64], strides = [1, 1, 1]} : vector<16x16x64xf32> to vector<14x14x64xf32>
      %136 = arith.addf %134, %135 : vector<14x14x64xf32>
      %c0_59 = arith.constant 0 : index
      %c0_60 = arith.constant 0 : index
      %c0_61 = arith.constant 0 : index
      %c0_62 = arith.constant 0 : index
      %137 = vector.load %arg9[%c0_59, %c0_60, %c0_61, %c0_62] : memref<1x14x14x64xf32, #tpu.memory_space<vmem>>, vector<1x14x14x64xf32>
      %138 = vector.shape_cast %137 : vector<1x14x14x64xf32> to vector<14x14x64xf32>
      %139 = vector.shape_cast %136 : vector<14x14x64xf32> to vector<1x14x14x64xf32>
      tpu.vector_store %arg9[%c0_59, %c0_60, %c0_61, %c0_62], %139 {strides = array<i32>} : memref<1x14x14x64xf32, #tpu.memory_space<vmem>>, vector<1x14x14x64xf32>,
    } else {
    }
    return
  }
  func.func @transform_0(%arg0: i32, %arg1: i32, %arg2: i32) -> (i32, i32) {
    %c0_i32 = arith.constant 0 : i32
    return %arg0, %arg2 : i32, i32
  }
  func.func @transform_1(%arg0: i32, %arg1: i32, %arg2: i32) -> (i32, i32) {
    %c0_i32 = arith.constant 0 : i32
    return %arg2, %arg1 : i32, i32
  }
  func.func @transform_2(%arg0: i32, %arg1: i32, %arg2: i32) -> (i32, i32) {
    %c0_i32 = arith.constant 0 : i32
    %c0_i32_0 = arith.constant 0 : i32
    return %c0_i32, %arg1 : i32, i32
  }
  func.func @transform_3(%arg0: i32, %arg1: i32, %arg2: i32) -> (i32, i32) {
    %c0_i32 = arith.constant 0 : i32
    %c0_i32_0 = arith.constant 0 : i32
    %c0_i32_1 = arith.constant 0 : i32
    return %c0_i32, %c0_i32_0 : i32, i32
  }
  func.func @transform_4(%arg0: i32, %arg1: i32, %arg2: i32) -> (i32, i32, i32) {
    %c0_i32 = arith.constant 0 : i32
    %c0_i32_0 = arith.constant 0 : i32
    %c0_i32_1 = arith.constant 0 : i32
    return %c0_i32, %c0_i32_0, %arg1 : i32, i32, i32
  }
  func.func @transform_5(%arg0: i32, %arg1: i32, %arg2: i32) -> (i32, i32) {
    %c0_i32 = arith.constant 0 : i32
    %c0_i32_0 = arith.constant 0 : i32
    return %c0_i32, %arg1 : i32, i32
  }
  func.func @transform_6(%arg0: i32, %arg1: i32, %arg2: i32) -> (i32, i32, i32, i32) {
    %c0_i32 = arith.constant 0 : i32
    %c0_i32_0 = arith.constant 0 : i32
    %c0_i32_1 = arith.constant 0 : i32
    return %arg0, %c0_i32, %c0_i32_0, %arg1 : i32, i32, i32, i32
  }
}

module attributes {stable_mosaic.version = 11 : i64} {
  func.func @mlp1_kernel(%arg0: i32, %arg1: i32, %arg2: memref<256x32xbf16, #tpu.memory_space<vmem>>, %arg3: memref<32x64xbf16, #tpu.memory_space<vmem>>, %arg4: memref<1x64xf32, #tpu.memory_space<vmem>>, %arg5: memref<256x64xbf16, #tpu.memory_space<vmem>>) attributes {dimension_semantics = [#tpu.dimension_semantics<parallel>, #tpu.dimension_semantics<parallel>], iteration_bounds = array<i64: 2, 1>, scalar_prefetch = 0 : i64, scratch_operands = 0 : i64, tpu.core_type = #tpu.core_type<tc>, window_params = [{transform_indices = @transform_0, window_bounds = array<i64: 256, 32>}, {transform_indices = @transform_1, window_bounds = array<i64: 32, 64>}, {transform_indices = @transform_2, window_bounds = array<i64: 1, 64>}, {transform_indices = @transform_3, window_bounds = array<i64: 256, 64>}]} {
    %c0 = arith.constant 0 : index
    %c0_0 = arith.constant 0 : index
    %0 = vector.load %arg2[%c0, %c0_0] : memref<256x32xbf16, #tpu.memory_space<vmem>>, vector<256x32xbf16>
    %c0_1 = arith.constant 0 : index
    %c0_2 = arith.constant 0 : index
    %1 = vector.load %arg3[%c0_1, %c0_2] : memref<32x64xbf16, #tpu.memory_space<vmem>>, vector<32x64xbf16>
    %cst = arith.constant dense<0.000000e+00> : vector<256x64xf32>
    %2 = tpu.matmul %0, %1, %cst {dimension_numbers = #tpu.dot_dimension_numbers<[1], [0], [0], [1], [0, 0, 1, 1], [], []>} : vector<256x32xbf16>, vector<32x64xbf16>, vector<256x64xf32> -> vector<256x64xf32>
    %c0_3 = arith.constant 0 : index
    %c0_4 = arith.constant 0 : index
    %3 = vector.load %arg4[%c0_3, %c0_4] : memref<1x64xf32, #tpu.memory_space<vmem>>, vector<1x64xf32>
    %4 = vector.broadcast %3 : vector<1x64xf32> to vector<256x64xf32>
    %5 = arith.addf %2, %4 : vector<256x64xf32>
    %cst_5 = arith.constant 0.707106769 : f32
    %6 = vector.broadcast %cst_5 : f32 to vector<256x64xf32>
    %7 = arith.mulf %5, %6 : vector<256x64xf32>
    %8 = math.absf %7 : vector<256x64xf32>
    %cst_6 = arith.constant 0.327591091 : f32
    %9 = vector.broadcast %cst_6 : f32 to vector<256x64xf32>
    %10 = arith.mulf %9, %8 : vector<256x64xf32>
    %cst_7 = arith.constant 1.000000e+00 : f32
    %11 = vector.broadcast %cst_7 : f32 to vector<256x64xf32>
    %12 = arith.addf %11, %10 : vector<256x64xf32>
    %cst_8 = arith.constant 1.000000e+00 : f32
    %13 = vector.broadcast %cst_8 : f32 to vector<256x64xf32>
    %14 = arith.divf %13, %12 : vector<256x64xf32>
    %cst_9 = arith.constant 1.06140542 : f32
    %15 = vector.broadcast %cst_9 : f32 to vector<256x64xf32>
    %16 = arith.mulf %15, %14 : vector<256x64xf32>
    %cst_10 = arith.constant -1.45315206 : f32
    %17 = vector.broadcast %cst_10 : f32 to vector<256x64xf32>
    %18 = arith.addf %16, %17 : vector<256x64xf32>
    %19 = arith.mulf %18, %14 : vector<256x64xf32>
    %cst_11 = arith.constant 1.42141378 : f32
    %20 = vector.broadcast %cst_11 : f32 to vector<256x64xf32>
    %21 = arith.addf %19, %20 : vector<256x64xf32>
    %22 = arith.mulf %21, %14 : vector<256x64xf32>
    %cst_12 = arith.constant -0.284496725 : f32
    %23 = vector.broadcast %cst_12 : f32 to vector<256x64xf32>
    %24 = arith.addf %22, %23 : vector<256x64xf32>
    %25 = arith.mulf %24, %14 : vector<256x64xf32>
    %cst_13 = arith.constant 0.254829586 : f32
    %26 = vector.broadcast %cst_13 : f32 to vector<256x64xf32>
    %27 = arith.addf %25, %26 : vector<256x64xf32>
    %28 = arith.mulf %27, %14 : vector<256x64xf32>
    %cst_14 = arith.constant 0.000000e+00 : f32
    %29 = vector.broadcast %cst_14 : f32 to vector<256x64xf32>
    %30 = arith.subf %29, %8 : vector<256x64xf32>
    %31 = arith.mulf %30, %8 : vector<256x64xf32>
    %32 = math.exp %31 : vector<256x64xf32>
    %33 = arith.mulf %28, %32 : vector<256x64xf32>
    %cst_15 = arith.constant 1.000000e+00 : f32
    %34 = vector.broadcast %cst_15 : f32 to vector<256x64xf32>
    %35 = arith.subf %34, %33 : vector<256x64xf32>
    %cst_16 = arith.constant 0.000000e+00 : f32
    %36 = vector.broadcast %cst_16 : f32 to vector<256x64xf32>
    %37 = arith.cmpf oge, %7, %36 : vector<256x64xf32>
    %cst_17 = arith.constant 0.000000e+00 : f32
    %38 = vector.broadcast %cst_17 : f32 to vector<256x64xf32>
    %39 = arith.subf %38, %35 : vector<256x64xf32>
    %40 = arith.select %37, %35, %39 : vector<256x64xi1>, vector<256x64xf32>
    %cst_18 = arith.constant 5.000000e-01 : f32
    %41 = vector.broadcast %cst_18 : f32 to vector<256x64xf32>
    %42 = arith.mulf %41, %5 : vector<256x64xf32>
    %cst_19 = arith.constant 1.000000e+00 : f32
    %43 = vector.broadcast %cst_19 : f32 to vector<256x64xf32>
    %44 = arith.addf %43, %40 : vector<256x64xf32>
    %45 = arith.mulf %42, %44 : vector<256x64xf32>
    %46 = arith.truncf %45 : vector<256x64xf32> to vector<256x64xbf16>
    %c0_20 = arith.constant 0 : index
    %c0_21 = arith.constant 0 : index
    %47 = vector.load %arg5[%c0_20, %c0_21] : memref<256x64xbf16, #tpu.memory_space<vmem>>, vector<256x64xbf16>
    tpu.vector_store %arg5[%c0_20, %c0_21], %46 {strides = array<i32>} : memref<256x64xbf16, #tpu.memory_space<vmem>>, vector<256x64xbf16>,
    return
  }
  func.func @transform_0(%arg0: i32, %arg1: i32) -> (i32, i32) {
    %c0_i32 = arith.constant 0 : i32
    %c0_i32_0 = arith.constant 0 : i32
    return %arg0, %c0_i32 : i32, i32
  }
  func.func @transform_1(%arg0: i32, %arg1: i32) -> (i32, i32) {
    %c0_i32 = arith.constant 0 : i32
    %c0_i32_0 = arith.constant 0 : i32
    return %c0_i32, %arg1 : i32, i32
  }
  func.func @transform_2(%arg0: i32, %arg1: i32) -> (i32, i32) {
    %c0_i32 = arith.constant 0 : i32
    %c0_i32_0 = arith.constant 0 : i32
    return %c0_i32, %arg1 : i32, i32
  }
  func.func @transform_3(%arg0: i32, %arg1: i32) -> (i32, i32) {
    %c0_i32 = arith.constant 0 : i32
    return %arg0, %arg1 : i32, i32
  }
}

</mosaic_0001>

<llo_original>
// kernel: ldp_projector.2
$region0: #{ldp_projector.2}
  #allocation0 [shape = 'u32[]', space=smem, size = 0x4, offset = 0x4, fixed_abs, tag = 'smem constant byte address 0x4 - core index']
  #allocation1 [shape = 'u32[144,128]{1,0:T(1,128)}', space=vmem, size = 0x12000, scoped, tag = 'internal scratch']
  %s0 = inlined_call_operand.vmem [shape: bf16[512,32], index: 0, kind: input, shape index: {}]
  %s1 = inlined_call_operand.vmem [shape: bf16[32,64], index: 1, kind: input, shape index: {}]
  %s2 = inlined_call_operand.vmem [shape: f32[1,64], index: 2, kind: input, shape index: {}]
  %s3 = inlined_call_operand.vmem [shape: bf16[512,64], index: 3, kind: output, shape index: {}]
  %s4 = sld [smem:[#allocation0]]
  $region45: #{ldp_projector.2} parent=0
    _
  %s6 = ssub.s32 1, %s4
  %s7 = scalar_select 0, %s6, %s4
  loop: start=0, step=1, limit=4
  $region2: #{ldp_projector.2} parent=0 // loop_pre_header
    _
  $region3: #{ldp_projector.2} parent=0 // loop_header
    %s9 = sphi 0, %s13
    %p10 = scmp.ge.s32.totalorder %s9, 4
    %s16 = sphi 0, %s28
    %s17 = sphi 0, %s24
    %s18 = sphi 0, %s16
    %s19 = sphi 0, %s17
    %s20 = sphi 0, %s18
    %s21 = sphi 0, %s19
    %s31 = sphi 0, %s33
    %s34 = sphi 0, %s31
    %s35 = sphi 0, %s34
    %s51 = sphi 0, %s35
    %s57 = sphi 0, %s59
    %s60 = sphi 0, %s57
    %s61 = sphi 0, %s60
    %s77 = sphi 0, %s61
    %s83 = sphi 0, %s85
    %s86 = sphi 0, %s83
    %s87 = sphi 0, %s86
    %s103 = sphi 0, %s87
    %s111 = sphi 0, %s113
    %s114 = sphi 0, %s111
    %s115 = sphi 0, %s114
    %s131 = sphi 0, %s115
  $region4: #{ldp_projector.2} parent=0 // loop_header_branch
    %12 = sbr.rel (%p10) target = $region8
  $region5: #{ldp_projector.2} parent=0 // loop_body
    %s14 = ssub.s32 %s9, 1
    %s15 = ssub.s32 %s9, 2
    %s22 = sadd.s32 1, %s17
    %p23 = scmp.ge.s32.totalorder %s22, 1
    %s24 = scalar_select %p23, 0, %s22
    %s25 = sadd.s32 1, %s16
    %s26 = scalar_select %p23, %s25, %s16
    %p27 = scmp.ge.s32.totalorder %s26, 2
    %s28 = scalar_select %p27, 0, %s26
    %s29 = ssub.s32 %s16, %s28
    %p30 = scmp.eq.s32.totalorder %s29, 0
    %s32 = sadd.s32 %s31, 1
    %s33 = scalar_select %p30, %s31, %s32
    %p36 = pneg %p30
    %p37 = scmp.eq.s32.totalorder %s9, 1
    %p38 = por %p36, %p37
    %p39 = scmp.ne.s32.totalorder %s31, %s34
    %p40 = scmp.eq.s32.totalorder %s9, 0
    %p41 = por %p39, %p40
    %p42 = scmp.ne.s32.totalorder %s31, %s34
    %p43 = scmp.eq.s32.totalorder %s14, 1
    %p44 = por %p42, %p43
    %p45 = scmp.ne.s32.totalorder %s34, %s35
    %p46 = scmp.eq.s32.totalorder %s14, 0
    %p47 = por %p45, %p46
    %p48 = scmp.ne.s32.totalorder %s34, %s35
    %p49 = scmp.eq.s32.totalorder %s15, 1
    %p50 = por %p48, %p49
    %p52 = scmp.ne.s32.totalorder %s35, %s51
    %p53 = scmp.eq.s32.totalorder %s15, 0
    %p54 = por %p52, %p53
    %s55 = ssub.s32 %s17, %s24
    %p56 = scmp.eq.s32.totalorder %s55, 0
    %s58 = sadd.s32 %s57, 1
    %s59 = scalar_select %p56, %s57, %s58
    %p62 = pneg %p56
    %p63 = scmp.eq.s32.totalorder %s9, 1
    %p64 = por %p62, %p63
    %p65 = scmp.ne.s32.totalorder %s57, %s60
    %p66 = scmp.eq.s32.totalorder %s9, 0
    %p67 = por %p65, %p66
    %p68 = scmp.ne.s32.totalorder %s57, %s60
    %p69 = scmp.eq.s32.totalorder %s14, 1
    %p70 = por %p68, %p69
    %p71 = scmp.ne.s32.totalorder %s60, %s61
    %p72 = scmp.eq.s32.totalorder %s14, 0
    %p73 = por %p71, %p72
    %p74 = scmp.ne.s32.totalorder %s60, %s61
    %p75 = scmp.eq.s32.totalorder %s15, 1
    %p76 = por %p74, %p75
    %p78 = scmp.ne.s32.totalorder %s61, %s77
    %p79 = scmp.eq.s32.totalorder %s15, 0
    %p80 = por %p78, %p79
    %s81 = ssub.s32 %s17, %s24
    %p82 = scmp.eq.s32.totalorder %s81, 0
    %s84 = sadd.s32 %s83, 1
    %s85 = scalar_select %p82, %s83, %s84
    %p88 = pneg %p82
    %p89 = scmp.eq.s32.totalorder %s9, 1
    %p90 = por %p88, %p89
    %p91 = scmp.ne.s32.totalorder %s83, %s86
    %p92 = scmp.eq.s32.totalorder %s9, 0
    %p93 = por %p91, %p92
    %p94 = scmp.ne.s32.totalorder %s83, %s86
    %p95 = scmp.eq.s32.totalorder %s14, 1
    %p96 = por %p94, %p95
    %p97 = scmp.ne.s32.totalorder %s86, %s87
    %p98 = scmp.eq.s32.totalorder %s14, 0
    %p99 = por %p97, %p98
    %p100 = scmp.ne.s32.totalorder %s86, %s87
    %p101 = scmp.eq.s32.totalorder %s15, 1
    %p102 = por %p100, %p101
    %p104 = scmp.ne.s32.totalorder %s87, %s103
    %p105 = scmp.eq.s32.totalorder %s15, 0
    %p106 = por %p104, %p105
    %s107 = ssub.s32 %s16, %s28
    %s108 = ssub.s32 %s17, %s24
    %s109 = sor.u32 %s107, %s108
    %p110 = scmp.eq.s32.totalorder %s109, 0
    %s112 = sadd.s32 %s111, 1
    %s113 = scalar_select %p110, %s111, %s112
    %p116 = pneg %p110
    %p117 = scmp.eq.s32.totalorder %s9, 1
    %p118 = por %p116, %p117
    %p119 = scmp.ne.s32.totalorder %s111, %s114
    %p120 = scmp.eq.s32.totalorder %s9, 0
    %p121 = por %p119, %p120
    %p122 = scmp.ne.s32.totalorder %s111, %s114
    %p123 = scmp.eq.s32.totalorder %s14, 1
    %p124 = por %p122, %p123
    %p125 = scmp.ne.s32.totalorder %s114, %s115
    %p126 = scmp.eq.s32.totalorder %s14, 0
    %p127 = por %p125, %p126
    %p128 = scmp.ne.s32.totalorder %s114, %s115
    %p129 = scmp.eq.s32.totalorder %s15, 1
    %p130 = por %p128, %p129
    %p132 = scmp.ne.s32.totalorder %s115, %s131
    %p133 = scmp.eq.s32.totalorder %s15, 0
    %p134 = por %p132, %p133
    %p135 = scmp.le.s32.totalorder 1, %s9
    %p136 = scmp.lt.s32.totalorder %s9, 3
    %p137 = pnand %p135, %p136
    %p138 = pneg %p137
    // Predicated region
    $region9: #{ldp_projector.2} parent=5 // pred_check
      _
    $region10: #{ldp_projector.2} parent=5 // pred_check_branch
      %140 = sbr.rel (%p137) target = $region12
    $region11: #{ldp_projector.2} parent=5 // pred_region
      %s141 = ssub.s32 %s9, 1
      // Predicated region
      $region13: #{ldp_projector.2} parent=11 // pred_check
        %p142 = pneg %p73
      $region14: #{ldp_projector.2} parent=11 // pred_check_branch
        %144 = sbr.rel (%p142) target = $region16
      $region15: #{ldp_projector.2} parent=11 // pred_region
        %p145 = scmp.lt.s32.totalorder %s19, 0
        %s146 = scalar_select %p145, %s19, 0
        %s147 = smul.addr %s146, 4
        %s148 = scalar_lea.vmem %s1, %s147
      $region16: #{ldp_projector.2} parent=11 // pred_fallthru
        _
      // Predicated region
      $region17: #{ldp_projector.2} parent=11 // pred_check
        %p149 = pneg %p99
      $region18: #{ldp_projector.2} parent=11 // pred_check_branch
        %151 = sbr.rel (%p149) target = $region20
      $region19: #{ldp_projector.2} parent=11 // pred_region
        %p152 = scmp.lt.s32.totalorder %s19, 0
        %s153 = scalar_select %p152, %s19, 0
        %s154 = scalar_lea.vmem %s2, %s153
      $region20: #{ldp_projector.2} parent=11 // pred_fallthru
        _
    $region12: #{ldp_projector.2} parent=5 // pred_fallthru
      _
    %p155 = scmp.lt.s32.totalorder %s9, 2
    // Predicated region
    $region21: #{ldp_projector.2} parent=5 // pred_check
      %p156 = pneg %p155
    $region22: #{ldp_projector.2} parent=5 // pred_check_branch
      %158 = sbr.rel (%p156) target = $region24
    $region23: #{ldp_projector.2} parent=5 // pred_region
      // Predicated region
      $region25: #{ldp_projector.2} parent=23 // pred_check
        %p159 = pneg %p41
      $region26: #{ldp_projector.2} parent=23 // pred_check_branch
        %161 = sbr.rel (%p159) target = $region28
      $region27: #{ldp_projector.2} parent=23 // pred_region
        %s162 = smul.u32 32, %s16
        %p163 = scmp.lt.s32.totalorder %s162, 63
        %s164 = scalar_select %p163, %s162, 63
        %s165 = smul.addr %s164, 4
        %s166 = scalar_lea.vmem %s0, %s165
        %s167 = smul.u32 32, %s16
      $region28: #{ldp_projector.2} parent=23 // pred_fallthru
        _
    $region24: #{ldp_projector.2} parent=5 // pred_fallthru
      _
    %p168 = scmp.le.s32.totalorder 1, %s9
    %p169 = scmp.lt.s32.totalorder %s9, 3
    %p170 = pnand %p168, %p169
    %p171 = pneg %p170
    // Predicated region
    $region29: #{ldp_projector.2} parent=5 // pred_check
      _
    $region30: #{ldp_projector.2} parent=5 // pred_check_branch
      %173 = sbr.rel (%p170) target = $region32
    $region31: #{ldp_projector.2} parent=5 // pred_region
      %s174 = ssub.s32 %s9, 1
      %s175 = smul.u32 32, %s18
      %p176 = scmp.lt.s32.totalorder %s175, 63
      %s177 = scalar_select %p176, %s175, 63
      %s178 = smul.addr %s177, 4
      %s179 = scalar_lea.vmem %s0, %s178
      %p180 = pneg %p47
      %p181 = pneg %p44
      %p182 = scmp.lt.s32.totalorder %s19, 0
      %s183 = scalar_select %p182, %s19, 0
      %s184 = smul.addr %s183, 4
      %s185 = scalar_lea.vmem %s1, %s184
      %p186 = pneg %p73
      %p187 = pneg %p70
      %p188 = scmp.lt.s32.totalorder %s19, 0
      %s189 = scalar_select %p188, %s19, 0
      %s190 = scalar_lea.vmem %s2, %s189
      %p191 = pneg %p99
      %p192 = pneg %p96
      %p193 = pneg %p127
      %p194 = pneg %p124
      %s195 = smul.u32 32, %s18
      %p196 = scmp.lt.s32.totalorder %s195, 63
      %s197 = scalar_select %p196, %s195, 63
      %p198 = scmp.lt.s32.totalorder %s19, 0
      %s199 = scalar_select %p198, %s19, 0
      %s200 = sadd.s32 %s199, %s197
      %s201 = smul.addr %s200, 4
      %s202 = scalar_lea.vmem %s3, %s201
      %s203 = smul.u32 32, %s18
      %p204 = scmp.lt.s32.totalorder %s203, 63
      %s205 = scalar_select %p204, %s203, 63
      %s206 = smul.addr %s205, 4
      %s207 = scalar_lea.vmem %s0, %s206
      %s208 = smul.u32 32, %s18
      %p209 = scmp.lt.s32.totalorder %s19, 0
      %s210 = scalar_select %p209, %s19, 0
      %s211 = smul.addr %s210, 4
      %s212 = scalar_lea.vmem %s1, %s211
      %p213 = scmp.lt.s32.totalorder %s19, 0
      %s214 = scalar_select %p213, %s19, 0
      %s215 = scalar_lea.vmem %s2, %s214
      %s216 = smul.u32 32, %s18
      %p217 = scmp.lt.s32.totalorder %s216, 63
      %s218 = scalar_select %p217, %s216, 63
      %p219 = scmp.lt.s32.totalorder %s19, 0
      %s220 = scalar_select %p219, %s19, 0
      %s221 = sadd.s32 %s220, %s218
      %s222 = smul.addr %s221, 4
      %s223 = scalar_lea.vmem %s3, %s222
      %s224 = smul.u32 32, %s18
      %v226 = vld [vmem:[%s207] sm:$0xf]
      %v227 = vld [vmem:[%s207 + $0x4] sm:$0xf]
      %v228 = vld [vmem:[%s207 + $0x8] sm:$0xf]
      %v229 = vld [vmem:[%s207 + $0xc] sm:$0xf]
      %v230 = vld [vmem:[%s207 + $0x10] sm:$0xf]
      %v231 = vld [vmem:[%s207 + $0x14] sm:$0xf]
      %v232 = vld [vmem:[%s207 + $0x18] sm:$0xf]
      %v233 = vld [vmem:[%s207 + $0x1c] sm:$0xf]
      %v234 = vld [vmem:[%s207 + $0x20] sm:$0xf]
      %v235 = vld [vmem:[%s207 + $0x24] sm:$0xf]
      %v236 = vld [vmem:[%s207 + $0x28] sm:$0xf]
      %v237 = vld [vmem:[%s207 + $0x2c] sm:$0xf]
      %v238 = vld [vmem:[%s207 + $0x30] sm:$0xf]
      %v239 = vld [vmem:[%s207 + $0x34] sm:$0xf]
      %v240 = vld [vmem:[%s207 + $0x38] sm:$0xf]
      %v241 = vld [vmem:[%s207 + $0x3c] sm:$0xf]
      %v242 = vld [vmem:[%s207 + $0x40] sm:$0xf]
      %v243 = vld [vmem:[%s207 + $0x44] sm:$0xf]
      %v244 = vld [vmem:[%s207 + $0x48] sm:$0xf]
      %v245 = vld [vmem:[%s207 + $0x4c] sm:$0xf]
      %v246 = vld [vmem:[%s207 + $0x50] sm:$0xf]
      %v247 = vld [vmem:[%s207 + $0x54] sm:$0xf]
      %v248 = vld [vmem:[%s207 + $0x58] sm:$0xf]
      %v249 = vld [vmem:[%s207 + $0x5c] sm:$0xf]
      %v250 = vld [vmem:[%s207 + $0x60] sm:$0xf]
      %v251 = vld [vmem:[%s207 + $0x64] sm:$0xf]
      %v252 = vld [vmem:[%s207 + $0x68] sm:$0xf]
      %v253 = vld [vmem:[%s207 + $0x6c] sm:$0xf]
      %v254 = vld [vmem:[%s207 + $0x70] sm:$0xf]
      %v255 = vld [vmem:[%s207 + $0x74] sm:$0xf]
      %v256 = vld [vmem:[%s207 + $0x78] sm:$0xf]
      %v257 = vld [vmem:[%s207 + $0x7c] sm:$0xf]
      %v258 = vld [vmem:[%s212] sm:$0xf]
      %v259 = vld [vmem:[%s212 + $0x4] sm:$0xf]
      %v260 = vld [vmem:[%s212 + $0x8] sm:$0xf]
      %v261 = vld [vmem:[%s212 + $0xc] sm:$0xf]
      %v262 = vld [vmem:[%s215] sm:$0x1]
      %v264 = vlaneseq
      %v265 = vshrl.u32 %v264, 7
      %v266 = vsub.s32 0, %v265
      %v267 = vrot.slane %v262, %v266
      %v301 = vunpack.c.l.b16 %v226
      %v302 = vunpack.c.l.b16 %v227
      %v303 = vunpack.c.l.b16 %v228
      %v304 = vunpack.c.l.b16 %v229
      %v305 = vunpack.c.l.b16 %v230
      %v306 = vunpack.c.l.b16 %v231
      %v307 = vunpack.c.l.b16 %v232
      %v308 = vunpack.c.l.b16 %v233
      %v309 = vunpack.c.l.b16 %v234
      %v310 = vunpack.c.l.b16 %v235
      %v311 = vunpack.c.l.b16 %v236
      %v312 = vunpack.c.l.b16 %v237
      %v313 = vunpack.c.l.b16 %v238
      %v314 = vunpack.c.l.b16 %v239
      %v315 = vunpack.c.l.b16 %v240
      %v316 = vunpack.c.l.b16 %v241
      %v317 = vunpack.c.l.b16 %v242
      %v318 = vunpack.c.l.b16 %v243
      %v319 = vunpack.c.l.b16 %v244
      %v320 = vunpack.c.l.b16 %v245
      %v321 = vunpack.c.l.b16 %v246
      %v322 = vunpack.c.l.b16 %v247
      %v323 = vunpack.c.l.b16 %v248
      %v324 = vunpack.c.l.b16 %v249
      %v325 = vunpack.c.l.b16 %v250
      %v326 = vunpack.c.l.b16 %v251
      %v327 = vunpack.c.l.b16 %v252
      %v328 = vunpack.c.l.b16 %v253
      %v329 = vunpack.c.l.b16 %v254
      %v330 = vunpack.c.l.b16 %v255
      %v331 = vunpack.c.l.b16 %v256
      %v332 = vunpack.c.l.b16 %v257
      %v333 = vpack.c.b16 %v302, %v301
      %v334 = vpack.c.b16 %v304, %v303
      %v335 = vpack.c.b16 %v306, %v305
      %v336 = vpack.c.b16 %v308, %v307
      %v337 = vpack.c.b16 %v310, %v309
      %v338 = vpack.c.b16 %v312, %v311
      %v339 = vpack.c.b16 %v314, %v313
      %v340 = vpack.c.b16 %v316, %v315
      %v341 = vpack.c.b16 %v318, %v317
      %v342 = vpack.c.b16 %v320, %v319
      %v343 = vpack.c.b16 %v322, %v321
      %v344 = vpack.c.b16 %v324, %v323
      %v345 = vpack.c.b16 %v326, %v325
      %v346 = vpack.c.b16 %v328, %v327
      %v347 = vpack.c.b16 %v330, %v329
      %v348 = vpack.c.b16 %v332, %v331
      %v353 = vunpack.c.l.b16 %v258
      %v354 = vunpack.c.l.b16 %v259
      %v355 = vunpack.c.l.b16 %v260
      %v356 = vunpack.c.l.b16 %v261
      %v357 = vpack.c.b16 %v354, %v353
      %v358 = vpack.c.b16 %v356, %v355
      %vm361 = vcmask 261120
      %v363 = vsel %vm361, %v333, 0
      %v366 = vsel %vm361, %v334, 0
      %v369 = vsel %vm361, %v335, 0
      %v372 = vsel %vm361, %v336, 0
      %v375 = vsel %vm361, %v337, 0
      %v378 = vsel %vm361, %v338, 0
      %v381 = vsel %vm361, %v339, 0
      %v384 = vsel %vm361, %v340, 0
      %v387 = vsel %vm361, %v341, 0
      %v390 = vsel %vm361, %v342, 0
      %v393 = vsel %vm361, %v343, 0
      %v396 = vsel %vm361, %v344, 0
      %v399 = vsel %vm361, %v345, 0
      %v402 = vsel %vm361, %v346, 0
      %v405 = vsel %vm361, %v347, 0
      %v408 = vsel %vm361, %v348, 0
      %410 = vmatprep.subr.bf16.mxu0 0
      %411 = vmatpush1.bf16.msra.mxu0 %v357
      %412 = vmatprep.subr.bf16.mxu0 0
      %413 = vmatpush1.bf16.msra.mxu0 %v358
      %414 = vmatprep.subr.bf16.mxu0 0
      %415 = vmatpush1.bf16.msra.mxu0 0
      %416 = vmatprep.subr.bf16.mxu0 0
      %417 = vmatpush1.bf16.msra.mxu0 0
      %418 = vmatprep.subr.bf16.mxu0 0
      %419 = vmatpush1.bf16.msra.mxu0 0
      %420 = vmatprep.subr.bf16.mxu0 0
      %421 = vmatpush1.bf16.msra.mxu0 0
      %422 = vmatprep.subr.bf16.mxu0 0
      %423 = vmatpush1.bf16.msra.mxu0 0
      %424 = vmatprep.subr.bf16.mxu0 0
      %425 = vmatpush1.bf16.msra.mxu0 0
      %426 = vmatprep.subr.bf16.mxu0 0
      %427 = vmatpush1.bf16.msra.mxu0 0
      %428 = vmatprep.subr.bf16.mxu0 0
      %429 = vmatpush1.bf16.msra.mxu0 0
      %430 = vmatprep.subr.bf16.mxu0 0
      %431 = vmatpush1.bf16.msra.mxu0 0
      %432 = vmatprep.subr.bf16.mxu0 0
      %433 = vmatpush1.bf16.msra.mxu0 0
      %434 = vmatprep.subr.bf16.mxu0 0
      %435 = vmatpush1.bf16.msra.mxu0 0
      %436 = vmatprep.subr.bf16.mxu0 0
      %437 = vmatpush1.bf16.msra.mxu0 0
      %438 = vmatprep.subr.bf16.mxu0 0
      %439 = vmatpush1.bf16.msra.mxu0 0
      %440 = vmatprep.subr.bf16.mxu0 0
      %441 = vmatpush1.bf16.msra.mxu0 0
      %442 = vmatprep.mubr.bf16.mxu0 0
      %443 = vmatmul.mubr.bf16.gmra.mrb[0].mxu0 %v363
      %v444 = vpop.f32.mrb[0].mxu0
      %v445 = vadd.f32 %v267, %v444
      %v446 = vpop.f32.mrb[0].mxu0
      %v447 = vpop.f32.mrb[0].mxu0
      %v448 = vadd.f32 %v267, %v447
      %v449 = vpop.f32.mrb[0].mxu0
      %450 = vmatprep.mubr.bf16.mxu0 0
      %451 = vmatmul.mubr.bf16.gmra.mrb[0].mxu0 %v366
      %v452 = vpop.f32.mrb[0].mxu0
      %v453 = vadd.f32 %v267, %v452
      %v454 = vpop.f32.mrb[0].mxu0
      %v455 = vpop.f32.mrb[0].mxu0
      %v456 = vadd.f32 %v267, %v455
      %v457 = vpop.f32.mrb[0].mxu0
      %458 = vmatprep.mubr.bf16.mxu0 0
      %459 = vmatmul.mubr.bf16.gmra.mrb[0].mxu0 %v369
      %v460 = vpop.f32.mrb[0].mxu0
      %v461 = vadd.f32 %v267, %v460
      %v462 = vpop.f32.mrb[0].mxu0
      %v463 = vpop.f32.mrb[0].mxu0
      %v464 = vadd.f32 %v267, %v463
      %v465 = vpop.f32.mrb[0].mxu0
      %466 = vmatprep.mubr.bf16.mxu0 0
      %467 = vmatmul.mubr.bf16.gmra.mrb[0].mxu0 %v372
      %v468 = vpop.f32.mrb[0].mxu0
      %v469 = vadd.f32 %v267, %v468
      %v470 = vpop.f32.mrb[0].mxu0
      %v471 = vpop.f32.mrb[0].mxu0
      %v472 = vadd.f32 %v267, %v471
      %v473 = vpop.f32.mrb[0].mxu0
      %474 = vmatprep.mubr.bf16.mxu0 0
      %475 = vmatmul.mubr.bf16.gmra.mrb[0].mxu0 %v375
      %v476 = vpop.f32.mrb[0].mxu0
      %v477 = vadd.f32 %v267, %v476
      %v478 = vpop.f32.mrb[0].mxu0
      %v479 = vpop.f32.mrb[0].mxu0
      %v480 = vadd.f32 %v267, %v479
      %v481 = vpop.f32.mrb[0].mxu0
      %482 = vmatprep.mubr.bf16.mxu0 0
      %483 = vmatmul.mubr.bf16.gmra.mrb[0].mxu0 %v378
      %v484 = vpop.f32.mrb[0].mxu0
      %v485 = vadd.f32 %v267, %v484
      %v486 = vpop.f32.mrb[0].mxu0
      %v487 = vpop.f32.mrb[0].mxu0
      %v488 = vadd.f32 %v267, %v487
      %v489 = vpop.f32.mrb[0].mxu0
      %490 = vmatprep.mubr.bf16.mxu0 0
      %491 = vmatmul.mubr.bf16.gmra.mrb[0].mxu0 %v381
      %v492 = vpop.f32.mrb[0].mxu0
      %v493 = vadd.f32 %v267, %v492
      %v494 = vpop.f32.mrb[0].mxu0
      %v495 = vpop.f32.mrb[0].mxu0
      %v496 = vadd.f32 %v267, %v495
      %v497 = vpop.f32.mrb[0].mxu0
      %498 = vmatprep.mubr.bf16.mxu0 0
      %499 = vmatmul.mubr.bf16.gmra.mrb[0].mxu0 %v384
      %v500 = vpop.f32.mrb[0].mxu0
      %v501 = vadd.f32 %v267, %v500
      %v502 = vpop.f32.mrb[0].mxu0
      %v503 = vpop.f32.mrb[0].mxu0
      %v504 = vadd.f32 %v267, %v503
      %v505 = vpop.f32.mrb[0].mxu0
      %506 = vmatprep.mubr.bf16.mxu0 0
      %507 = vmatmul.mubr.bf16.gmra.mrb[0].mxu0 %v387
      %v508 = vpop.f32.mrb[0].mxu0
      %v509 = vadd.f32 %v267, %v508
      %v510 = vpop.f32.mrb[0].mxu0
      %v511 = vpop.f32.mrb[0].mxu0
      %v512 = vadd.f32 %v267, %v511
      %v513 = vpop.f32.mrb[0].mxu0
      %514 = vmatprep.mubr.bf16.mxu0 0
      %515 = vmatmul.mubr.bf16.gmra.mrb[0].mxu0 %v390
      %v516 = vpop.f32.mrb[0].mxu0
      %v517 = vadd.f32 %v267, %v516
      %v518 = vpop.f32.mrb[0].mxu0
      %v519 = vpop.f32.mrb[0].mxu0
      %v520 = vadd.f32 %v267, %v519
      %v521 = vpop.f32.mrb[0].mxu0
      %522 = vmatprep.mubr.bf16.mxu0 0
      %523 = vmatmul.mubr.bf16.gmra.mrb[0].mxu0 %v393
      %v524 = vpop.f32.mrb[0].mxu0
      %v525 = vadd.f32 %v267, %v524
      %v526 = vpop.f32.mrb[0].mxu0
      %v527 = vpop.f32.mrb[0].mxu0
      %v528 = vadd.f32 %v267, %v527
      %v529 = vpop.f32.mrb[0].mxu0
      %530 = vmatprep.mubr.bf16.mxu0 0
      %531 = vmatmul.mubr.bf16.gmra.mrb[0].mxu0 %v396
      %v532 = vpop.f32.mrb[0].mxu0
      %v533 = vadd.f32 %v267, %v532
      %v534 = vpop.f32.mrb[0].mxu0
      %v535 = vpop.f32.mrb[0].mxu0
      %v536 = vadd.f32 %v267, %v535
      %v537 = vpop.f32.mrb[0].mxu0
      %538 = vmatprep.mubr.bf16.mxu0 0
      %539 = vmatmul.mubr.bf16.gmra.mrb[0].mxu0 %v399
      %v540 = vpop.f32.mrb[0].mxu0
      %v541 = vadd.f32 %v267, %v540
      %v542 = vpop.f32.mrb[0].mxu0
      %v543 = vpop.f32.mrb[0].mxu0
      %v544 = vadd.f32 %v267, %v543
      %v545 = vpop.f32.mrb[0].mxu0
      %546 = vmatprep.mubr.bf16.mxu0 0
      %547 = vmatmul.mubr.bf16.gmra.mrb[0].mxu0 %v402
      %v548 = vpop.f32.mrb[0].mxu0
      %v549 = vadd.f32 %v267, %v548
      %v550 = vpop.f32.mrb[0].mxu0
      %v551 = vpop.f32.mrb[0].mxu0
      %v552 = vadd.f32 %v267, %v551
      %v553 = vpop.f32.mrb[0].mxu0
      %554 = vmatprep.mubr.bf16.mxu0 0
      %555 = vmatmul.mubr.bf16.gmra.mrb[0].mxu0 %v405
      %v556 = vpop.f32.mrb[0].mxu0
      %v557 = vadd.f32 %v267, %v556
      %v558 = vpop.f32.mrb[0].mxu0
      %v559 = vpop.f32.mrb[0].mxu0
      %v560 = vadd.f32 %v267, %v559
      %v561 = vpop.f32.mrb[0].mxu0
      %562 = vmatprep.mubr.bf16.mxu0 0
      %563 = vmatmul.mubr.bf16.gmra.mrb[0].mxu0 %v408
      %v564 = vpop.f32.mrb[0].mxu0
      %v565 = vadd.f32 %v267, %v564
      %v566 = vpop.f32.mrb[0].mxu0
      %v567 = vpop.f32.mrb[0].mxu0
      %v568 = vadd.f32 %v267, %v567
      %v569 = vpop.f32.mrb[0].mxu0
      %570 = vdwg.mxu0
      %v571 = vmul.f32 %v445, 0.70710677
      %v572 = vmul.f32 %v448, 0.70710677
      %v573 = vmul.f32 %v453, 0.70710677
      %v574 = vmul.f32 %v456, 0.70710677
      %v575 = vmul.f32 %v461, 0.70710677
      %v576 = vmul.f32 %v464, 0.70710677
      %v577 = vmul.f32 %v469, 0.70710677
      %v578 = vmul.f32 %v472, 0.70710677
      %v579 = vmul.f32 %v477, 0.70710677
      %v580 = vmul.f32 %v480, 0.70710677
      %v581 = vmul.f32 %v485, 0.70710677
      %v582 = vmul.f32 %v488, 0.70710677
      %v583 = vmul.f32 %v493, 0.70710677
      %v584 = vmul.f32 %v496, 0.70710677
      %v585 = vmul.f32 %v501, 0.70710677
      %v586 = vmul.f32 %v504, 0.70710677
      %v587 = vmul.f32 %v509, 0.70710677
      %v588 = vmul.f32 %v512, 0.70710677
      %v589 = vmul.f32 %v517, 0.70710677
      %v590 = vmul.f32 %v520, 0.70710677
      %v591 = vmul.f32 %v525, 0.70710677
      %v592 = vmul.f32 %v528, 0.70710677
      %v593 = vmul.f32 %v533, 0.70710677
      %v594 = vmul.f32 %v536, 0.70710677
      %v595 = vmul.f32 %v541, 0.70710677
      %v596 = vmul.f32 %v544, 0.70710677
      %v597 = vmul.f32 %v549, 0.70710677
      %v598 = vmul.f32 %v552, 0.70710677
      %v599 = vmul.f32 %v557, 0.70710677
      %v600 = vmul.f32 %v560, 0.70710677
      %v601 = vmul.f32 %v565, 0.70710677
      %v602 = vmul.f32 %v568, 0.70710677
      %v603 = vand.u32 2147483647, %v571
      %v604 = vand.u32 2147483647, %v572
      %v605 = vand.u32 2147483647, %v573
      %v606 = vand.u32 2147483647, %v574
      %v607 = vand.u32 2147483647, %v575
      %v608 = vand.u32 2147483647, %v576
      %v609 = vand.u32 2147483647, %v577
      %v610 = vand.u32 2147483647, %v578
      %v611 = vand.u32 2147483647, %v579
      %v612 = vand.u32 2147483647, %v580
      %v613 = vand.u32 2147483647, %v581
      %v614 = vand.u32 2147483647, %v582
      %v615 = vand.u32 2147483647, %v583
      %v616 = vand.u32 2147483647, %v584
      %v617 = vand.u32 2147483647, %v585
      %v618 = vand.u32 2147483647, %v586
      %v619 = vand.u32 2147483647, %v587
      %v620 = vand.u32 2147483647, %v588
      %v621 = vand.u32 2147483647, %v589
      %v622 = vand.u32 2147483647, %v590
      %v623 = vand.u32 2147483647, %v591
      %v624 = vand.u32 2147483647, %v592
      %v625 = vand.u32 2147483647, %v593
      %v626 = vand.u32 2147483647, %v594
      %v627 = vand.u32 2147483647, %v595
      %v628 = vand.u32 2147483647, %v596
      %v629 = vand.u32 2147483647, %v597
      %v630 = vand.u32 2147483647, %v598
      %v631 = vand.u32 2147483647, %v599
      %v632 = vand.u32 2147483647, %v600
      %v633 = vand.u32 2147483647, %v601
      %v634 = vand.u32 2147483647, %v602
      %v635 = vmul.f32 %v603, 0.3275911
      %v636 = vmul.f32 %v604, 0.3275911
      %v637 = vmul.f32 %v605, 0.3275911
      %v638 = vmul.f32 %v606, 0.3275911
      %v639 = vmul.f32 %v607, 0.3275911
      %v640 = vmul.f32 %v608, 0.3275911
      %v641 = vmul.f32 %v609, 0.3275911
      %v642 = vmul.f32 %v610, 0.3275911
      %v643 = vmul.f32 %v611, 0.3275911
      %v644 = vmul.f32 %v612, 0.3275911
      %v645 = vmul.f32 %v613, 0.3275911
      %v646 = vmul.f32 %v614, 0.3275911
      %v647 = vmul.f32 %v615, 0.3275911
      %v648 = vmul.f32 %v616, 0.3275911
      %v649 = vmul.f32 %v617, 0.3275911
      %v650 = vmul.f32 %v618, 0.3275911
      %v651 = vmul.f32 %v619, 0.3275911
      %v652 = vmul.f32 %v620, 0.3275911
      %v653 = vmul.f32 %v621, 0.3275911
      %v654 = vmul.f32 %v622, 0.3275911
      %v655 = vmul.f32 %v623, 0.3275911
      %v656 = vmul.f32 %v624, 0.3275911
      %v657 = vmul.f32 %v625, 0.3275911
      %v658 = vmul.f32 %v626, 0.3275911
      %v659 = vmul.f32 %v627, 0.3275911
      %v660 = vmul.f32 %v628, 0.3275911
      %v661 = vmul.f32 %v629, 0.3275911
      %v662 = vmul.f32 %v630, 0.3275911
      %v663 = vmul.f32 %v631, 0.3275911
      %v664 = vmul.f32 %v632, 0.3275911
      %v665 = vmul.f32 %v633, 0.3275911
      %v666 = vmul.f32 %v634, 0.3275911
      %v667 = vadd.f32 %v635, 1.0
      %v668 = vadd.f32 %v636, 1.0
      %v669 = vadd.f32 %v637, 1.0
      %v670 = vadd.f32 %v638, 1.0
      %v671 = vadd.f32 %v639, 1.0
      %v672 = vadd.f32 %v640, 1.0
      %v673 = vadd.f32 %v641, 1.0
      %v674 = vadd.f32 %v642, 1.0
      %v675 = vadd.f32 %v643, 1.0
      %v676 = vadd.f32 %v644, 1.0
      %v677 = vadd.f32 %v645, 1.0
      %v678 = vadd.f32 %v646, 1.0
      %v679 = vadd.f32 %v647, 1.0
      %v680 = vadd.f32 %v648, 1.0
      %v681 = vadd.f32 %v649, 1.0
      %v682 = vadd.f32 %v650, 1.0
      %v683 = vadd.f32 %v651, 1.0
      %v684 = vadd.f32 %v652, 1.0
      %v685 = vadd.f32 %v653, 1.0
      %v686 = vadd.f32 %v654, 1.0
      %v687 = vadd.f32 %v655, 1.0
      %v688 = vadd.f32 %v656, 1.0
      %v689 = vadd.f32 %v657, 1.0
      %v690 = vadd.f32 %v658, 1.0
      %v691 = vadd.f32 %v659, 1.0
      %v692 = vadd.f32 %v660, 1.0
      %v693 = vadd.f32 %v661, 1.0
      %v694 = vadd.f32 %v662, 1.0
      %v695 = vadd.f32 %v663, 1.0
      %v696 = vadd.f32 %v664, 1.0
      %v697 = vadd.f32 %v665, 1.0
      %v698 = vadd.f32 %v666, 1.0
      %v699 = vrcp.pop %v667
      %v700 = vmul.f32 1.0, %v699
      %v701 = vrcp.pop %v668
      %v702 = vmul.f32 1.0, %v701
      %v703 = vrcp.pop %v669
      %v704 = vmul.f32 1.0, %v703
      %v705 = vrcp.pop %v670
      %v706 = vmul.f32 1.0, %v705
      %v707 = vrcp.pop %v671
      %v708 = vmul.f32 1.0, %v707
      %v709 = vrcp.pop %v672
      %v710 = vmul.f32 1.0, %v709
      %v711 = vrcp.pop %v673
      %v712 = vmul.f32 1.0, %v711
      %v713 = vrcp.pop %v674
      %v714 = vmul.f32 1.0, %v713
      %v715 = vrcp.pop %v675
      %v716 = vmul.f32 1.0, %v715
      %v717 = vrcp.pop %v676
      %v718 = vmul.f32 1.0, %v717
      %v719 = vrcp.pop %v677
      %v720 = vmul.f32 1.0, %v719
      %v721 = vrcp.pop %v678
      %v722 = vmul.f32 1.0, %v721
      %v723 = vrcp.pop %v679
      %v724 = vmul.f32 1.0, %v723
      %v725 = vrcp.pop %v680
      %v726 = vmul.f32 1.0, %v725
      %v727 = vrcp.pop %v681
      %v728 = vmul.f32 1.0, %v727
      %v729 = vrcp.pop %v682
      %v730 = vmul.f32 1.0, %v729
      %v731 = vrcp.pop %v683
      %v732 = vmul.f32 1.0, %v731
      %v733 = vrcp.pop %v684
      %v734 = vmul.f32 1.0, %v733
      %v735 = vrcp.pop %v685
      %v736 = vmul.f32 1.0, %v735
      %v737 = vrcp.pop %v686
      %v738 = vmul.f32 1.0, %v737
      %v739 = vrcp.pop %v687
      %v740 = vmul.f32 1.0, %v739
      %v741 = vrcp.pop %v688
      %v742 = vmul.f32 1.0, %v741
      %v743 = vrcp.pop %v689
      %v744 = vmul.f32 1.0, %v743
      %v745 = vrcp.pop %v690
      %v746 = vmul.f32 1.0, %v745
      %v747 = vrcp.pop %v691
      %v748 = vmul.f32 1.0, %v747
      %v749 = vrcp.pop %v692
      %v750 = vmul.f32 1.0, %v749
      %v751 = vrcp.pop %v693
      %v752 = vmul.f32 1.0, %v751
      %v753 = vrcp.pop %v694
      %v754 = vmul.f32 1.0, %v753
      %v755 = vrcp.pop %v695
      %v756 = vmul.f32 1.0, %v755
      %v757 = vrcp.pop %v696
      %v758 = vmul.f32 1.0, %v757
      %v759 = vrcp.pop %v697
      %v760 = vmul.f32 1.0, %v759
      %v761 = vrcp.pop %v698
      %v762 = vmul.f32 1.0, %v761
      %v763 = vmul.f32 %v700, 1.0614054
      %v764 = vmul.f32 %v702, 1.0614054
      %v765 = vmul.f32 %v704, 1.0614054
      %v766 = vmul.f32 %v706, 1.0614054
      %v767 = vmul.f32 %v708, 1.0614054
      %v768 = vmul.f32 %v710, 1.0614054
      %v769 = vmul.f32 %v712, 1.0614054
      %v770 = vmul.f32 %v714, 1.0614054
      %v771 = vmul.f32 %v716, 1.0614054
      %v772 = vmul.f32 %v718, 1.0614054
      %v773 = vmul.f32 %v720, 1.0614054
      %v774 = vmul.f32 %v722, 1.0614054
      %v775 = vmul.f32 %v724, 1.0614054
      %v776 = vmul.f32 %v726, 1.0614054
      %v777 = vmul.f32 %v728, 1.0614054
      %v778 = vmul.f32 %v730, 1.0614054
      %v779 = vmul.f32 %v732, 1.0614054
      %v780 = vmul.f32 %v734, 1.0614054
      %v781 = vmul.f32 %v736, 1.0614054
      %v782 = vmul.f32 %v738, 1.0614054
      %v783 = vmul.f32 %v740, 1.0614054
      %v784 = vmul.f32 %v742, 1.0614054
      %v785 = vmul.f32 %v744, 1.0614054
      %v786 = vmul.f32 %v746, 1.0614054
      %v787 = vmul.f32 %v748, 1.0614054
      %v788 = vmul.f32 %v750, 1.0614054
      %v789 = vmul.f32 %v752, 1.0614054
      %v790 = vmul.f32 %v754, 1.0614054
      %v791 = vmul.f32 %v756, 1.0614054
      %v792 = vmul.f32 %v758, 1.0614054
      %v793 = vmul.f32 %v760, 1.0614054
      %v794 = vmul.f32 %v762, 1.0614054
      %v795 = vadd.f32 %v763, -1.4531521
      %v796 = vadd.f32 %v764, -1.4531521
      %v797 = vadd.f32 %v765, -1.4531521
      %v798 = vadd.f32 %v766, -1.4531521
      %v799 = vadd.f32 %v767, -1.4531521
      %v800 = vadd.f32 %v768, -1.4531521
      %v801 = vadd.f32 %v769, -1.4531521
      %v802 = vadd.f32 %v770, -1.4531521
      %v803 = vadd.f32 %v771, -1.4531521
      %v804 = vadd.f32 %v772, -1.4531521
      %v805 = vadd.f32 %v773, -1.4531521
      %v806 = vadd.f32 %v774, -1.4531521
      %v807 = vadd.f32 %v775, -1.4531521
      %v808 = vadd.f32 %v776, -1.4531521
      %v809 = vadd.f32 %v777, -1.4531521
      %v810 = vadd.f32 %v778, -1.4531521
      %v811 = vadd.f32 %v779, -1.4531521
      %v812 = vadd.f32 %v780, -1.4531521
      %v813 = vadd.f32 %v781, -1.4531521
      %v814 = vadd.f32 %v782, -1.4531521
      %v815 = vadd.f32 %v783, -1.4531521
      %v816 = vadd.f32 %v784, -1.4531521
      %v817 = vadd.f32 %v785, -1.4531521
      %v818 = vadd.f32 %v786, -1.4531521
      %v819 = vadd.f32 %v787, -1.4531521
      %v820 = vadd.f32 %v788, -1.4531521
      %v821 = vadd.f32 %v789, -1.4531521
      %v822 = vadd.f32 %v790, -1.4531521
      %v823 = vadd.f32 %v791, -1.4531521
      %v824 = vadd.f32 %v792, -1.4531521
      %v825 = vadd.f32 %v793, -1.4531521
      %v826 = vadd.f32 %v794, -1.4531521
      %v827 = vmul.f32 %v795, %v700
      %v828 = vmul.f32 %v796, %v702
      %v829 = vmul.f32 %v797, %v704
      %v830 = vmul.f32 %v798, %v706
      %v831 = vmul.f32 %v799, %v708
      %v832 = vmul.f32 %v800, %v710
      %v833 = vmul.f32 %v801, %v712
      %v834 = vmul.f32 %v802, %v714
      %v835 = vmul.f32 %v803, %v716
      %v836 = vmul.f32 %v804, %v718
      %v837 = vmul.f32 %v805, %v720
      %v838 = vmul.f32 %v806, %v722
      %v839 = vmul.f32 %v807, %v724
      %v840 = vmul.f32 %v808, %v726
      %v841 = vmul.f32 %v809, %v728
      %v842 = vmul.f32 %v810, %v730
      %v843 = vmul.f32 %v811, %v732
      %v844 = vmul.f32 %v812, %v734
      %v845 = vmul.f32 %v813, %v736
      %v846 = vmul.f32 %v814, %v738
      %v847 = vmul.f32 %v815, %v740
      %v848 = vmul.f32 %v816, %v742
      %v849 = vmul.f32 %v817, %v744
      %v850 = vmul.f32 %v818, %v746
      %v851 = vmul.f32 %v819, %v748
      %v852 = vmul.f32 %v820, %v750
      %v853 = vmul.f32 %v821, %v752
      %v854 = vmul.f32 %v822, %v754
      %v855 = vmul.f32 %v823, %v756
      %v856 = vmul.f32 %v824, %v758
      %v857 = vmul.f32 %v825, %v760
      %v858 = vmul.f32 %v826, %v762
      %v859 = vadd.f32 %v827, 1.4214138
      %v860 = vadd.f32 %v828, 1.4214138
      %v861 = vadd.f32 %v829, 1.4214138
      %v862 = vadd.f32 %v830, 1.4214138
      %v863 = vadd.f32 %v831, 1.4214138
      %v864 = vadd.f32 %v832, 1.4214138
      %v865 = vadd.f32 %v833, 1.4214138
      %v866 = vadd.f32 %v834, 1.4214138
      %v867 = vadd.f32 %v835, 1.4214138
      %v868 = vadd.f32 %v836, 1.4214138
      %v869 = vadd.f32 %v837, 1.4214138
      %v870 = vadd.f32 %v838, 1.4214138
      %v871 = vadd.f32 %v839, 1.4214138
      %v872 = vadd.f32 %v840, 1.4214138
      %v873 = vadd.f32 %v841, 1.4214138
      %v874 = vadd.f32 %v842, 1.4214138
      %v875 = vadd.f32 %v843, 1.4214138
      %v876 = vadd.f32 %v844, 1.4214138
      %v877 = vadd.f32 %v845, 1.4214138
      %v878 = vadd.f32 %v846, 1.4214138
      %v879 = vadd.f32 %v847, 1.4214138
      %v880 = vadd.f32 %v848, 1.4214138
      %v881 = vadd.f32 %v849, 1.4214138
      %v882 = vadd.f32 %v850, 1.4214138
      %v883 = vadd.f32 %v851, 1.4214138
      %v884 = vadd.f32 %v852, 1.4214138
      %v885 = vadd.f32 %v853, 1.4214138
      %v886 = vadd.f32 %v854, 1.4214138
      %v887 = vadd.f32 %v855, 1.4214138
      %v888 = vadd.f32 %v856, 1.4214138
      %v889 = vadd.f32 %v857, 1.4214138
      %v890 = vadd.f32 %v858, 1.4214138
      %v891 = vmul.f32 %v859, %v700
      %v892 = vmul.f32 %v860, %v702
      %v893 = vmul.f32 %v861, %v704
      %v894 = vmul.f32 %v862, %v706
      %v895 = vmul.f32 %v863, %v708
      %v896 = vmul.f32 %v864, %v710
      %v897 = vmul.f32 %v865, %v712
      %v898 = vmul.f32 %v866, %v714
      %v899 = vmul.f32 %v867, %v716
      %v900 = vmul.f32 %v868, %v718
      %v901 = vmul.f32 %v869, %v720
      %v902 = vmul.f32 %v870, %v722
      %v903 = vmul.f32 %v871, %v724
      %v904 = vmul.f32 %v872, %v726
      %v905 = vmul.f32 %v873, %v728
      %v906 = vmul.f32 %v874, %v730
      %v907 = vmul.f32 %v875, %v732
      %v908 = vmul.f32 %v876, %v734
      %v909 = vmul.f32 %v877, %v736
      %v910 = vmul.f32 %v878, %v738
      %v911 = vmul.f32 %v879, %v740
      %v912 = vmul.f32 %v880, %v742
      %v913 = vmul.f32 %v881, %v744
      %v914 = vmul.f32 %v882, %v746
      %v915 = vmul.f32 %v883, %v748
      %v916 = vmul.f32 %v884, %v750
      %v917 = vmul.f32 %v885, %v752
      %v918 = vmul.f32 %v886, %v754
      %v919 = vmul.f32 %v887, %v756
      %v920 = vmul.f32 %v888, %v758
      %v921 = vmul.f32 %v889, %v760
      %v922 = vmul.f32 %v890, %v762
      %v923 = vadd.f32 %v891, -0.28449672
      %v924 = vadd.f32 %v892, -0.28449672
      %v925 = vadd.f32 %v893, -0.28449672
      %v926 = vadd.f32 %v894, -0.28449672
      %v927 = vadd.f32 %v895, -0.28449672
      %v928 = vadd.f32 %v896, -0.28449672
      %v929 = vadd.f32 %v897, -0.28449672
      %v930 = vadd.f32 %v898, -0.28449672
      %v931 = vadd.f32 %v899, -0.28449672
      %v932 = vadd.f32 %v900, -0.28449672
      %v933 = vadd.f32 %v901, -0.28449672
      %v934 = vadd.f32 %v902, -0.28449672
      %v935 = vadd.f32 %v903, -0.28449672
      %v936 = vadd.f32 %v904, -0.28449672
      %v937 = vadd.f32 %v905, -0.28449672
      %v938 = vadd.f32 %v906, -0.28449672
      %v939 = vadd.f32 %v907, -0.28449672
      %v940 = vadd.f32 %v908, -0.28449672
      %v941 = vadd.f32 %v909, -0.28449672
      %v942 = vadd.f32 %v910, -0.28449672
      %v943 = vadd.f32 %v911, -0.28449672
      %v944 = vadd.f32 %v912, -0.28449672
      %v945 = vadd.f32 %v913, -0.28449672
      %v946 = vadd.f32 %v914, -0.28449672
      %v947 = vadd.f32 %v915, -0.28449672
      %v948 = vadd.f32 %v916, -0.28449672
      %v949 = vadd.f32 %v917, -0.28449672
      %v950 = vadd.f32 %v918, -0.28449672
      %v951 = vadd.f32 %v919, -0.28449672
      %v952 = vadd.f32 %v920, -0.28449672
      %v953 = vadd.f32 %v921, -0.28449672
      %v954 = vadd.f32 %v922, -0.28449672
      %v955 = vmul.f32 %v923, %v700
      %v956 = vmul.f32 %v924, %v702
      %v957 = vmul.f32 %v925, %v704
      %v958 = vmul.f32 %v926, %v706
      %v959 = vmul.f32 %v927, %v708
      %v960 = vmul.f32 %v928, %v710
      %v961 = vmul.f32 %v929, %v712
      %v962 = vmul.f32 %v930, %v714
      %v963 = vmul.f32 %v931, %v716
      %v964 = vmul.f32 %v932, %v718
      %v965 = vmul.f32 %v933, %v720
      %v966 = vmul.f32 %v934, %v722
      %v967 = vmul.f32 %v935, %v724
      %v968 = vmul.f32 %v936, %v726
      %v969 = vmul.f32 %v937, %v728
      %v970 = vmul.f32 %v938, %v730
      %v971 = vmul.f32 %v939, %v732
      %v972 = vmul.f32 %v940, %v734
      %v973 = vmul.f32 %v941, %v736
      %v974 = vmul.f32 %v942, %v738
      %v975 = vmul.f32 %v943, %v740
      %v976 = vmul.f32 %v944, %v742
      %v977 = vmul.f32 %v945, %v744
      %v978 = vmul.f32 %v946, %v746
      %v979 = vmul.f32 %v947, %v748
      %v980 = vmul.f32 %v948, %v750
      %v981 = vmul.f32 %v949, %v752
      %v982 = vmul.f32 %v950, %v754
      %v983 = vmul.f32 %v951, %v756
      %v984 = vmul.f32 %v952, %v758
      %v985 = vmul.f32 %v953, %v760
      %v986 = vmul.f32 %v954, %v762
      %v987 = vadd.f32 %v955, 0.2548296
      %v988 = vadd.f32 %v956, 0.2548296
      %v989 = vadd.f32 %v957, 0.2548296
      %v990 = vadd.f32 %v958, 0.2548296
      %v991 = vadd.f32 %v959, 0.2548296
      %v992 = vadd.f32 %v960, 0.2548296
      %v993 = vadd.f32 %v961, 0.2548296
      %v994 = vadd.f32 %v962, 0.2548296
      %v995 = vadd.f32 %v963, 0.2548296
      %v996 = vadd.f32 %v964, 0.2548296
      %v997 = vadd.f32 %v965, 0.2548296
      %v998 = vadd.f32 %v966, 0.2548296
      %v999 = vadd.f32 %v967, 0.2548296
      %v1000 = vadd.f32 %v968, 0.2548296
      %v1001 = vadd.f32 %v969, 0.2548296
      %v1002 = vadd.f32 %v970, 0.2548296
      %v1003 = vadd.f32 %v971, 0.2548296
      %v1004 = vadd.f32 %v972, 0.2548296
      %v1005 = vadd.f32 %v973, 0.2548296
      %v1006 = vadd.f32 %v974, 0.2548296
      %v1007 = vadd.f32 %v975, 0.2548296
      %v1008 = vadd.f32 %v976, 0.2548296
      %v1009 = vadd.f32 %v977, 0.2548296
      %v1010 = vadd.f32 %v978, 0.2548296
      %v1011 = vadd.f32 %v979, 0.2548296
      %v1012 = vadd.f32 %v980, 0.2548296
      %v1013 = vadd.f32 %v981, 0.2548296
      %v1014 = vadd.f32 %v982, 0.2548296
      %v1015 = vadd.f32 %v983, 0.2548296
      %v1016 = vadd.f32 %v984, 0.2548296
      %v1017 = vadd.f32 %v985, 0.2548296
      %v1018 = vadd.f32 %v986, 0.2548296
      %v1019 = vmul.f32 %v987, %v700
      %v1020 = vmul.f32 %v988, %v702
      %v1021 = vmul.f32 %v989, %v704
      %v1022 = vmul.f32 %v990, %v706
      %v1023 = vmul.f32 %v991, %v708
      %v1024 = vmul.f32 %v992, %v710
      %v1025 = vmul.f32 %v993, %v712
      %v1026 = vmul.f32 %v994, %v714
      %v1027 = vmul.f32 %v995, %v716
      %v1028 = vmul.f32 %v996, %v718
      %v1029 = vmul.f32 %v997, %v720
      %v1030 = vmul.f32 %v998, %v722
      %v1031 = vmul.f32 %v999, %v724
      %v1032 = vmul.f32 %v1000, %v726
      %v1033 = vmul.f32 %v1001, %v728
      %v1034 = vmul.f32 %v1002, %v730
      %v1035 = vmul.f32 %v1003, %v732
      %v1036 = vmul.f32 %v1004, %v734
      %v1037 = vmul.f32 %v1005, %v736
      %v1038 = vmul.f32 %v1006, %v738
      %v1039 = vmul.f32 %v1007, %v740
      %v1040 = vmul.f32 %v1008, %v742
      %v1041 = vmul.f32 %v1009, %v744
      %v1042 = vmul.f32 %v1010, %v746
      %v1043 = vmul.f32 %v1011, %v748
      %v1044 = vmul.f32 %v1012, %v750
      %v1045 = vmul.f32 %v1013, %v752
      %v1046 = vmul.f32 %v1014, %v754
      %v1047 = vmul.f32 %v1015, %v756
      %v1048 = vmul.f32 %v1016, %v758
      %v1049 = vmul.f32 %v1017, %v760
      %v1050 = vmul.f32 %v1018, %v762
      %v1051 = vsub.f32 0.0, %v603
      %v1052 = vsub.f32 0.0, %v604
      %v1053 = vsub.f32 0.0, %v605
      %v1054 = vsub.f32 0.0, %v606
      %v1055 = vsub.f32 0.0, %v607
      %v1056 = vsub.f32 0.0, %v608
      %v1057 = vsub.f32 0.0, %v609
      %v1058 = vsub.f32 0.0, %v610
      %v1059 = vsub.f32 0.0, %v611
      %v1060 = vsub.f32 0.0, %v612
      %v1061 = vsub.f32 0.0, %v613
      %v1062 = vsub.f32 0.0, %v614
      %v1063 = vsub.f32 0.0, %v615
      %v1064 = vsub.f32 0.0, %v616
      %v1065 = vsub.f32 0.0, %v617
      %v1066 = vsub.f32 0.0, %v618
      %v1067 = vsub.f32 0.0, %v619
      %v1068 = vsub.f32 0.0, %v620
      %v1069 = vsub.f32 0.0, %v621
      %v1070 = vsub.f32 0.0, %v622
      %v1071 = vsub.f32 0.0, %v623
      %v1072 = vsub.f32 0.0, %v624
      %v1073 = vsub.f32 0.0, %v625
      %v1074 = vsub.f32 0.0, %v626
      %v1075 = vsub.f32 0.0, %v627
      %v1076 = vsub.f32 0.0, %v628
      %v1077 = vsub.f32 0.0, %v629
      %v1078 = vsub.f32 0.0, %v630
      %v1079 = vsub.f32 0.0, %v631
      %v1080 = vsub.f32 0.0, %v632
      %v1081 = vsub.f32 0.0, %v633
      %v1082 = vsub.f32 0.0, %v634
      %v1083 = vmul.f32 %v1051, %v603
      %v1084 = vmul.f32 %v1052, %v604
      %v1085 = vmul.f32 %v1053, %v605
      %v1086 = vmul.f32 %v1054, %v606
      %v1087 = vmul.f32 %v1055, %v607
      %v1088 = vmul.f32 %v1056, %v608
      %v1089 = vmul.f32 %v1057, %v609
      %v1090 = vmul.f32 %v1058, %v610
      %v1091 = vmul.f32 %v1059, %v611
      %v1092 = vmul.f32 %v1060, %v612
      %v1093 = vmul.f32 %v1061, %v613
      %v1094 = vmul.f32 %v1062, %v614
      %v1095 = vmul.f32 %v1063, %v615
      %v1096 = vmul.f32 %v1064, %v616
      %v1097 = vmul.f32 %v1065, %v617
      %v1098 = vmul.f32 %v1066, %v618
      %v1099 = vmul.f32 %v1067, %v619
      %v1100 = vmul.f32 %v1068, %v620
      %v1101 = vmul.f32 %v1069, %v621
      %v1102 = vmul.f32 %v1070, %v622
      %v1103 = vmul.f32 %v1071, %v623
      %v1104 = vmul.f32 %v1072, %v624
      %v1105 = vmul.f32 %v1073, %v625
      %v1106 = vmul.f32 %v1074, %v626
      %v1107 = vmul.f32 %v1075, %v627
      %v1108 = vmul.f32 %v1076, %v628
      %v1109 = vmul.f32 %v1077, %v629
      %v1110 = vmul.f32 %v1078, %v630
      %v1111 = vmul.f32 %v1079, %v631
      %v1112 = vmul.f32 %v1080, %v632
      %v1113 = vmul.f32 %v1081, %v633
      %v1114 = vmul.f32 %v1082, %v634
      %v1115 = vmul.f32 %v1083, 1.442695
      %v1116 = vpow.pop %v1115
      %v1117 = vmul.f32 %v1084, 1.442695
      %v1118 = vpow.pop %v1117
      %v1119 = vmul.f32 %v1085, 1.442695
      %v1120 = vpow.pop %v1119
      %v1121 = vmul.f32 %v1086, 1.442695
      %v1122 = vpow.pop %v1121
      %v1123 = vmul.f32 %v1087, 1.442695
      %v1124 = vpow.pop %v1123
      %v1125 = vmul.f32 %v1088, 1.442695
      %v1126 = vpow.pop %v1125
      %v1127 = vmul.f32 %v1089, 1.442695
      %v1128 = vpow.pop %v1127
      %v1129 = vmul.f32 %v1090, 1.442695
      %v1130 = vpow.pop %v1129
      %v1131 = vmul.f32 %v1091, 1.442695
      %v1132 = vpow.pop %v1131
      %v1133 = vmul.f32 %v1092, 1.442695
      %v1134 = vpow.pop %v1133
      %v1135 = vmul.f32 %v1093, 1.442695
      %v1136 = vpow.pop %v1135
      %v1137 = vmul.f32 %v1094, 1.442695
      %v1138 = vpow.pop %v1137
      %v1139 = vmul.f32 %v1095, 1.442695
      %v1140 = vpow.pop %v1139
      %v1141 = vmul.f32 %v1096, 1.442695
      %v1142 = vpow.pop %v1141
      %v1143 = vmul.f32 %v1097, 1.442695
      %v1144 = vpow.pop %v1143
      %v1145 = vmul.f32 %v1098, 1.442695
      %v1146 = vpow.pop %v1145
      %v1147 = vmul.f32 %v1099, 1.442695
      %v1148 = vpow.pop %v1147
      %v1149 = vmul.f32 %v1100, 1.442695
      %v1150 = vpow.pop %v1149
      %v1151 = vmul.f32 %v1101, 1.442695
      %v1152 = vpow.pop %v1151
      %v1153 = vmul.f32 %v1102, 1.442695
      %v1154 = vpow.pop %v1153
      %v1155 = vmul.f32 %v1103, 1.442695
      %v1156 = vpow.pop %v1155
      %v1157 = vmul.f32 %v1104, 1.442695
      %v1158 = vpow.pop %v1157
      %v1159 = vmul.f32 %v1105, 1.442695
      %v1160 = vpow.pop %v1159
      %v1161 = vmul.f32 %v1106, 1.442695
      %v1162 = vpow.pop %v1161
      %v1163 = vmul.f32 %v1107, 1.442695
      %v1164 = vpow.pop %v1163
      %v1165 = vmul.f32 %v1108, 1.442695
      %v1166 = vpow.pop %v1165
      %v1167 = vmul.f32 %v1109, 1.442695
      %v1168 = vpow.pop %v1167
      %v1169 = vmul.f32 %v1110, 1.442695
      %v1170 = vpow.pop %v1169
      %v1171 = vmul.f32 %v1111, 1.442695
      %v1172 = vpow.pop %v1171
      %v1173 = vmul.f32 %v1112, 1.442695
      %v1174 = vpow.pop %v1173
      %v1175 = vmul.f32 %v1113, 1.442695
      %v1176 = vpow.pop %v1175
      %v1177 = vmul.f32 %v1114, 1.442695
      %v1178 = vpow.pop %v1177
      %v1179 = vmul.f32 %v1019, %v1116
      %v1180 = vmul.f32 %v1020, %v1118
      %v1181 = vmul.f32 %v1021, %v1120
      %v1182 = vmul.f32 %v1022, %v1122
      %v1183 = vmul.f32 %v1023, %v1124
      %v1184 = vmul.f32 %v1024, %v1126
      %v1185 = vmul.f32 %v1025, %v1128
      %v1186 = vmul.f32 %v1026, %v1130
      %v1187 = vmul.f32 %v1027, %v1132
      %v1188 = vmul.f32 %v1028, %v1134
      %v1189 = vmul.f32 %v1029, %v1136
      %v1190 = vmul.f32 %v1030, %v1138
      %v1191 = vmul.f32 %v1031, %v1140
      %v1192 = vmul.f32 %v1032, %v1142
      %v1193 = vmul.f32 %v1033, %v1144
      %v1194 = vmul.f32 %v1034, %v1146
      %v1195 = vmul.f32 %v1035, %v1148
      %v1196 = vmul.f32 %v1036, %v1150
      %v1197 = vmul.f32 %v1037, %v1152
      %v1198 = vmul.f32 %v1038, %v1154
      %v1199 = vmul.f32 %v1039, %v1156
      %v1200 = vmul.f32 %v1040, %v1158
      %v1201 = vmul.f32 %v1041, %v1160
      %v1202 = vmul.f32 %v1042, %v1162
      %v1203 = vmul.f32 %v1043, %v1164
      %v1204 = vmul.f32 %v1044, %v1166
      %v1205 = vmul.f32 %v1045, %v1168
      %v1206 = vmul.f32 %v1046, %v1170
      %v1207 = vmul.f32 %v1047, %v1172
      %v1208 = vmul.f32 %v1048, %v1174
      %v1209 = vmul.f32 %v1049, %v1176
      %v1210 = vmul.f32 %v1050, %v1178
      %v1211 = vsub.f32 1.0, %v1179
      %v1212 = vsub.f32 1.0, %v1180
      %v1213 = vsub.f32 1.0, %v1181
      %v1214 = vsub.f32 1.0, %v1182
      %v1215 = vsub.f32 1.0, %v1183
      %v1216 = vsub.f32 1.0, %v1184
      %v1217 = vsub.f32 1.0, %v1185
      %v1218 = vsub.f32 1.0, %v1186
      %v1219 = vsub.f32 1.0, %v1187
      %v1220 = vsub.f32 1.0, %v1188
      %v1221 = vsub.f32 1.0, %v1189
      %v1222 = vsub.f32 1.0, %v1190
      %v1223 = vsub.f32 1.0, %v1191
      %v1224 = vsub.f32 1.0, %v1192
      %v1225 = vsub.f32 1.0, %v1193
      %v1226 = vsub.f32 1.0, %v1194
      %v1227 = vsub.f32 1.0, %v1195
      %v1228 = vsub.f32 1.0, %v1196
      %v1229 = vsub.f32 1.0, %v1197
      %v1230 = vsub.f32 1.0, %v1198
      %v1231 = vsub.f32 1.0, %v1199
      %v1232 = vsub.f32 1.0, %v1200
      %v1233 = vsub.f32 1.0, %v1201
      %v1234 = vsub.f32 1.0, %v1202
      %v1235 = vsub.f32 1.0, %v1203
      %v1236 = vsub.f32 1.0, %v1204
      %v1237 = vsub.f32 1.0, %v1205
      %v1238 = vsub.f32 1.0, %v1206
      %v1239 = vsub.f32 1.0, %v1207
      %v1240 = vsub.f32 1.0, %v1208
      %v1241 = vsub.f32 1.0, %v1209
      %v1242 = vsub.f32 1.0, %v1210
      %vm1243 = vcmp.ge.f32.partialorder %v571, 0.0
      %vm1244 = vcmp.ge.f32.partialorder %v572, 0.0
      %vm1245 = vcmp.ge.f32.partialorder %v573, 0.0
      %vm1246 = vcmp.ge.f32.partialorder %v574, 0.0
      %vm1247 = vcmp.ge.f32.partialorder %v575, 0.0
      %vm1248 = vcmp.ge.f32.partialorder %v576, 0.0
      %vm1249 = vcmp.ge.f32.partialorder %v577, 0.0
      %vm1250 = vcmp.ge.f32.partialorder %v578, 0.0
      %vm1251 = vcmp.ge.f32.partialorder %v579, 0.0
      %vm1252 = vcmp.ge.f32.partialorder %v580, 0.0
      %vm1253 = vcmp.ge.f32.partialorder %v581, 0.0
      %vm1254 = vcmp.ge.f32.partialorder %v582, 0.0
      %vm1255 = vcmp.ge.f32.partialorder %v583, 0.0
      %vm1256 = vcmp.ge.f32.partialorder %v584, 0.0
      %vm1257 = vcmp.ge.f32.partialorder %v585, 0.0
      %vm1258 = vcmp.ge.f32.partialorder %v586, 0.0
      %vm1259 = vcmp.ge.f32.partialorder %v587, 0.0
      %vm1260 = vcmp.ge.f32.partialorder %v588, 0.0
      %vm1261 = vcmp.ge.f32.partialorder %v589, 0.0
      %vm1262 = vcmp.ge.f32.partialorder %v590, 0.0
      %vm1263 = vcmp.ge.f32.partialorder %v591, 0.0
      %vm1264 = vcmp.ge.f32.partialorder %v592, 0.0
      %vm1265 = vcmp.ge.f32.partialorder %v593, 0.0
      %vm1266 = vcmp.ge.f32.partialorder %v594, 0.0
      %vm1267 = vcmp.ge.f32.partialorder %v595, 0.0
      %vm1268 = vcmp.ge.f32.partialorder %v596, 0.0
      %vm1269 = vcmp.ge.f32.partialorder %v597, 0.0
      %vm1270 = vcmp.ge.f32.partialorder %v598, 0.0
      %vm1271 = vcmp.ge.f32.partialorder %v599, 0.0
      %vm1272 = vcmp.ge.f32.partialorder %v600, 0.0
      %vm1273 = vcmp.ge.f32.partialorder %v601, 0.0
      %vm1274 = vcmp.ge.f32.partialorder %v602, 0.0
      %v1275 = vsub.f32 0.0, %v1211
      %v1276 = vsub.f32 0.0, %v1212
      %v1277 = vsub.f32 0.0, %v1213
      %v1278 = vsub.f32 0.0, %v1214
      %v1279 = vsub.f32 0.0, %v1215
      %v1280 = vsub.f32 0.0, %v1216
      %v1281 = vsub.f32 0.0, %v1217
      %v1282 = vsub.f32 0.0, %v1218
      %v1283 = vsub.f32 0.0, %v1219
      %v1284 = vsub.f32 0.0, %v1220
      %v1285 = vsub.f32 0.0, %v1221
      %v1286 = vsub.f32 0.0, %v1222
      %v1287 = vsub.f32 0.0, %v1223
      %v1288 = vsub.f32 0.0, %v1224
      %v1289 = vsub.f32 0.0, %v1225
      %v1290 = vsub.f32 0.0, %v1226
      %v1291 = vsub.f32 0.0, %v1227
      %v1292 = vsub.f32 0.0, %v1228
      %v1293 = vsub.f32 0.0, %v1229
      %v1294 = vsub.f32 0.0, %v1230
      %v1295 = vsub.f32 0.0, %v1231
      %v1296 = vsub.f32 0.0, %v1232
      %v1297 = vsub.f32 0.0, %v1233
      %v1298 = vsub.f32 0.0, %v1234
      %v1299 = vsub.f32 0.0, %v1235
      %v1300 = vsub.f32 0.0, %v1236
      %v1301 = vsub.f32 0.0, %v1237
      %v1302 = vsub.f32 0.0, %v1238
      %v1303 = vsub.f32 0.0, %v1239
      %v1304 = vsub.f32 0.0, %v1240
      %v1305 = vsub.f32 0.0, %v1241
      %v1306 = vsub.f32 0.0, %v1242
      %v1307 = vsel %vm1243, %v1211, %v1275
      %v1308 = vsel %vm1244, %v1212, %v1276
      %v1309 = vsel %vm1245, %v1213, %v1277
      %v1310 = vsel %vm1246, %v1214, %v1278
      %v1311 = vsel %vm1247, %v1215, %v1279
      %v1312 = vsel %vm1248, %v1216, %v1280
      %v1313 = vsel %vm1249, %v1217, %v1281
      %v1314 = vsel %vm1250, %v1218, %v1282
      %v1315 = vsel %vm1251, %v1219, %v1283
      %v1316 = vsel %vm1252, %v1220, %v1284
      %v1317 = vsel %vm1253, %v1221, %v1285
      %v1318 = vsel %vm1254, %v1222, %v1286
      %v1319 = vsel %vm1255, %v1223, %v1287
      %v1320 = vsel %vm1256, %v1224, %v1288
      %v1321 = vsel %vm1257, %v1225, %v1289
      %v1322 = vsel %vm1258, %v1226, %v1290
      %v1323 = vsel %vm1259, %v1227, %v1291
      %v1324 = vsel %vm1260, %v1228, %v1292
      %v1325 = vsel %vm1261, %v1229, %v1293
      %v1326 = vsel %vm1262, %v1230, %v1294
      %v1327 = vsel %vm1263, %v1231, %v1295
      %v1328 = vsel %vm1264, %v1232, %v1296
      %v1329 = vsel %vm1265, %v1233, %v1297
      %v1330 = vsel %vm1266, %v1234, %v1298
      %v1331 = vsel %vm1267, %v1235, %v1299
      %v1332 = vsel %vm1268, %v1236, %v1300
      %v1333 = vsel %vm1269, %v1237, %v1301
      %v1334 = vsel %vm1270, %v1238, %v1302
      %v1335 = vsel %vm1271, %v1239, %v1303
      %v1336 = vsel %vm1272, %v1240, %v1304
      %v1337 = vsel %vm1273, %v1241, %v1305
      %v1338 = vsel %vm1274, %v1242, %v1306
      %v1339 = vmul.f32 %v445, 0.5
      %v1340 = vmul.f32 %v448, 0.5
      %v1341 = vmul.f32 %v453, 0.5
      %v1342 = vmul.f32 %v456, 0.5
      %v1343 = vmul.f32 %v461, 0.5
      %v1344 = vmul.f32 %v464, 0.5
      %v1345 = vmul.f32 %v469, 0.5
      %v1346 = vmul.f32 %v472, 0.5
      %v1347 = vmul.f32 %v477, 0.5
      %v1348 = vmul.f32 %v480, 0.5
      %v1349 = vmul.f32 %v485, 0.5
      %v1350 = vmul.f32 %v488, 0.5
      %v1351 = vmul.f32 %v493, 0.5
      %v1352 = vmul.f32 %v496, 0.5
      %v1353 = vmul.f32 %v501, 0.5
      %v1354 = vmul.f32 %v504, 0.5
      %v1355 = vmul.f32 %v509, 0.5
      %v1356 = vmul.f32 %v512, 0.5
      %v1357 = vmul.f32 %v517, 0.5
      %v1358 = vmul.f32 %v520, 0.5
      %v1359 = vmul.f32 %v525, 0.5
      %v1360 = vmul.f32 %v528, 0.5
      %v1361 = vmul.f32 %v533, 0.5
      %v1362 = vmul.f32 %v536, 0.5
      %v1363 = vmul.f32 %v541, 0.5
      %v1364 = vmul.f32 %v544, 0.5
      %v1365 = vmul.f32 %v549, 0.5
      %v1366 = vmul.f32 %v552, 0.5
      %v1367 = vmul.f32 %v557, 0.5
      %v1368 = vmul.f32 %v560, 0.5
      %v1369 = vmul.f32 %v565, 0.5
      %v1370 = vmul.f32 %v568, 0.5
      %v1371 = vadd.f32 %v1307, 1.0
      %v1372 = vadd.f32 %v1308, 1.0
      %v1373 = vadd.f32 %v1309, 1.0
      %v1374 = vadd.f32 %v1310, 1.0
      %v1375 = vadd.f32 %v1311, 1.0
      %v1376 = vadd.f32 %v1312, 1.0
      %v1377 = vadd.f32 %v1313, 1.0
      %v1378 = vadd.f32 %v1314, 1.0
      %v1379 = vadd.f32 %v1315, 1.0
      %v1380 = vadd.f32 %v1316, 1.0
      %v1381 = vadd.f32 %v1317, 1.0
      %v1382 = vadd.f32 %v1318, 1.0
      %v1383 = vadd.f32 %v1319, 1.0
      %v1384 = vadd.f32 %v1320, 1.0
      %v1385 = vadd.f32 %v1321, 1.0
      %v1386 = vadd.f32 %v1322, 1.0
      %v1387 = vadd.f32 %v1323, 1.0
      %v1388 = vadd.f32 %v1324, 1.0
      %v1389 = vadd.f32 %v1325, 1.0
      %v1390 = vadd.f32 %v1326, 1.0
      %v1391 = vadd.f32 %v1327, 1.0
      %v1392 = vadd.f32 %v1328, 1.0
      %v1393 = vadd.f32 %v1329, 1.0
      %v1394 = vadd.f32 %v1330, 1.0
      %v1395 = vadd.f32 %v1331, 1.0
      %v1396 = vadd.f32 %v1332, 1.0
      %v1397 = vadd.f32 %v1333, 1.0
      %v1398 = vadd.f32 %v1334, 1.0
      %v1399 = vadd.f32 %v1335, 1.0
      %v1400 = vadd.f32 %v1336, 1.0
      %v1401 = vadd.f32 %v1337, 1.0
      %v1402 = vadd.f32 %v1338, 1.0
      %v1403 = vmul.f32 %v1339, %v1371
      %v1404 = vmul.f32 %v1340, %v1372
      %v1405 = vmul.f32 %v1341, %v1373
      %v1406 = vmul.f32 %v1342, %v1374
      %v1407 = vmul.f32 %v1343, %v1375
      %v1408 = vmul.f32 %v1344, %v1376
      %v1409 = vmul.f32 %v1345, %v1377
      %v1410 = vmul.f32 %v1346, %v1378
      %v1411 = vmul.f32 %v1347, %v1379
      %v1412 = vmul.f32 %v1348, %v1380
      %v1413 = vmul.f32 %v1349, %v1381
      %v1414 = vmul.f32 %v1350, %v1382
      %v1415 = vmul.f32 %v1351, %v1383
      %v1416 = vmul.f32 %v1352, %v1384
      %v1417 = vmul.f32 %v1353, %v1385
      %v1418 = vmul.f32 %v1354, %v1386
      %v1419 = vmul.f32 %v1355, %v1387
      %v1420 = vmul.f32 %v1356, %v1388
      %v1421 = vmul.f32 %v1357, %v1389
      %v1422 = vmul.f32 %v1358, %v1390
      %v1423 = vmul.f32 %v1359, %v1391
      %v1424 = vmul.f32 %v1360, %v1392
      %v1425 = vmul.f32 %v1361, %v1393
      %v1426 = vmul.f32 %v1362, %v1394
      %v1427 = vmul.f32 %v1363, %v1395
      %v1428 = vmul.f32 %v1364, %v1396
      %v1429 = vmul.f32 %v1365, %v1397
      %v1430 = vmul.f32 %v1366, %v1398
      %v1431 = vmul.f32 %v1367, %v1399
      %v1432 = vmul.f32 %v1368, %v1400
      %v1433 = vmul.f32 %v1369, %v1401
      %v1434 = vmul.f32 %v1370, %v1402
      %v1435 = vpack.c.bf16 %v1404, %v1403
      %v1436 = vpack.c.bf16 %v1406, %v1405
      %v1437 = vpack.c.bf16 %v1408, %v1407
      %v1438 = vpack.c.bf16 %v1410, %v1409
      %v1439 = vpack.c.bf16 %v1412, %v1411
      %v1440 = vpack.c.bf16 %v1414, %v1413
      %v1441 = vpack.c.bf16 %v1416, %v1415
      %v1442 = vpack.c.bf16 %v1418, %v1417
      %v1443 = vpack.c.bf16 %v1420, %v1419
      %v1444 = vpack.c.bf16 %v1422, %v1421
      %v1445 = vpack.c.bf16 %v1424, %v1423
      %v1446 = vpack.c.bf16 %v1426, %v1425
      %v1447 = vpack.c.bf16 %v1428, %v1427
      %v1448 = vpack.c.bf16 %v1430, %v1429
      %v1449 = vpack.c.bf16 %v1432, %v1431
      %v1450 = vpack.c.bf16 %v1434, %v1433
      %v1467 = vunpack.c.l.b16 %v1435
      %v1468 = vunpack.c.h.b16 %v1435
      %v1469 = vunpack.c.l.b16 %v1436
      %v1470 = vunpack.c.h.b16 %v1436
      %v1471 = vunpack.c.l.b16 %v1437
      %v1472 = vunpack.c.h.b16 %v1437
      %v1473 = vunpack.c.l.b16 %v1438
      %v1474 = vunpack.c.h.b16 %v1438
      %v1475 = vunpack.c.l.b16 %v1439
      %v1476 = vunpack.c.h.b16 %v1439
      %v1477 = vunpack.c.l.b16 %v1440
      %v1478 = vunpack.c.h.b16 %v1440
      %v1479 = vunpack.c.l.b16 %v1441
      %v1480 = vunpack.c.h.b16 %v1441
      %v1481 = vunpack.c.l.b16 %v1442
      %v1482 = vunpack.c.h.b16 %v1442
      %v1483 = vunpack.c.l.b16 %v1443
      %v1484 = vunpack.c.h.b16 %v1443
      %v1485 = vunpack.c.l.b16 %v1444
      %v1486 = vunpack.c.h.b16 %v1444
      %v1487 = vunpack.c.l.b16 %v1445
      %v1488 = vunpack.c.h.b16 %v1445
      %v1489 = vunpack.c.l.b16 %v1446
      %v1490 = vunpack.c.h.b16 %v1446
      %v1491 = vunpack.c.l.b16 %v1447
      %v1492 = vunpack.c.h.b16 %v1447
      %v1493 = vunpack.c.l.b16 %v1448
      %v1494 = vunpack.c.h.b16 %v1448
      %v1495 = vunpack.c.l.b16 %v1449
      %v1496 = vunpack.c.h.b16 %v1449
      %v1497 = vunpack.c.l.b16 %v1450
      %v1498 = vunpack.c.h.b16 %v1450
      %v1499 = vpack.c.b16 %v1467, %v1467
      %v1500 = vpack.c.b16 %v1468, %v1468
      %v1501 = vpack.c.b16 %v1469, %v1469
      %v1502 = vpack.c.b16 %v1470, %v1470
      %v1503 = vpack.c.b16 %v1471, %v1471
      %v1504 = vpack.c.b16 %v1472, %v1472
      %v1505 = vpack.c.b16 %v1473, %v1473
      %v1506 = vpack.c.b16 %v1474, %v1474
      %v1507 = vpack.c.b16 %v1475, %v1475
      %v1508 = vpack.c.b16 %v1476, %v1476
      %v1509 = vpack.c.b16 %v1477, %v1477
      %v1510 = vpack.c.b16 %v1478, %v1478
      %v1511 = vpack.c.b16 %v1479, %v1479
      %v1512 = vpack.c.b16 %v1480, %v1480
      %v1513 = vpack.c.b16 %v1481, %v1481
      %v1514 = vpack.c.b16 %v1482, %v1482
      %v1515 = vpack.c.b16 %v1483, %v1483
      %v1516 = vpack.c.b16 %v1484, %v1484
      %v1517 = vpack.c.b16 %v1485, %v1485
      %v1518 = vpack.c.b16 %v1486, %v1486
      %v1519 = vpack.c.b16 %v1487, %v1487
      %v1520 = vpack.c.b16 %v1488, %v1488
      %v1521 = vpack.c.b16 %v1489, %v1489
      %v1522 = vpack.c.b16 %v1490, %v1490
      %v1523 = vpack.c.b16 %v1491, %v1491
      %v1524 = vpack.c.b16 %v1492, %v1492
      %v1525 = vpack.c.b16 %v1493, %v1493
      %v1526 = vpack.c.b16 %v1494, %v1494
      %v1527 = vpack.c.b16 %v1495, %v1495
      %v1528 = vpack.c.b16 %v1496, %v1496
      %v1529 = vpack.c.b16 %v1497, %v1497
      %v1530 = vpack.c.b16 %v1498, %v1498
      %vm1563 = vcmask 519168
      %1564 = vst.msk [vmem:[%s223] sm:$0xf] %vm1563, %v1499
      %1565 = vst.msk [vmem:[%s223 + $0x4] sm:$0xf] %vm1563, %v1500
      %1566 = vst.msk [vmem:[%s223 + $0x8] sm:$0xf] %vm1563, %v1501
      %1567 = vst.msk [vmem:[%s223 + $0xc] sm:$0xf] %vm1563, %v1502
      %1568 = vst.msk [vmem:[%s223 + $0x10] sm:$0xf] %vm1563, %v1503
      %1569 = vst.msk [vmem:[%s223 + $0x14] sm:$0xf] %vm1563, %v1504
      %1570 = vst.msk [vmem:[%s223 + $0x18] sm:$0xf] %vm1563, %v1505
      %1571 = vst.msk [vmem:[%s223 + $0x1c] sm:$0xf] %vm1563, %v1506
      %1572 = vst.msk [vmem:[%s223 + $0x20] sm:$0xf] %vm1563, %v1507
      %1573 = vst.msk [vmem:[%s223 + $0x24] sm:$0xf] %vm1563, %v1508
      %1574 = vst.msk [vmem:[%s223 + $0x28] sm:$0xf] %vm1563, %v1509
      %1575 = vst.msk [vmem:[%s223 + $0x2c] sm:$0xf] %vm1563, %v1510
      %1576 = vst.msk [vmem:[%s223 + $0x30] sm:$0xf] %vm1563, %v1511
      %1577 = vst.msk [vmem:[%s223 + $0x34] sm:$0xf] %vm1563, %v1512
      %1578 = vst.msk [vmem:[%s223 + $0x38] sm:$0xf] %vm1563, %v1513
      %1579 = vst.msk [vmem:[%s223 + $0x3c] sm:$0xf] %vm1563, %v1514
      %1580 = vst.msk [vmem:[%s223 + $0x40] sm:$0xf] %vm1563, %v1515
      %1581 = vst.msk [vmem:[%s223 + $0x44] sm:$0xf] %vm1563, %v1516
      %1582 = vst.msk [vmem:[%s223 + $0x48] sm:$0xf] %vm1563, %v1517
      %1583 = vst.msk [vmem:[%s223 + $0x4c] sm:$0xf] %vm1563, %v1518
      %1584 = vst.msk [vmem:[%s223 + $0x50] sm:$0xf] %vm1563, %v1519
      %1585 = vst.msk [vmem:[%s223 + $0x54] sm:$0xf] %vm1563, %v1520
      %1586 = vst.msk [vmem:[%s223 + $0x58] sm:$0xf] %vm1563, %v1521
      %1587 = vst.msk [vmem:[%s223 + $0x5c] sm:$0xf] %vm1563, %v1522
      %1588 = vst.msk [vmem:[%s223 + $0x60] sm:$0xf] %vm1563, %v1523
      %1589 = vst.msk [vmem:[%s223 + $0x64] sm:$0xf] %vm1563, %v1524
      %1590 = vst.msk [vmem:[%s223 + $0x68] sm:$0xf] %vm1563, %v1525
      %1591 = vst.msk [vmem:[%s223 + $0x6c] sm:$0xf] %vm1563, %v1526
      %1592 = vst.msk [vmem:[%s223 + $0x70] sm:$0xf] %vm1563, %v1527
      %1593 = vst.msk [vmem:[%s223 + $0x74] sm:$0xf] %vm1563, %v1528
      %1594 = vst.msk [vmem:[%s223 + $0x78] sm:$0xf] %vm1563, %v1529
      %1595 = vst.msk [vmem:[%s223 + $0x7c] sm:$0xf] %vm1563, %v1530
      %s1596 = smul.u32 32, %s18
      %p1597 = scmp.lt.s32.totalorder %s1596, 63
      %s1598 = scalar_select %p1597, %s1596, 63
      %p1599 = scmp.lt.s32.totalorder %s19, 0
      %s1600 = scalar_select %p1599, %s19, 0
      %s1601 = sadd.s32 %s1600, %s1598
      %s1602 = smul.addr %s1601, 4
      %s1603 = scalar_lea.vmem %s3, %s1602
      // Predicated region
      $region33: #{ldp_projector.2} parent=31 // pred_check
        %p1604 = pneg %p124
      $region34: #{ldp_projector.2} parent=31 // pred_check_branch
        %1606 = sbr.rel (%p1604) target = $region36
      $region35: #{ldp_projector.2} parent=31 // pred_region
        %s1607 = smul.u32 32, %s18
      $region36: #{ldp_projector.2} parent=31 // pred_fallthru
        _
    $region32: #{ldp_projector.2} parent=5 // pred_fallthru
      _
    %p1608 = scmp.le.s32.totalorder 2, %s9
    // Predicated region
    $region37: #{ldp_projector.2} parent=5 // pred_check
      %p1609 = pneg %p1608
    $region38: #{ldp_projector.2} parent=5 // pred_check_branch
      %1611 = sbr.rel (%p1609) target = $region40
    $region39: #{ldp_projector.2} parent=5 // pred_region
      %s1612 = ssub.s32 %s9, 2
      // Predicated region
      $region41: #{ldp_projector.2} parent=39 // pred_check
        %p1613 = pneg %p130
      $region42: #{ldp_projector.2} parent=39 // pred_check_branch
        %1615 = sbr.rel (%p1613) target = $region44
      $region43: #{ldp_projector.2} parent=39 // pred_region
        %s1616 = smul.u32 32, %s20
        %p1617 = scmp.lt.s32.totalorder %s1616, 63
        %s1618 = scalar_select %p1617, %s1616, 63
        %p1619 = scmp.lt.s32.totalorder %s21, 0
        %s1620 = scalar_select %p1619, %s21, 0
        %s1621 = sadd.s32 %s1620, %s1618
        %s1622 = smul.addr %s1621, 4
        %s1623 = scalar_lea.vmem %s3, %s1622
      $region44: #{ldp_projector.2} parent=39 // pred_fallthru
        _
    $region40: #{ldp_projector.2} parent=5 // pred_fallthru
      _
  $region6: #{ldp_projector.2} parent=0 // loop_footer
    %s13 = sadd.s32 1, %s9
  $region7: #{ldp_projector.2} parent=0 // loop_footer_branch
    %8 = sbr.rel target = $region3
  $region8: #{ldp_projector.2} parent=0 // loop_exit
    _

// kernel: ldp_projector.3
$region0: #{ldp_projector.3}
  #allocation0 [shape = 'u32[]', space=smem, size = 0x4, offset = 0x4, fixed_abs, tag = 'smem constant byte address 0x4 - core index']
  #allocation1 [shape = 'u32[144,128]{1,0:T(1,128)}', space=vmem, size = 0x12000, scoped, tag = 'internal scratch']
  #allocation2 [shape = 'f32[256,64]{1,0:T(8,128)}', space=vmem, size = 0x20000, scoped, tag = 'scratch operand']
  #allocation3 [shape = 'f32[16,16,64]{2,1,0:T(8,128)}', space=vmem, size = 0x20000, scoped, tag = 'scratch operand']
  %s0 = inlined_call_operand.vmem [shape: bf16[512,64], index: 0, kind: input, shape index: {}]
  %s1 = inlined_call_operand.vmem [shape: bf16[64,64], index: 1, kind: input, shape index: {}]
  %s2 = inlined_call_operand.vmem [shape: f32[1,64], index: 2, kind: input, shape index: {}]
  %s3 = inlined_call_operand.vmem [shape: bf16[256,256], index: 3, kind: input, shape index: {}]
  %s4 = inlined_call_operand.vmem [shape: f32[3,3,64], index: 4, kind: input, shape index: {}]
  %s5 = inlined_call_operand.vmem [shape: f32[1,64], index: 5, kind: input, shape index: {}]
  %s6 = inlined_call_operand.vmem [shape: f32[2,14,14,64], index: 6, kind: output, shape index: {}]
  %s7 = sld [smem:[#allocation0]]
  $region65: #{ldp_projector.3} parent=0
    _
  %s9 = ssub.s32 1, %s7
  %s10 = scalar_select 0, %s9, %s7
  loop: start=0, step=1, limit=4
  $region2: #{ldp_projector.3} parent=0 // loop_pre_header
    _
  $region3: #{ldp_projector.3} parent=0 // loop_header
    %s12 = sphi 0, %s16
    %p13 = scmp.ge.s32.totalorder %s12, 4
    %s19 = sphi 0, %s38
    %s20 = sphi 0, %s34
    %s21 = sphi 0, %s30
    %s22 = sphi 0, %s19
    %s23 = sphi 0, %s20
    %s24 = sphi 0, %s21
    %s25 = sphi 0, %s22
    %s26 = sphi 0, %s23
    %s27 = sphi 0, %s24
    %s43 = sphi 0, %s45
    %s46 = sphi 0, %s43
    %s47 = sphi 0, %s46
    %s63 = sphi 0, %s47
    %s71 = sphi 0, %s73
    %s74 = sphi 0, %s71
    %s75 = sphi 0, %s74
    %s91 = sphi 0, %s75
    %s97 = sphi 0, %s99
    %s100 = sphi 0, %s97
    %s101 = sphi 0, %s100
    %s117 = sphi 0, %s101
    %s121 = sphi 0, %s121
    %s123 = sphi 0, %s121
    %s124 = sphi 0, %s123
    %s138 = sphi 0, %s124
    %s144 = sphi 0, %s146
    %s147 = sphi 0, %s144
    %s148 = sphi 0, %s147
    %s164 = sphi 0, %s148
    %s170 = sphi 0, %s172
    %s173 = sphi 0, %s170
    %s174 = sphi 0, %s173
    %s190 = sphi 0, %s174
    %s198 = sphi 0, %s200
    %s201 = sphi 0, %s198
    %s202 = sphi 0, %s201
    %s218 = sphi 0, %s202
  $region4: #{ldp_projector.3} parent=0 // loop_header_branch
    %15 = sbr.rel (%p13) target = $region8
  $region5: #{ldp_projector.3} parent=0 // loop_body
    %s17 = ssub.s32 %s12, 1
    %s18 = ssub.s32 %s12, 2
    %s28 = sadd.s32 1, %s21
    %p29 = scmp.ge.s32.totalorder %s28, 1
    %s30 = scalar_select %p29, 0, %s28
    %s31 = sadd.s32 1, %s20
    %s32 = scalar_select %p29, %s31, %s20
    %p33 = scmp.ge.s32.totalorder %s32, 1
    %s34 = scalar_select %p33, 0, %s32
    %s35 = sadd.s32 1, %s19
    %s36 = scalar_select %p33, %s35, %s19
    %p37 = scmp.ge.s32.totalorder %s36, 2
    %s38 = scalar_select %p37, 0, %s36
    %s39 = ssub.s32 %s19, %s38
    %s40 = ssub.s32 %s21, %s30
    %s41 = sor.u32 %s39, %s40
    %p42 = scmp.eq.s32.totalorder %s41, 0
    %s44 = sadd.s32 %s43, 1
    %s45 = scalar_select %p42, %s43, %s44
    %p48 = pneg %p42
    %p49 = scmp.eq.s32.totalorder %s12, 1
    %p50 = por %p48, %p49
    %p51 = scmp.ne.s32.totalorder %s43, %s46
    %p52 = scmp.eq.s32.totalorder %s12, 0
    %p53 = por %p51, %p52
    %p54 = scmp.ne.s32.totalorder %s43, %s46
    %p55 = scmp.eq.s32.totalorder %s17, 1
    %p56 = por %p54, %p55
    %p57 = scmp.ne.s32.totalorder %s46, %s47
    %p58 = scmp.eq.s32.totalorder %s17, 0
    %p59 = por %p57, %p58
    %p60 = scmp.ne.s32.totalorder %s46, %s47
    %p61 = scmp.eq.s32.totalorder %s18, 1
    %p62 = por %p60, %p61
    %p64 = scmp.ne.s32.totalorder %s47, %s63
    %p65 = scmp.eq.s32.totalorder %s18, 0
    %p66 = por %p64, %p65
    %s67 = ssub.s32 %s21, %s30
    %s68 = ssub.s32 %s20, %s34
    %s69 = sor.u32 %s67, %s68
    %p70 = scmp.eq.s32.totalorder %s69, 0
    %s72 = sadd.s32 %s71, 1
    %s73 = scalar_select %p70, %s71, %s72
    %p76 = pneg %p70
    %p77 = scmp.eq.s32.totalorder %s12, 1
    %p78 = por %p76, %p77
    %p79 = scmp.ne.s32.totalorder %s71, %s74
    %p80 = scmp.eq.s32.totalorder %s12, 0
    %p81 = por %p79, %p80
    %p82 = scmp.ne.s32.totalorder %s71, %s74
    %p83 = scmp.eq.s32.totalorder %s17, 1
    %p84 = por %p82, %p83
    %p85 = scmp.ne.s32.totalorder %s74, %s75
    %p86 = scmp.eq.s32.totalorder %s17, 0
    %p87 = por %p85, %p86
    %p88 = scmp.ne.s32.totalorder %s74, %s75
    %p89 = scmp.eq.s32.totalorder %s18, 1
    %p90 = por %p88, %p89
    %p92 = scmp.ne.s32.totalorder %s75, %s91
    %p93 = scmp.eq.s32.totalorder %s18, 0
    %p94 = por %p92, %p93
    %s95 = ssub.s32 %s20, %s34
    %p96 = scmp.eq.s32.totalorder %s95, 0
    %s98 = sadd.s32 %s97, 1
    %s99 = scalar_select %p96, %s97, %s98
    %p102 = pneg %p96
    %p103 = scmp.eq.s32.totalorder %s12, 1
    %p104 = por %p102, %p103
    %p105 = scmp.ne.s32.totalorder %s97, %s100
    %p106 = scmp.eq.s32.totalorder %s12, 0
    %p107 = por %p105, %p106
    %p108 = scmp.ne.s32.totalorder %s97, %s100
    %p109 = scmp.eq.s32.totalorder %s17, 1
    %p110 = por %p108, %p109
    %p111 = scmp.ne.s32.totalorder %s100, %s101
    %p112 = scmp.eq.s32.totalorder %s17, 0
    %p113 = por %p111, %p112
    %p114 = scmp.ne.s32.totalorder %s100, %s101
    %p115 = scmp.eq.s32.totalorder %s18, 1
    %p116 = por %p114, %p115
    %p118 = scmp.ne.s32.totalorder %s101, %s117
    %p119 = scmp.eq.s32.totalorder %s18, 0
    %p120 = por %p118, %p119
    %s122 = sadd.s32 %s121, 1
    %p125 = scmp.eq.s32.totalorder %s12, 1
    %p126 = scmp.ne.s32.totalorder %s121, %s123
    %p127 = scmp.eq.s32.totalorder %s12, 0
    %p128 = por %p126, %p127
    %p129 = scmp.ne.s32.totalorder %s121, %s123
    %p130 = scmp.eq.s32.totalorder %s17, 1
    %p131 = por %p129, %p130
    %p132 = scmp.ne.s32.totalorder %s123, %s124
    %p133 = scmp.eq.s32.totalorder %s17, 0
    %p134 = por %p132, %p133
    %p135 = scmp.ne.s32.totalorder %s123, %s124
    %p136 = scmp.eq.s32.totalorder %s18, 1
    %p137 = por %p135, %p136
    %p139 = scmp.ne.s32.totalorder %s124, %s138
    %p140 = scmp.eq.s32.totalorder %s18, 0
    %p141 = por %p139, %p140
    %s142 = ssub.s32 %s20, %s34
    %p143 = scmp.eq.s32.totalorder %s142, 0
    %s145 = sadd.s32 %s144, 1
    %s146 = scalar_select %p143, %s144, %s145
    %p149 = pneg %p143
    %p150 = scmp.eq.s32.totalorder %s12, 1
    %p151 = por %p149, %p150
    %p152 = scmp.ne.s32.totalorder %s144, %s147
    %p153 = scmp.eq.s32.totalorder %s12, 0
    %p154 = por %p152, %p153
    %p155 = scmp.ne.s32.totalorder %s144, %s147
    %p156 = scmp.eq.s32.totalorder %s17, 1
    %p157 = por %p155, %p156
    %p158 = scmp.ne.s32.totalorder %s147, %s148
    %p159 = scmp.eq.s32.totalorder %s17, 0
    %p160 = por %p158, %p159
    %p161 = scmp.ne.s32.totalorder %s147, %s148
    %p162 = scmp.eq.s32.totalorder %s18, 1
    %p163 = por %p161, %p162
    %p165 = scmp.ne.s32.totalorder %s148, %s164
    %p166 = scmp.eq.s32.totalorder %s18, 0
    %p167 = por %p165, %p166
    %s168 = ssub.s32 %s20, %s34
    %p169 = scmp.eq.s32.totalorder %s168, 0
    %s171 = sadd.s32 %s170, 1
    %s172 = scalar_select %p169, %s170, %s171
    %p175 = pneg %p169
    %p176 = scmp.eq.s32.totalorder %s12, 1
    %p177 = por %p175, %p176
    %p178 = scmp.ne.s32.totalorder %s170, %s173
    %p179 = scmp.eq.s32.totalorder %s12, 0
    %p180 = por %p178, %p179
    %p181 = scmp.ne.s32.totalorder %s170, %s173
    %p182 = scmp.eq.s32.totalorder %s17, 1
    %p183 = por %p181, %p182
    %p184 = scmp.ne.s32.totalorder %s173, %s174
    %p185 = scmp.eq.s32.totalorder %s17, 0
    %p186 = por %p184, %p185
    %p187 = scmp.ne.s32.totalorder %s173, %s174
    %p188 = scmp.eq.s32.totalorder %s18, 1
    %p189 = por %p187, %p188
    %p191 = scmp.ne.s32.totalorder %s174, %s190
    %p192 = scmp.eq.s32.totalorder %s18, 0
    %p193 = por %p191, %p192
    %s194 = ssub.s32 %s19, %s38
    %s195 = ssub.s32 %s20, %s34
    %s196 = sor.u32 %s194, %s195
    %p197 = scmp.eq.s32.totalorder %s196, 0
    %s199 = sadd.s32 %s198, 1
    %s200 = scalar_select %p197, %s198, %s199
    %p203 = pneg %p197
    %p204 = scmp.eq.s32.totalorder %s12, 1
    %p205 = por %p203, %p204
    %p206 = scmp.ne.s32.totalorder %s198, %s201
    %p207 = scmp.eq.s32.totalorder %s12, 0
    %p208 = por %p206, %p207
    %p209 = scmp.ne.s32.totalorder %s198, %s201
    %p210 = scmp.eq.s32.totalorder %s17, 1
    %p211 = por %p209, %p210
    %p212 = scmp.ne.s32.totalorder %s201, %s202
    %p213 = scmp.eq.s32.totalorder %s17, 0
    %p214 = por %p212, %p213
    %p215 = scmp.ne.s32.totalorder %s201, %s202
    %p216 = scmp.eq.s32.totalorder %s18, 1
    %p217 = por %p215, %p216
    %p219 = scmp.ne.s32.totalorder %s202, %s218
    %p220 = scmp.eq.s32.totalorder %s18, 0
    %p221 = por %p219, %p220
    %p222 = scmp.le.s32.totalorder 1, %s12
    %p223 = scmp.lt.s32.totalorder %s12, 3
    %p224 = pnand %p222, %p223
    %p225 = pneg %p224
    // Predicated region
    $region9: #{ldp_projector.3} parent=5 // pred_check
      _
    $region10: #{ldp_projector.3} parent=5 // pred_check_branch
      %227 = sbr.rel (%p224) target = $region12
    $region11: #{ldp_projector.3} parent=5 // pred_region
      %s228 = ssub.s32 %s12, 1
      // Predicated region
      $region13: #{ldp_projector.3} parent=11 // pred_check
        %p229 = pneg %p87
      $region14: #{ldp_projector.3} parent=11 // pred_check_branch
        %231 = sbr.rel (%p229) target = $region16
      $region15: #{ldp_projector.3} parent=11 // pred_region
        %s232 = smul.u32 8, %s24
        %p233 = scmp.lt.s32.totalorder %s232, 7
        %s234 = scalar_select %p233, %s232, 7
        %p235 = scmp.lt.s32.totalorder %s23, 0
        %s236 = scalar_select %p235, %s23, 0
        %s237 = sadd.s32 %s236, %s234
        %s238 = smul.addr %s237, 4
        %s239 = scalar_lea.vmem %s1, %s238
        %s240 = smul.u32 8, %s24
      $region16: #{ldp_projector.3} parent=11 // pred_fallthru
        _
      // Predicated region
      $region17: #{ldp_projector.3} parent=11 // pred_check
        %p241 = pneg %p113
      $region18: #{ldp_projector.3} parent=11 // pred_check_branch
        %243 = sbr.rel (%p241) target = $region20
      $region19: #{ldp_projector.3} parent=11 // pred_region
        %p244 = scmp.lt.s32.totalorder %s23, 0
        %s245 = scalar_select %p244, %s23, 0
        %s246 = scalar_lea.vmem %s2, %s245
      $region20: #{ldp_projector.3} parent=11 // pred_fallthru
        _
      // Predicated region
      $region21: #{ldp_projector.3} parent=11 // pred_check
        %p247 = pneg %p134
      $region22: #{ldp_projector.3} parent=11 // pred_check_branch
        %249 = sbr.rel (%p247) target = $region24
      $region23: #{ldp_projector.3} parent=11 // pred_region
        _
      $region24: #{ldp_projector.3} parent=11 // pred_fallthru
        _
      // Predicated region
      $region25: #{ldp_projector.3} parent=11 // pred_check
        %p250 = pneg %p160
      $region26: #{ldp_projector.3} parent=11 // pred_check_branch
        %252 = sbr.rel (%p250) target = $region28
      $region27: #{ldp_projector.3} parent=11 // pred_region
        %p253 = scmp.lt.s32.totalorder %s23, 0
        %s254 = scalar_select %p253, %s23, 0
        %s255 = smul.addr %s254, 4
        %s256 = scalar_lea.vmem %s4, %s255
      $region28: #{ldp_projector.3} parent=11 // pred_fallthru
        _
      // Predicated region
      $region29: #{ldp_projector.3} parent=11 // pred_check
        %p257 = pneg %p186
      $region30: #{ldp_projector.3} parent=11 // pred_check_branch
        %259 = sbr.rel (%p257) target = $region32
      $region31: #{ldp_projector.3} parent=11 // pred_region
        %p260 = scmp.lt.s32.totalorder %s23, 0
        %s261 = scalar_select %p260, %s23, 0
        %s262 = scalar_lea.vmem %s5, %s261
      $region32: #{ldp_projector.3} parent=11 // pred_fallthru
        _
    $region12: #{ldp_projector.3} parent=5 // pred_fallthru
      _
    %p263 = scmp.lt.s32.totalorder %s12, 2
    // Predicated region
    $region33: #{ldp_projector.3} parent=5 // pred_check
      %p264 = pneg %p263
    $region34: #{ldp_projector.3} parent=5 // pred_check_branch
      %266 = sbr.rel (%p264) target = $region36
    $region35: #{ldp_projector.3} parent=5 // pred_region
      // Predicated region
      $region37: #{ldp_projector.3} parent=35 // pred_check
        %p267 = pneg %p53
      $region38: #{ldp_projector.3} parent=35 // pred_check_branch
        %269 = sbr.rel (%p267) target = $region40
      $region39: #{ldp_projector.3} parent=35 // pred_region
        %s270 = smul.u32 32, %s19
        %p271 = scmp.lt.s32.totalorder %s270, 63
        %s272 = scalar_select %p271, %s270, 63
        %p273 = scmp.lt.s32.totalorder %s21, 0
        %s274 = scalar_select %p273, %s21, 0
        %s275 = sadd.s32 %s274, %s272
        %s276 = smul.addr %s275, 4
        %s277 = scalar_lea.vmem %s0, %s276
        %s278 = smul.u32 32, %s19
      $region40: #{ldp_projector.3} parent=35 // pred_fallthru
        _
    $region36: #{ldp_projector.3} parent=5 // pred_fallthru
      _
    %p279 = scmp.le.s32.totalorder 1, %s12
    %p280 = scmp.lt.s32.totalorder %s12, 3
    %p281 = pnand %p279, %p280
    %p282 = pneg %p281
    // Predicated region
    $region41: #{ldp_projector.3} parent=5 // pred_check
      _
    $region42: #{ldp_projector.3} parent=5 // pred_check_branch
      %284 = sbr.rel (%p281) target = $region44
    $region43: #{ldp_projector.3} parent=5 // pred_region
      %s285 = ssub.s32 %s12, 1
      %s286 = smul.u32 32, %s22
      %p287 = scmp.lt.s32.totalorder %s286, 63
      %s288 = scalar_select %p287, %s286, 63
      %p289 = scmp.lt.s32.totalorder %s24, 0
      %s290 = scalar_select %p289, %s24, 0
      %s291 = sadd.s32 %s290, %s288
      %s292 = smul.addr %s291, 4
      %s293 = scalar_lea.vmem %s0, %s292
      %p294 = pneg %p59
      %p295 = pneg %p56
      %s296 = smul.u32 8, %s24
      %p297 = scmp.lt.s32.totalorder %s296, 7
      %s298 = scalar_select %p297, %s296, 7
      %p299 = scmp.lt.s32.totalorder %s23, 0
      %s300 = scalar_select %p299, %s23, 0
      %s301 = sadd.s32 %s300, %s298
      %s302 = smul.addr %s301, 4
      %s303 = scalar_lea.vmem %s1, %s302
      %p304 = pneg %p87
      %p305 = pneg %p84
      %p306 = scmp.lt.s32.totalorder %s23, 0
      %s307 = scalar_select %p306, %s23, 0
      %s308 = scalar_lea.vmem %s2, %s307
      %p309 = pneg %p113
      %p310 = pneg %p110
      %p311 = pneg %p134
      %p312 = pneg %p131
      %p313 = scmp.lt.s32.totalorder %s23, 0
      %s314 = scalar_select %p313, %s23, 0
      %s315 = smul.addr %s314, 4
      %s316 = scalar_lea.vmem %s4, %s315
      %p317 = pneg %p160
      %p318 = pneg %p157
      %p319 = scmp.lt.s32.totalorder %s23, 0
      %s320 = scalar_select %p319, %s23, 0
      %s321 = scalar_lea.vmem %s5, %s320
      %p322 = pneg %p186
      %p323 = pneg %p183
      %p324 = pneg %p214
      %p325 = pneg %p211
      %p326 = scmp.lt.s32.totalorder %s22, 1
      %s327 = scalar_select %p326, %s22, 1
      %p328 = scmp.lt.s32.totalorder %s23, 0
      %s329 = scalar_select %p328, %s23, 0
      %s330 = smul.addr %s327, 28
      %s331 = sadd.s32 %s329, %s330
      %s332 = smul.addr %s331, 8
      %s333 = scalar_lea.vmem %s6, %s332
      %s334 = smul.u32 32, %s22
      %p335 = scmp.lt.s32.totalorder %s334, 63
      %s336 = scalar_select %p335, %s334, 63
      %p337 = scmp.lt.s32.totalorder %s24, 0
      %s338 = scalar_select %p337, %s24, 0
      %s339 = sadd.s32 %s338, %s336
      %s340 = smul.addr %s339, 4
      %s341 = scalar_lea.vmem %s0, %s340
      %s342 = smul.u32 32, %s22
      %s343 = smul.u32 8, %s24
      %p344 = scmp.lt.s32.totalorder %s343, 7
      %s345 = scalar_select %p344, %s343, 7
      %p346 = scmp.lt.s32.totalorder %s23, 0
      %s347 = scalar_select %p346, %s23, 0
      %s348 = sadd.s32 %s347, %s345
      %s349 = smul.addr %s348, 4
      %s350 = scalar_lea.vmem %s1, %s349
      %s351 = smul.u32 8, %s24
      %p352 = scmp.lt.s32.totalorder %s23, 0
      %s353 = scalar_select %p352, %s23, 0
      %s354 = scalar_lea.vmem %s2, %s353
      %p355 = scmp.lt.s32.totalorder %s23, 0
      %s356 = scalar_select %p355, %s23, 0
      %s357 = smul.addr %s356, 4
      %s358 = scalar_lea.vmem %s4, %s357
      %p359 = scmp.lt.s32.totalorder %s23, 0
      %s360 = scalar_select %p359, %s23, 0
      %s361 = scalar_lea.vmem %s5, %s360
      %p362 = scmp.lt.s32.totalorder %s22, 1
      %s363 = scalar_select %p362, %s22, 1
      %p364 = scmp.lt.s32.totalorder %s23, 0
      %s365 = scalar_select %p364, %s23, 0
      %s366 = smul.addr %s363, 28
      %s367 = sadd.s32 %s365, %s366
      %s368 = smul.addr %s367, 8
      %s369 = scalar_lea.vmem %s6, %s368
      %p371 = scmp.eq.s32.totalorder %s24, 0
      // Predicated region
      $region45: #{ldp_projector.3} parent=43 // pred_check
        %p372 = pneg %p371
      $region46: #{ldp_projector.3} parent=43 // pred_check_branch
        %374 = sbr.rel (%p372) target = $region48
      $region47: #{ldp_projector.3} parent=43 // pred_region
        %vm375 = vcmask 523264
        %376 = vst.msk [vmem:[#allocation2] sm:$0xff] %vm375, 0.0
        %377 = vst.msk [vmem:[#allocation2 + $0x8] sm:$0xff] %vm375, 0.0
        %378 = vst.msk [vmem:[#allocation2 + $0x10] sm:$0xff] %vm375, 0.0
        %379 = vst.msk [vmem:[#allocation2 + $0x18] sm:$0xff] %vm375, 0.0
        %380 = vst.msk [vmem:[#allocation2 + $0x20] sm:$0xff] %vm375, 0.0
        %381 = vst.msk [vmem:[#allocation2 + $0x28] sm:$0xff] %vm375, 0.0
        %382 = vst.msk [vmem:[#allocation2 + $0x30] sm:$0xff] %vm375, 0.0
        %383 = vst.msk [vmem:[#allocation2 + $0x38] sm:$0xff] %vm375, 0.0
        %384 = vst.msk [vmem:[#allocation2 + $0x40] sm:$0xff] %vm375, 0.0
        %385 = vst.msk [vmem:[#allocation2 + $0x48] sm:$0xff] %vm375, 0.0
        %386 = vst.msk [vmem:[#allocation2 + $0x50] sm:$0xff] %vm375, 0.0
        %387 = vst.msk [vmem:[#allocation2 + $0x58] sm:$0xff] %vm375, 0.0
        %388 = vst.msk [vmem:[#allocation2 + $0x60] sm:$0xff] %vm375, 0.0
        %389 = vst.msk [vmem:[#allocation2 + $0x68] sm:$0xff] %vm375, 0.0
        %390 = vst.msk [vmem:[#allocation2 + $0x70] sm:$0xff] %vm375, 0.0
        %391 = vst.msk [vmem:[#allocation2 + $0x78] sm:$0xff] %vm375, 0.0
        %392 = vst.msk [vmem:[#allocation2 + $0x80] sm:$0xff] %vm375, 0.0
        %393 = vst.msk [vmem:[#allocation2 + $0x88] sm:$0xff] %vm375, 0.0
        %394 = vst.msk [vmem:[#allocation2 + $0x90] sm:$0xff] %vm375, 0.0
        %395 = vst.msk [vmem:[#allocation2 + $0x98] sm:$0xff] %vm375, 0.0
        %396 = vst.msk [vmem:[#allocation2 + $0xa0] sm:$0xff] %vm375, 0.0
        %397 = vst.msk [vmem:[#allocation2 + $0xa8] sm:$0xff] %vm375, 0.0
        %398 = vst.msk [vmem:[#allocation2 + $0xb0] sm:$0xff] %vm375, 0.0
        %399 = vst.msk [vmem:[#allocation2 + $0xb8] sm:$0xff] %vm375, 0.0
        %400 = vst.msk [vmem:[#allocation2 + $0xc0] sm:$0xff] %vm375, 0.0
        %401 = vst.msk [vmem:[#allocation2 + $0xc8] sm:$0xff] %vm375, 0.0
        %402 = vst.msk [vmem:[#allocation2 + $0xd0] sm:$0xff] %vm375, 0.0
        %403 = vst.msk [vmem:[#allocation2 + $0xd8] sm:$0xff] %vm375, 0.0
        %404 = vst.msk [vmem:[#allocation2 + $0xe0] sm:$0xff] %vm375, 0.0
        %405 = vst.msk [vmem:[#allocation2 + $0xe8] sm:$0xff] %vm375, 0.0
        %406 = vst.msk [vmem:[#allocation2 + $0xf0] sm:$0xff] %vm375, 0.0
        %407 = vst.msk [vmem:[#allocation2 + $0xf8] sm:$0xff] %vm375, 0.0
      $region48: #{ldp_projector.3} parent=43 // pred_fallthru
        _
      %v408 = vld [vmem:[#allocation2] sm:$0xff]
      %v409 = vld [vmem:[#allocation2 + $0x8] sm:$0xff]
      %v410 = vld [vmem:[#allocation2 + $0x10] sm:$0xff]
      %v411 = vld [vmem:[#allocation2 + $0x18] sm:$0xff]
      %v412 = vld [vmem:[#allocation2 + $0x20] sm:$0xff]
      %v413 = vld [vmem:[#allocation2 + $0x28] sm:$0xff]
      %v414 = vld [vmem:[#allocation2 + $0x30] sm:$0xff]
      %v415 = vld [vmem:[#allocation2 + $0x38] sm:$0xff]
      %v416 = vld [vmem:[#allocation2 + $0x40] sm:$0xff]
      %v417 = vld [vmem:[#allocation2 + $0x48] sm:$0xff]
      %v418 = vld [vmem:[#allocation2 + $0x50] sm:$0xff]
      %v419 = vld [vmem:[#allocation2 + $0x58] sm:$0xff]
      %v420 = vld [vmem:[#allocation2 + $0x60] sm:$0xff]
      %v421 = vld [vmem:[#allocation2 + $0x68] sm:$0xff]
      %v422 = vld [vmem:[#allocation2 + $0x70] sm:$0xff]
      %v423 = vld [vmem:[#allocation2 + $0x78] sm:$0xff]
      %v424 = vld [vmem:[#allocation2 + $0x80] sm:$0xff]
      %v425 = vld [vmem:[#allocation2 + $0x88] sm:$0xff]
      %v426 = vld [vmem:[#allocation2 + $0x90] sm:$0xff]
      %v427 = vld [vmem:[#allocation2 + $0x98] sm:$0xff]
      %v428 = vld [vmem:[#allocation2 + $0xa0] sm:$0xff]
      %v429 = vld [vmem:[#allocation2 + $0xa8] sm:$0xff]
      %v430 = vld [vmem:[#allocation2 + $0xb0] sm:$0xff]
      %v431 = vld [vmem:[#allocation2 + $0xb8] sm:$0xff]
      %v432 = vld [vmem:[#allocation2 + $0xc0] sm:$0xff]
      %v433 = vld [vmem:[#allocation2 + $0xc8] sm:$0xff]
      %v434 = vld [vmem:[#allocation2 + $0xd0] sm:$0xff]
      %v435 = vld [vmem:[#allocation2 + $0xd8] sm:$0xff]
      %v436 = vld [vmem:[#allocation2 + $0xe0] sm:$0xff]
      %v437 = vld [vmem:[#allocation2 + $0xe8] sm:$0xff]
      %v438 = vld [vmem:[#allocation2 + $0xf0] sm:$0xff]
      %v439 = vld [vmem:[#allocation2 + $0xf8] sm:$0xff]
      %v440 = vld [vmem:[%s341] sm:$0xf]
      %v441 = vld [vmem:[%s341 + $0x4] sm:$0xf]
      %v442 = vld [vmem:[%s341 + $0x8] sm:$0xf]
      %v443 = vld [vmem:[%s341 + $0xc] sm:$0xf]
      %v444 = vld [vmem:[%s341 + $0x10] sm:$0xf]
      %v445 = vld [vmem:[%s341 + $0x14] sm:$0xf]
      %v446 = vld [vmem:[%s341 + $0x18] sm:$0xf]
      %v447 = vld [vmem:[%s341 + $0x1c] sm:$0xf]
      %v448 = vld [vmem:[%s341 + $0x20] sm:$0xf]
      %v449 = vld [vmem:[%s341 + $0x24] sm:$0xf]
      %v450 = vld [vmem:[%s341 + $0x28] sm:$0xf]
      %v451 = vld [vmem:[%s341 + $0x2c] sm:$0xf]
      %v452 = vld [vmem:[%s341 + $0x30] sm:$0xf]
      %v453 = vld [vmem:[%s341 + $0x34] sm:$0xf]
      %v454 = vld [vmem:[%s341 + $0x38] sm:$0xf]
      %v455 = vld [vmem:[%s341 + $0x3c] sm:$0xf]
      %v456 = vld [vmem:[%s341 + $0x40] sm:$0xf]
      %v457 = vld [vmem:[%s341 + $0x44] sm:$0xf]
      %v458 = vld [vmem:[%s341 + $0x48] sm:$0xf]
      %v459 = vld [vmem:[%s341 + $0x4c] sm:$0xf]
      %v460 = vld [vmem:[%s341 + $0x50] sm:$0xf]
      %v461 = vld [vmem:[%s341 + $0x54] sm:$0xf]
      %v462 = vld [vmem:[%s341 + $0x58] sm:$0xf]
      %v463 = vld [vmem:[%s341 + $0x5c] sm:$0xf]
      %v464 = vld [vmem:[%s341 + $0x60] sm:$0xf]
      %v465 = vld [vmem:[%s341 + $0x64] sm:$0xf]
      %v466 = vld [vmem:[%s341 + $0x68] sm:$0xf]
      %v467 = vld [vmem:[%s341 + $0x6c] sm:$0xf]
      %v468 = vld [vmem:[%s341 + $0x70] sm:$0xf]
      %v469 = vld [vmem:[%s341 + $0x74] sm:$0xf]
      %v470 = vld [vmem:[%s341 + $0x78] sm:$0xf]
      %v471 = vld [vmem:[%s341 + $0x7c] sm:$0xf]
      %v472 = vld [vmem:[%s350] sm:$0xf]
      %v473 = vld [vmem:[%s350 + $0x4] sm:$0xf]
      %v474 = vld [vmem:[%s350 + $0x8] sm:$0xf]
      %v475 = vld [vmem:[%s350 + $0xc] sm:$0xf]
      %v476 = vld [vmem:[%s350 + $0x10] sm:$0xf]
      %v477 = vld [vmem:[%s350 + $0x14] sm:$0xf]
      %v478 = vld [vmem:[%s350 + $0x18] sm:$0xf]
      %v479 = vld [vmem:[%s350 + $0x1c] sm:$0xf]
      %v512 = vunpack.c.l.b16 %v440
      %v513 = vunpack.c.l.b16 %v441
      %v514 = vunpack.c.l.b16 %v442
      %v515 = vunpack.c.l.b16 %v443
      %v516 = vunpack.c.l.b16 %v444
      %v517 = vunpack.c.l.b16 %v445
      %v518 = vunpack.c.l.b16 %v446
      %v519 = vunpack.c.l.b16 %v447
      %v520 = vunpack.c.l.b16 %v448
      %v521 = vunpack.c.l.b16 %v449
      %v522 = vunpack.c.l.b16 %v450
      %v523 = vunpack.c.l.b16 %v451
      %v524 = vunpack.c.l.b16 %v452
      %v525 = vunpack.c.l.b16 %v453
      %v526 = vunpack.c.l.b16 %v454
      %v527 = vunpack.c.l.b16 %v455
      %v528 = vunpack.c.l.b16 %v456
      %v529 = vunpack.c.l.b16 %v457
      %v530 = vunpack.c.l.b16 %v458
      %v531 = vunpack.c.l.b16 %v459
      %v532 = vunpack.c.l.b16 %v460
      %v533 = vunpack.c.l.b16 %v461
      %v534 = vunpack.c.l.b16 %v462
      %v535 = vunpack.c.l.b16 %v463
      %v536 = vunpack.c.l.b16 %v464
      %v537 = vunpack.c.l.b16 %v465
      %v538 = vunpack.c.l.b16 %v466
      %v539 = vunpack.c.l.b16 %v467
      %v540 = vunpack.c.l.b16 %v468
      %v541 = vunpack.c.l.b16 %v469
      %v542 = vunpack.c.l.b16 %v470
      %v543 = vunpack.c.l.b16 %v471
      %v544 = vpack.c.b16 %v513, %v512
      %v545 = vpack.c.b16 %v515, %v514
      %v546 = vpack.c.b16 %v517, %v516
      %v547 = vpack.c.b16 %v519, %v518
      %v548 = vpack.c.b16 %v521, %v520
      %v549 = vpack.c.b16 %v523, %v522
      %v550 = vpack.c.b16 %v525, %v524
      %v551 = vpack.c.b16 %v527, %v526
      %v552 = vpack.c.b16 %v529, %v528
      %v553 = vpack.c.b16 %v531, %v530
      %v554 = vpack.c.b16 %v533, %v532
      %v555 = vpack.c.b16 %v535, %v534
      %v556 = vpack.c.b16 %v537, %v536
      %v557 = vpack.c.b16 %v539, %v538
      %v558 = vpack.c.b16 %v541, %v540
      %v559 = vpack.c.b16 %v543, %v542
      %v568 = vunpack.c.l.b16 %v472
      %v569 = vunpack.c.l.b16 %v473
      %v570 = vunpack.c.l.b16 %v474
      %v571 = vunpack.c.l.b16 %v475
      %v572 = vunpack.c.l.b16 %v476
      %v573 = vunpack.c.l.b16 %v477
      %v574 = vunpack.c.l.b16 %v478
      %v575 = vunpack.c.l.b16 %v479
      %v576 = vpack.c.b16 %v569, %v568
      %v577 = vpack.c.b16 %v571, %v570
      %v578 = vpack.c.b16 %v573, %v572
      %v579 = vpack.c.b16 %v575, %v574
      %vm584 = vcmask 523264
      %v586 = vsel %vm584, %v544, 0
      %v589 = vsel %vm584, %v545, 0
      %v592 = vsel %vm584, %v546, 0
      %v595 = vsel %vm584, %v547, 0
      %v598 = vsel %vm584, %v548, 0
      %v601 = vsel %vm584, %v549, 0
      %v604 = vsel %vm584, %v550, 0
      %v607 = vsel %vm584, %v551, 0
      %v610 = vsel %vm584, %v552, 0
      %v613 = vsel %vm584, %v553, 0
      %v616 = vsel %vm584, %v554, 0
      %v619 = vsel %vm584, %v555, 0
      %v622 = vsel %vm584, %v556, 0
      %v625 = vsel %vm584, %v557, 0
      %v628 = vsel %vm584, %v558, 0
      %v631 = vsel %vm584, %v559, 0
      %633 = vmatprep.subr.bf16.mxu0 0
      %634 = vmatpush1.bf16.msra.mxu0 %v576
      %635 = vmatprep.subr.bf16.mxu0 0
      %636 = vmatpush1.bf16.msra.mxu0 %v577
      %637 = vmatprep.subr.bf16.mxu0 0
      %638 = vmatpush1.bf16.msra.mxu0 %v578
      %639 = vmatprep.subr.bf16.mxu0 0
      %640 = vmatpush1.bf16.msra.mxu0 %v579
      %641 = vmatprep.subr.bf16.mxu0 0
      %642 = vmatpush1.bf16.msra.mxu0 0
      %643 = vmatprep.subr.bf16.mxu0 0
      %644 = vmatpush1.bf16.msra.mxu0 0
      %645 = vmatprep.subr.bf16.mxu0 0
      %646 = vmatpush1.bf16.msra.mxu0 0
      %647 = vmatprep.subr.bf16.mxu0 0
      %648 = vmatpush1.bf16.msra.mxu0 0
      %649 = vmatprep.subr.bf16.mxu0 0
      %650 = vmatpush1.bf16.msra.mxu0 0
      %651 = vmatprep.subr.bf16.mxu0 0
      %652 = vmatpush1.bf16.msra.mxu0 0
      %653 = vmatprep.subr.bf16.mxu0 0
      %654 = vmatpush1.bf16.msra.mxu0 0
      %655 = vmatprep.subr.bf16.mxu0 0
      %656 = vmatpush1.bf16.msra.mxu0 0
      %657 = vmatprep.subr.bf16.mxu0 0
      %658 = vmatpush1.bf16.msra.mxu0 0
      %659 = vmatprep.subr.bf16.mxu0 0
      %660 = vmatpush1.bf16.msra.mxu0 0
      %661 = vmatprep.subr.bf16.mxu0 0
      %662 = vmatpush1.bf16.msra.mxu0 0
      %663 = vmatprep.subr.bf16.mxu0 0
      %664 = vmatpush1.bf16.msra.mxu0 0
      %665 = vmatprep.mubr.bf16.mxu0 0
      %666 = vmatmul.mubr.bf16.gmra.mrb[0].mxu0 %v586
      %v667 = vpop.f32.mrb[0].mxu0
      %v668 = vadd.f32 0.0, %v667
      %v669 = vpop.f32.mrb[0].mxu0
      %v670 = vpop.f32.mrb[0].mxu0
      %v671 = vadd.f32 0.0, %v670
      %v672 = vpop.f32.mrb[0].mxu0
      %673 = vmatprep.mubr.bf16.mxu0 0
      %674 = vmatmul.mubr.bf16.gmra.mrb[0].mxu0 %v589
      %v675 = vpop.f32.mrb[0].mxu0
      %v676 = vadd.f32 0.0, %v675
      %v677 = vpop.f32.mrb[0].mxu0
      %v678 = vpop.f32.mrb[0].mxu0
      %v679 = vadd.f32 0.0, %v678
      %v680 = vpop.f32.mrb[0].mxu0
      %681 = vmatprep.mubr.bf16.mxu0 0
      %682 = vmatmul.mubr.bf16.gmra.mrb[0].mxu0 %v592
      %v683 = vpop.f32.mrb[0].mxu0
      %v684 = vadd.f32 0.0, %v683
      %v685 = vpop.f32.mrb[0].mxu0
      %v686 = vpop.f32.mrb[0].mxu0
      %v687 = vadd.f32 0.0, %v686
      %v688 = vpop.f32.mrb[0].mxu0
      %689 = vmatprep.mubr.bf16.mxu0 0
      %690 = vmatmul.mubr.bf16.gmra.mrb[0].mxu0 %v595
      %v691 = vpop.f32.mrb[0].mxu0
      %v692 = vadd.f32 0.0, %v691
      %v693 = vpop.f32.mrb[0].mxu0
      %v694 = vpop.f32.mrb[0].mxu0
      %v695 = vadd.f32 0.0, %v694
      %v696 = vpop.f32.mrb[0].mxu0
      %697 = vmatprep.mubr.bf16.mxu0 0
      %698 = vmatmul.mubr.bf16.gmra.mrb[0].mxu0 %v598
      %v699 = vpop.f32.mrb[0].mxu0
      %v700 = vadd.f32 0.0, %v699
      %v701 = vpop.f32.mrb[0].mxu0
      %v702 = vpop.f32.mrb[0].mxu0
      %v703 = vadd.f32 0.0, %v702
      %v704 = vpop.f32.mrb[0].mxu0
      %705 = vmatprep.mubr.bf16.mxu0 0
      %706 = vmatmul.mubr.bf16.gmra.mrb[0].mxu0 %v601
      %v707 = vpop.f32.mrb[0].mxu0
      %v708 = vadd.f32 0.0, %v707
      %v709 = vpop.f32.mrb[0].mxu0
      %v710 = vpop.f32.mrb[0].mxu0
      %v711 = vadd.f32 0.0, %v710
      %v712 = vpop.f32.mrb[0].mxu0
      %713 = vmatprep.mubr.bf16.mxu0 0
      %714 = vmatmul.mubr.bf16.gmra.mrb[0].mxu0 %v604
      %v715 = vpop.f32.mrb[0].mxu0
      %v716 = vadd.f32 0.0, %v715
      %v717 = vpop.f32.mrb[0].mxu0
      %v718 = vpop.f32.mrb[0].mxu0
      %v719 = vadd.f32 0.0, %v718
      %v720 = vpop.f32.mrb[0].mxu0
      %721 = vmatprep.mubr.bf16.mxu0 0
      %722 = vmatmul.mubr.bf16.gmra.mrb[0].mxu0 %v607
      %v723 = vpop.f32.mrb[0].mxu0
      %v724 = vadd.f32 0.0, %v723
      %v725 = vpop.f32.mrb[0].mxu0
      %v726 = vpop.f32.mrb[0].mxu0
      %v727 = vadd.f32 0.0, %v726
      %v728 = vpop.f32.mrb[0].mxu0
      %729 = vmatprep.mubr.bf16.mxu0 0
      %730 = vmatmul.mubr.bf16.gmra.mrb[0].mxu0 %v610
      %v731 = vpop.f32.mrb[0].mxu0
      %v732 = vadd.f32 0.0, %v731
      %v733 = vpop.f32.mrb[0].mxu0
      %v734 = vpop.f32.mrb[0].mxu0
      %v735 = vadd.f32 0.0, %v734
      %v736 = vpop.f32.mrb[0].mxu0
      %737 = vmatprep.mubr.bf16.mxu0 0
      %738 = vmatmul.mubr.bf16.gmra.mrb[0].mxu0 %v613
      %v739 = vpop.f32.mrb[0].mxu0
      %v740 = vadd.f32 0.0, %v739
      %v741 = vpop.f32.mrb[0].mxu0
      %v742 = vpop.f32.mrb[0].mxu0
      %v743 = vadd.f32 0.0, %v742
      %v744 = vpop.f32.mrb[0].mxu0
      %745 = vmatprep.mubr.bf16.mxu0 0
      %746 = vmatmul.mubr.bf16.gmra.mrb[0].mxu0 %v616
      %v747 = vpop.f32.mrb[0].mxu0
      %v748 = vadd.f32 0.0, %v747
      %v749 = vpop.f32.mrb[0].mxu0
      %v750 = vpop.f32.mrb[0].mxu0
      %v751 = vadd.f32 0.0, %v750
      %v752 = vpop.f32.mrb[0].mxu0
      %753 = vmatprep.mubr.bf16.mxu0 0
      %754 = vmatmul.mubr.bf16.gmra.mrb[0].mxu0 %v619
      %v755 = vpop.f32.mrb[0].mxu0
      %v756 = vadd.f32 0.0, %v755
      %v757 = vpop.f32.mrb[0].mxu0
      %v758 = vpop.f32.mrb[0].mxu0
      %v759 = vadd.f32 0.0, %v758
      %v760 = vpop.f32.mrb[0].mxu0
      %761 = vmatprep.mubr.bf16.mxu0 0
      %762 = vmatmul.mubr.bf16.gmra.mrb[0].mxu0 %v622
      %v763 = vpop.f32.mrb[0].mxu0
      %v764 = vadd.f32 0.0, %v763
      %v765 = vpop.f32.mrb[0].mxu0
      %v766 = vpop.f32.mrb[0].mxu0
      %v767 = vadd.f32 0.0, %v766
      %v768 = vpop.f32.mrb[0].mxu0
      %769 = vmatprep.mubr.bf16.mxu0 0
      %770 = vmatmul.mubr.bf16.gmra.mrb[0].mxu0 %v625
      %v771 = vpop.f32.mrb[0].mxu0
      %v772 = vadd.f32 0.0, %v771
      %v773 = vpop.f32.mrb[0].mxu0
      %v774 = vpop.f32.mrb[0].mxu0
      %v775 = vadd.f32 0.0, %v774
      %v776 = vpop.f32.mrb[0].mxu0
      %777 = vmatprep.mubr.bf16.mxu0 0
      %778 = vmatmul.mubr.bf16.gmra.mrb[0].mxu0 %v628
      %v779 = vpop.f32.mrb[0].mxu0
      %v780 = vadd.f32 0.0, %v779
      %v781 = vpop.f32.mrb[0].mxu0
      %v782 = vpop.f32.mrb[0].mxu0
      %v783 = vadd.f32 0.0, %v782
      %v784 = vpop.f32.mrb[0].mxu0
      %785 = vmatprep.mubr.bf16.mxu0 0
      %786 = vmatmul.mubr.bf16.gmra.mrb[0].mxu0 %v631
      %v787 = vpop.f32.mrb[0].mxu0
      %v788 = vadd.f32 0.0, %v787
      %v789 = vpop.f32.mrb[0].mxu0
      %v790 = vpop.f32.mrb[0].mxu0
      %v791 = vadd.f32 0.0, %v790
      %v792 = vpop.f32.mrb[0].mxu0
      %793 = vdwg.mxu0
      %v794 = vadd.f32 %v408, %v668
      %v795 = vadd.f32 %v409, %v671
      %v796 = vadd.f32 %v410, %v676
      %v797 = vadd.f32 %v411, %v679
      %v798 = vadd.f32 %v412, %v684
      %v799 = vadd.f32 %v413, %v687
      %v800 = vadd.f32 %v414, %v692
      %v801 = vadd.f32 %v415, %v695
      %v802 = vadd.f32 %v416, %v700
      %v803 = vadd.f32 %v417, %v703
      %v804 = vadd.f32 %v418, %v708
      %v805 = vadd.f32 %v419, %v711
      %v806 = vadd.f32 %v420, %v716
      %v807 = vadd.f32 %v421, %v719
      %v808 = vadd.f32 %v422, %v724
      %v809 = vadd.f32 %v423, %v727
      %v810 = vadd.f32 %v424, %v732
      %v811 = vadd.f32 %v425, %v735
      %v812 = vadd.f32 %v426, %v740
      %v813 = vadd.f32 %v427, %v743
      %v814 = vadd.f32 %v428, %v748
      %v815 = vadd.f32 %v429, %v751
      %v816 = vadd.f32 %v430, %v756
      %v817 = vadd.f32 %v431, %v759
      %v818 = vadd.f32 %v432, %v764
      %v819 = vadd.f32 %v433, %v767
      %v820 = vadd.f32 %v434, %v772
      %v821 = vadd.f32 %v435, %v775
      %v822 = vadd.f32 %v436, %v780
      %v823 = vadd.f32 %v437, %v783
      %v824 = vadd.f32 %v438, %v788
      %v825 = vadd.f32 %v439, %v791
      %826 = vst.msk [vmem:[#allocation2] sm:$0xff] %vm584, %v794
      %827 = vst.msk [vmem:[#allocation2 + $0x8] sm:$0xff] %vm584, %v795
      %828 = vst.msk [vmem:[#allocation2 + $0x10] sm:$0xff] %vm584, %v796
      %829 = vst.msk [vmem:[#allocation2 + $0x18] sm:$0xff] %vm584, %v797
      %830 = vst.msk [vmem:[#allocation2 + $0x20] sm:$0xff] %vm584, %v798
      %831 = vst.msk [vmem:[#allocation2 + $0x28] sm:$0xff] %vm584, %v799
      %832 = vst.msk [vmem:[#allocation2 + $0x30] sm:$0xff] %vm584, %v800
      %833 = vst.msk [vmem:[#allocation2 + $0x38] sm:$0xff] %vm584, %v801
      %834 = vst.msk [vmem:[#allocation2 + $0x40] sm:$0xff] %vm584, %v802
      %835 = vst.msk [vmem:[#allocation2 + $0x48] sm:$0xff] %vm584, %v803
      %836 = vst.msk [vmem:[#allocation2 + $0x50] sm:$0xff] %vm584, %v804
      %837 = vst.msk [vmem:[#allocation2 + $0x58] sm:$0xff] %vm584, %v805
      %838 = vst.msk [vmem:[#allocation2 + $0x60] sm:$0xff] %vm584, %v806
      %839 = vst.msk [vmem:[#allocation2 + $0x68] sm:$0xff] %vm584, %v807
      %840 = vst.msk [vmem:[#allocation2 + $0x70] sm:$0xff] %vm584, %v808
      %841 = vst.msk [vmem:[#allocation2 + $0x78] sm:$0xff] %vm584, %v809
      %842 = vst.msk [vmem:[#allocation2 + $0x80] sm:$0xff] %vm584, %v810
      %843 = vst.msk [vmem:[#allocation2 + $0x88] sm:$0xff] %vm584, %v811
      %844 = vst.msk [vmem:[#allocation2 + $0x90] sm:$0xff] %vm584, %v812
      %845 = vst.msk [vmem:[#allocation2 + $0x98] sm:$0xff] %vm584, %v813
      %846 = vst.msk [vmem:[#allocation2 + $0xa0] sm:$0xff] %vm584, %v814
      %847 = vst.msk [vmem:[#allocation2 + $0xa8] sm:$0xff] %vm584, %v815
      %848 = vst.msk [vmem:[#allocation2 + $0xb0] sm:$0xff] %vm584, %v816
      %849 = vst.msk [vmem:[#allocation2 + $0xb8] sm:$0xff] %vm584, %v817
      %850 = vst.msk [vmem:[#allocation2 + $0xc0] sm:$0xff] %vm584, %v818
      %851 = vst.msk [vmem:[#allocation2 + $0xc8] sm:$0xff] %vm584, %v819
      %852 = vst.msk [vmem:[#allocation2 + $0xd0] sm:$0xff] %vm584, %v820
      %853 = vst.msk [vmem:[#allocation2 + $0xd8] sm:$0xff] %vm584, %v821
      %854 = vst.msk [vmem:[#allocation2 + $0xe0] sm:$0xff] %vm584, %v822
      %855 = vst.msk [vmem:[#allocation2 + $0xe8] sm:$0xff] %vm584, %v823
      %856 = vst.msk [vmem:[#allocation2 + $0xf0] sm:$0xff] %vm584, %v824
      %857 = vst.msk [vmem:[#allocation2 + $0xf8] sm:$0xff] %vm584, %v825
      // Predicated region
      $region49: #{ldp_projector.3} parent=43 // pred_check
        %p858 = pneg %p371
      $region50: #{ldp_projector.3} parent=43 // pred_check_branch
        %860 = sbr.rel (%p858) target = $region52
      $region51: #{ldp_projector.3} parent=43 // pred_region
        %v861 = vld [vmem:[#allocation2] sm:$0xff]
        %v862 = vld [vmem:[#allocation2 + $0x8] sm:$0xff]
        %v863 = vld [vmem:[#allocation2 + $0x10] sm:$0xff]
        %v864 = vld [vmem:[#allocation2 + $0x18] sm:$0xff]
        %v865 = vld [vmem:[#allocation2 + $0x20] sm:$0xff]
        %v866 = vld [vmem:[#allocation2 + $0x28] sm:$0xff]
        %v867 = vld [vmem:[#allocation2 + $0x30] sm:$0xff]
        %v868 = vld [vmem:[#allocation2 + $0x38] sm:$0xff]
        %v869 = vld [vmem:[#allocation2 + $0x40] sm:$0xff]
        %v870 = vld [vmem:[#allocation2 + $0x48] sm:$0xff]
        %v871 = vld [vmem:[#allocation2 + $0x50] sm:$0xff]
        %v872 = vld [vmem:[#allocation2 + $0x58] sm:$0xff]
        %v873 = vld [vmem:[#allocation2 + $0x60] sm:$0xff]
        %v874 = vld [vmem:[#allocation2 + $0x68] sm:$0xff]
        %v875 = vld [vmem:[#allocation2 + $0x70] sm:$0xff]
        %v876 = vld [vmem:[#allocation2 + $0x78] sm:$0xff]
        %v877 = vld [vmem:[#allocation2 + $0x80] sm:$0xff]
        %v878 = vld [vmem:[#allocation2 + $0x88] sm:$0xff]
        %v879 = vld [vmem:[#allocation2 + $0x90] sm:$0xff]
        %v880 = vld [vmem:[#allocation2 + $0x98] sm:$0xff]
        %v881 = vld [vmem:[#allocation2 + $0xa0] sm:$0xff]
        %v882 = vld [vmem:[#allocation2 + $0xa8] sm:$0xff]
        %v883 = vld [vmem:[#allocation2 + $0xb0] sm:$0xff]
        %v884 = vld [vmem:[#allocation2 + $0xb8] sm:$0xff]
        %v885 = vld [vmem:[#allocation2 + $0xc0] sm:$0xff]
        %v886 = vld [vmem:[#allocation2 + $0xc8] sm:$0xff]
        %v887 = vld [vmem:[#allocation2 + $0xd0] sm:$0xff]
        %v888 = vld [vmem:[#allocation2 + $0xd8] sm:$0xff]
        %v889 = vld [vmem:[#allocation2 + $0xe0] sm:$0xff]
        %v890 = vld [vmem:[#allocation2 + $0xe8] sm:$0xff]
        %v891 = vld [vmem:[#allocation2 + $0xf0] sm:$0xff]
        %v892 = vld [vmem:[#allocation2 + $0xf8] sm:$0xff]
        %v893 = vld [vmem:[%s354] sm:$0x1]
        %v895 = vlaneseq
        %v896 = vshrl.u32 %v895, 7
        %v897 = vsub.s32 0, %v896
        %v898 = vrot.slane %v893, %v897
        %v900 = vadd.f32 %v861, %v898
        %v901 = vadd.f32 %v862, %v898
        %v902 = vadd.f32 %v863, %v898
        %v903 = vadd.f32 %v864, %v898
        %v904 = vadd.f32 %v865, %v898
        %v905 = vadd.f32 %v866, %v898
        %v906 = vadd.f32 %v867, %v898
        %v907 = vadd.f32 %v868, %v898
        %v908 = vadd.f32 %v869, %v898
        %v909 = vadd.f32 %v870, %v898
        %v910 = vadd.f32 %v871, %v898
        %v911 = vadd.f32 %v872, %v898
        %v912 = vadd.f32 %v873, %v898
        %v913 = vadd.f32 %v874, %v898
        %v914 = vadd.f32 %v875, %v898
        %v915 = vadd.f32 %v876, %v898
        %v916 = vadd.f32 %v877, %v898
        %v917 = vadd.f32 %v878, %v898
        %v918 = vadd.f32 %v879, %v898
        %v919 = vadd.f32 %v880, %v898
        %v920 = vadd.f32 %v881, %v898
        %v921 = vadd.f32 %v882, %v898
        %v922 = vadd.f32 %v883, %v898
        %v923 = vadd.f32 %v884, %v898
        %v924 = vadd.f32 %v885, %v898
        %v925 = vadd.f32 %v886, %v898
        %v926 = vadd.f32 %v887, %v898
        %v927 = vadd.f32 %v888, %v898
        %v928 = vadd.f32 %v889, %v898
        %v929 = vadd.f32 %v890, %v898
        %v930 = vadd.f32 %v891, %v898
        %v931 = vadd.f32 %v892, %v898
        %v932 = vpack.c.bf16 %v901, %v900
        %v933 = vpack.c.bf16 %v903, %v902
        %v934 = vpack.c.bf16 %v905, %v904
        %v935 = vpack.c.bf16 %v907, %v906
        %v936 = vpack.c.bf16 %v909, %v908
        %v937 = vpack.c.bf16 %v911, %v910
        %v938 = vpack.c.bf16 %v913, %v912
        %v939 = vpack.c.bf16 %v915, %v914
        %v940 = vpack.c.bf16 %v917, %v916
        %v941 = vpack.c.bf16 %v919, %v918
        %v942 = vpack.c.bf16 %v921, %v920
        %v943 = vpack.c.bf16 %v923, %v922
        %v944 = vpack.c.bf16 %v925, %v924
        %v945 = vpack.c.bf16 %v927, %v926
        %v946 = vpack.c.bf16 %v929, %v928
        %v947 = vpack.c.bf16 %v931, %v930
        %v948 = vld [vmem:[%s3] sm:$0xff]
        %v949 = vld [vmem:[%s3 + $0x8] sm:$0xff]
        %v950 = vld [vmem:[%s3 + $0x10] sm:$0xff]
        %v951 = vld [vmem:[%s3 + $0x18] sm:$0xff]
        %v952 = vld [vmem:[%s3 + $0x20] sm:$0xff]
        %v953 = vld [vmem:[%s3 + $0x28] sm:$0xff]
        %v954 = vld [vmem:[%s3 + $0x30] sm:$0xff]
        %v955 = vld [vmem:[%s3 + $0x38] sm:$0xff]
        %v956 = vld [vmem:[%s3 + $0x40] sm:$0xff]
        %v957 = vld [vmem:[%s3 + $0x48] sm:$0xff]
        %v958 = vld [vmem:[%s3 + $0x50] sm:$0xff]
        %v959 = vld [vmem:[%s3 + $0x58] sm:$0xff]
        %v960 = vld [vmem:[%s3 + $0x60] sm:$0xff]
        %v961 = vld [vmem:[%s3 + $0x68] sm:$0xff]
        %v962 = vld [vmem:[%s3 + $0x70] sm:$0xff]
        %v963 = vld [vmem:[%s3 + $0x78] sm:$0xff]
        %v964 = vld [vmem:[%s3 + $0x80] sm:$0xff]
        %v965 = vld [vmem:[%s3 + $0x88] sm:$0xff]
        %v966 = vld [vmem:[%s3 + $0x90] sm:$0xff]
        %v967 = vld [vmem:[%s3 + $0x98] sm:$0xff]
        %v968 = vld [vmem:[%s3 + $0xa0] sm:$0xff]
        %v969 = vld [vmem:[%s3 + $0xa8] sm:$0xff]
        %v970 = vld [vmem:[%s3 + $0xb0] sm:$0xff]
        %v971 = vld [vmem:[%s3 + $0xb8] sm:$0xff]
        %v972 = vld [vmem:[%s3 + $0xc0] sm:$0xff]
        %v973 = vld [vmem:[%s3 + $0xc8] sm:$0xff]
        %v974 = vld [vmem:[%s3 + $0xd0] sm:$0xff]
        %v975 = vld [vmem:[%s3 + $0xd8] sm:$0xff]
        %v976 = vld [vmem:[%s3 + $0xe0] sm:$0xff]
        %v977 = vld [vmem:[%s3 + $0xe8] sm:$0xff]
        %v978 = vld [vmem:[%s3 + $0xf0] sm:$0xff]
        %v979 = vld [vmem:[%s3 + $0xf8] sm:$0xff]
        %v1012 = vunpack.c.l.b16 %v948
        %v1013 = vunpack.c.h.b16 %v948
        %v1014 = vunpack.c.l.b16 %v949
        %v1015 = vunpack.c.h.b16 %v949
        %v1016 = vunpack.c.l.b16 %v950
        %v1017 = vunpack.c.h.b16 %v950
        %v1018 = vunpack.c.l.b16 %v951
        %v1019 = vunpack.c.h.b16 %v951
        %v1020 = vunpack.c.l.b16 %v952
        %v1021 = vunpack.c.h.b16 %v952
        %v1022 = vunpack.c.l.b16 %v953
        %v1023 = vunpack.c.h.b16 %v953
        %v1024 = vunpack.c.l.b16 %v954
        %v1025 = vunpack.c.h.b16 %v954
        %v1026 = vunpack.c.l.b16 %v955
        %v1027 = vunpack.c.h.b16 %v955
        %v1028 = vunpack.c.l.b16 %v956
        %v1029 = vunpack.c.h.b16 %v956
        %v1030 = vunpack.c.l.b16 %v957
        %v1031 = vunpack.c.h.b16 %v957
        %v1032 = vunpack.c.l.b16 %v958
        %v1033 = vunpack.c.h.b16 %v958
        %v1034 = vunpack.c.l.b16 %v959
        %v1035 = vunpack.c.h.b16 %v959
        %v1036 = vunpack.c.l.b16 %v960
        %v1037 = vunpack.c.h.b16 %v960
        %v1038 = vunpack.c.l.b16 %v961
        %v1039 = vunpack.c.h.b16 %v961
        %v1040 = vunpack.c.l.b16 %v962
        %v1041 = vunpack.c.h.b16 %v962
        %v1042 = vunpack.c.l.b16 %v963
        %v1043 = vunpack.c.h.b16 %v963
        %v1044 = vunpack.c.l.b16 %v964
        %v1045 = vunpack.c.h.b16 %v964
        %v1046 = vunpack.c.l.b16 %v965
        %v1047 = vunpack.c.h.b16 %v965
        %v1048 = vunpack.c.l.b16 %v966
        %v1049 = vunpack.c.h.b16 %v966
        %v1050 = vunpack.c.l.b16 %v967
        %v1051 = vunpack.c.h.b16 %v967
        %v1052 = vunpack.c.l.b16 %v968
        %v1053 = vunpack.c.h.b16 %v968
        %v1054 = vunpack.c.l.b16 %v969
        %v1055 = vunpack.c.h.b16 %v969
        %v1056 = vunpack.c.l.b16 %v970
        %v1057 = vunpack.c.h.b16 %v970
        %v1058 = vunpack.c.l.b16 %v971
        %v1059 = vunpack.c.h.b16 %v971
        %v1060 = vunpack.c.l.b16 %v972
        %v1061 = vunpack.c.h.b16 %v972
        %v1062 = vunpack.c.l.b16 %v973
        %v1063 = vunpack.c.h.b16 %v973
        %v1064 = vunpack.c.l.b16 %v974
        %v1065 = vunpack.c.h.b16 %v974
        %v1066 = vunpack.c.l.b16 %v975
        %v1067 = vunpack.c.h.b16 %v975
        %v1068 = vunpack.c.l.b16 %v976
        %v1069 = vunpack.c.h.b16 %v976
        %v1070 = vunpack.c.l.b16 %v977
        %v1071 = vunpack.c.h.b16 %v977
        %v1072 = vunpack.c.l.b16 %v978
        %v1073 = vunpack.c.h.b16 %v978
        %v1074 = vunpack.c.l.b16 %v979
        %v1075 = vunpack.c.h.b16 %v979
        %v1076 = vpack.c.b16 %v1014, %v1012
        %v1077 = vpack.c.b16 %v1015, %v1013
        %v1078 = vpack.c.b16 %v1018, %v1016
        %v1079 = vpack.c.b16 %v1019, %v1017
        %v1080 = vpack.c.b16 %v1022, %v1020
        %v1081 = vpack.c.b16 %v1023, %v1021
        %v1082 = vpack.c.b16 %v1026, %v1024
        %v1083 = vpack.c.b16 %v1027, %v1025
        %v1084 = vpack.c.b16 %v1030, %v1028
        %v1085 = vpack.c.b16 %v1031, %v1029
        %v1086 = vpack.c.b16 %v1034, %v1032
        %v1087 = vpack.c.b16 %v1035, %v1033
        %v1088 = vpack.c.b16 %v1038, %v1036
        %v1089 = vpack.c.b16 %v1039, %v1037
        %v1090 = vpack.c.b16 %v1042, %v1040
        %v1091 = vpack.c.b16 %v1043, %v1041
        %v1092 = vpack.c.b16 %v1046, %v1044
        %v1093 = vpack.c.b16 %v1047, %v1045
        %v1094 = vpack.c.b16 %v1050, %v1048
        %v1095 = vpack.c.b16 %v1051, %v1049
        %v1096 = vpack.c.b16 %v1054, %v1052
        %v1097 = vpack.c.b16 %v1055, %v1053
        %v1098 = vpack.c.b16 %v1058, %v1056
        %v1099 = vpack.c.b16 %v1059, %v1057
        %v1100 = vpack.c.b16 %v1062, %v1060
        %v1101 = vpack.c.b16 %v1063, %v1061
        %v1102 = vpack.c.b16 %v1066, %v1064
        %v1103 = vpack.c.b16 %v1067, %v1065
        %v1104 = vpack.c.b16 %v1070, %v1068
        %v1105 = vpack.c.b16 %v1071, %v1069
        %v1106 = vpack.c.b16 %v1074, %v1072
        %v1107 = vpack.c.b16 %v1075, %v1073
        %1140 = vmatprep.subr.bf16.mxu0 0
        %1141 = vmatpush1.bf16.msra.mxu0 %v932
        %1142 = vmatprep.subr.bf16.mxu0 0
        %1143 = vmatpush1.bf16.msra.mxu0 %v933
        %1144 = vmatprep.subr.bf16.mxu0 0
        %1145 = vmatpush1.bf16.msra.mxu0 %v934
        %1146 = vmatprep.subr.bf16.mxu0 0
        %1147 = vmatpush1.bf16.msra.mxu0 %v935
        %1148 = vmatprep.subr.bf16.mxu0 0
        %1149 = vmatpush1.bf16.msra.mxu0 %v936
        %1150 = vmatprep.subr.bf16.mxu0 0
        %1151 = vmatpush1.bf16.msra.mxu0 %v937
        %1152 = vmatprep.subr.bf16.mxu0 0
        %1153 = vmatpush1.bf16.msra.mxu0 %v938
        %1154 = vmatprep.subr.bf16.mxu0 0
        %1155 = vmatpush1.bf16.msra.mxu0 %v939
        %1156 = vmatprep.subr.bf16.mxu0 0
        %1157 = vmatpush1.bf16.msra.mxu0 %v940
        %1158 = vmatprep.subr.bf16.mxu0 0
        %1159 = vmatpush1.bf16.msra.mxu0 %v941
        %1160 = vmatprep.subr.bf16.mxu0 0
        %1161 = vmatpush1.bf16.msra.mxu0 %v942
        %1162 = vmatprep.subr.bf16.mxu0 0
        %1163 = vmatpush1.bf16.msra.mxu0 %v943
        %1164 = vmatprep.subr.bf16.mxu0 0
        %1165 = vmatpush1.bf16.msra.mxu0 %v944
        %1166 = vmatprep.subr.bf16.mxu0 0
        %1167 = vmatpush1.bf16.msra.mxu0 %v945
        %1168 = vmatprep.subr.bf16.mxu0 0
        %1169 = vmatpush1.bf16.msra.mxu0 %v946
        %1170 = vmatprep.subr.bf16.mxu0 0
        %1171 = vmatpush1.bf16.msra.mxu0 %v947
        %1172 = vmatprep.mubr.bf16.mxu0 %v1077
        %1173 = vmatmul.mubr.bf16.gmra.mrb[0].mxu0 %v1076
        %v1174 = vpop.f32.mrb[0].mxu0
        %v1175 = vadd.f32 0.0, %v1174
        %v1176 = vpop.f32.mrb[0].mxu0
        %v1177 = vpop.f32.mrb[0].mxu0
        %v1178 = vadd.f32 0.0, %v1177
        %v1179 = vpop.f32.mrb[0].mxu0
        %1180 = vmatprep.mubr.bf16.mxu0 %v1079
        %1181 = vmatmul.mubr.bf16.gmra.mrb[0].mxu0 %v1078
        %v1182 = vpop.f32.mrb[0].mxu0
        %v1183 = vadd.f32 0.0, %v1182
        %v1184 = vpop.f32.mrb[0].mxu0
        %v1185 = vpop.f32.mrb[0].mxu0
        %v1186 = vadd.f32 0.0, %v1185
        %v1187 = vpop.f32.mrb[0].mxu0
        %1188 = vmatprep.mubr.bf16.mxu0 %v1081
        %1189 = vmatmul.mubr.bf16.gmra.mrb[0].mxu0 %v1080
        %v1190 = vpop.f32.mrb[0].mxu0
        %v1191 = vadd.f32 0.0, %v1190
        %v1192 = vpop.f32.mrb[0].mxu0
        %v1193 = vpop.f32.mrb[0].mxu0
        %v1194 = vadd.f32 0.0, %v1193
        %v1195 = vpop.f32.mrb[0].mxu0
        %1196 = vmatprep.mubr.bf16.mxu0 %v1083
        %1197 = vmatmul.mubr.bf16.gmra.mrb[0].mxu0 %v1082
        %v1198 = vpop.f32.mrb[0].mxu0
        %v1199 = vadd.f32 0.0, %v1198
        %v1200 = vpop.f32.mrb[0].mxu0
        %v1201 = vpop.f32.mrb[0].mxu0
        %v1202 = vadd.f32 0.0, %v1201
        %v1203 = vpop.f32.mrb[0].mxu0
        %1204 = vmatprep.mubr.bf16.mxu0 %v1085
        %1205 = vmatmul.mubr.bf16.gmra.mrb[0].mxu0 %v1084
        %v1206 = vpop.f32.mrb[0].mxu0
        %v1207 = vadd.f32 0.0, %v1206
        %v1208 = vpop.f32.mrb[0].mxu0
        %v1209 = vpop.f32.mrb[0].mxu0
        %v1210 = vadd.f32 0.0, %v1209
        %v1211 = vpop.f32.mrb[0].mxu0
        %1212 = vmatprep.mubr.bf16.mxu0 %v1087
        %1213 = vmatmul.mubr.bf16.gmra.mrb[0].mxu0 %v1086
        %v1214 = vpop.f32.mrb[0].mxu0
        %v1215 = vadd.f32 0.0, %v1214
        %v1216 = vpop.f32.mrb[0].mxu0
        %v1217 = vpop.f32.mrb[0].mxu0
        %v1218 = vadd.f32 0.0, %v1217
        %v1219 = vpop.f32.mrb[0].mxu0
        %1220 = vmatprep.mubr.bf16.mxu0 %v1089
        %1221 = vmatmul.mubr.bf16.gmra.mrb[0].mxu0 %v1088
        %v1222 = vpop.f32.mrb[0].mxu0
        %v1223 = vadd.f32 0.0, %v1222
        %v1224 = vpop.f32.mrb[0].mxu0
        %v1225 = vpop.f32.mrb[0].mxu0
        %v1226 = vadd.f32 0.0, %v1225
        %v1227 = vpop.f32.mrb[0].mxu0
        %1228 = vmatprep.mubr.bf16.mxu0 %v1091
        %1229 = vmatmul.mubr.bf16.gmra.mrb[0].mxu0 %v1090
        %v1230 = vpop.f32.mrb[0].mxu0
        %v1231 = vadd.f32 0.0, %v1230
        %v1232 = vpop.f32.mrb[0].mxu0
        %v1233 = vpop.f32.mrb[0].mxu0
        %v1234 = vadd.f32 0.0, %v1233
        %v1235 = vpop.f32.mrb[0].mxu0
        %1236 = vmatprep.mubr.bf16.mxu0 %v1093
        %1237 = vmatmul.mubr.bf16.gmra.mrb[0].mxu0 %v1092
        %v1238 = vpop.f32.mrb[0].mxu0
        %v1239 = vadd.f32 0.0, %v1238
        %v1240 = vpop.f32.mrb[0].mxu0
        %v1241 = vpop.f32.mrb[0].mxu0
        %v1242 = vadd.f32 0.0, %v1241
        %v1243 = vpop.f32.mrb[0].mxu0
        %1244 = vmatprep.mubr.bf16.mxu0 %v1095
        %1245 = vmatmul.mubr.bf16.gmra.mrb[0].mxu0 %v1094
        %v1246 = vpop.f32.mrb[0].mxu0
        %v1247 = vadd.f32 0.0, %v1246
        %v1248 = vpop.f32.mrb[0].mxu0
        %v1249 = vpop.f32.mrb[0].mxu0
        %v1250 = vadd.f32 0.0, %v1249
        %v1251 = vpop.f32.mrb[0].mxu0
        %1252 = vmatprep.mubr.bf16.mxu0 %v1097
        %1253 = vmatmul.mubr.bf16.gmra.mrb[0].mxu0 %v1096
        %v1254 = vpop.f32.mrb[0].mxu0
        %v1255 = vadd.f32 0.0, %v1254
        %v1256 = vpop.f32.mrb[0].mxu0
        %v1257 = vpop.f32.mrb[0].mxu0
        %v1258 = vadd.f32 0.0, %v1257
        %v1259 = vpop.f32.mrb[0].mxu0
        %1260 = vmatprep.mubr.bf16.mxu0 %v1099
        %1261 = vmatmul.mubr.bf16.gmra.mrb[0].mxu0 %v1098
        %v1262 = vpop.f32.mrb[0].mxu0
        %v1263 = vadd.f32 0.0, %v1262
        %v1264 = vpop.f32.mrb[0].mxu0
        %v1265 = vpop.f32.mrb[0].mxu0
        %v1266 = vadd.f32 0.0, %v1265
        %v1267 = vpop.f32.mrb[0].mxu0
        %1268 = vmatprep.mubr.bf16.mxu0 %v1101
        %1269 = vmatmul.mubr.bf16.gmra.mrb[0].mxu0 %v1100
        %v1270 = vpop.f32.mrb[0].mxu0
        %v1271 = vadd.f32 0.0, %v1270
        %v1272 = vpop.f32.mrb[0].mxu0
        %v1273 = vpop.f32.mrb[0].mxu0
        %v1274 = vadd.f32 0.0, %v1273
        %v1275 = vpop.f32.mrb[0].mxu0
        %1276 = vmatprep.mubr.bf16.mxu0 %v1103
        %1277 = vmatmul.mubr.bf16.gmra.mrb[0].mxu0 %v1102
        %v1278 = vpop.f32.mrb[0].mxu0
        %v1279 = vadd.f32 0.0, %v1278
        %v1280 = vpop.f32.mrb[0].mxu0
        %v1281 = vpop.f32.mrb[0].mxu0
        %v1282 = vadd.f32 0.0, %v1281
        %v1283 = vpop.f32.mrb[0].mxu0
        %1284 = vmatprep.mubr.bf16.mxu0 %v1105
        %1285 = vmatmul.mubr.bf16.gmra.mrb[0].mxu0 %v1104
        %v1286 = vpop.f32.mrb[0].mxu0
        %v1287 = vadd.f32 0.0, %v1286
        %v1288 = vpop.f32.mrb[0].mxu0
        %v1289 = vpop.f32.mrb[0].mxu0
        %v1290 = vadd.f32 0.0, %v1289
        %v1291 = vpop.f32.mrb[0].mxu0
        %1292 = vmatprep.mubr.bf16.mxu0 %v1107
        %1293 = vmatmul.mubr.bf16.gmra.mrb[0].mxu0 %v1106
        %v1294 = vpop.f32.mrb[0].mxu0
        %v1295 = vadd.f32 0.0, %v1294
        %v1296 = vpop.f32.mrb[0].mxu0
        %v1297 = vpop.f32.mrb[0].mxu0
        %v1298 = vadd.f32 0.0, %v1297
        %v1299 = vpop.f32.mrb[0].mxu0
        %1300 = vdwg.mxu0
        %1301 = vst.msk [vmem:[#allocation3] sm:$0xff] %vm584, %v1175
        %1302 = vst.msk [vmem:[#allocation3 + $0x8] sm:$0xff] %vm584, %v1178
        %s1303 = scalar_lea.vmem [#allocation3], 16
        %1304 = vst.msk [vmem:[%s1303] sm:$0xff] %vm584, %v1183
        %1305 = vst.msk [vmem:[%s1303 + $0x8] sm:$0xff] %vm584, %v1186
        %s1306 = scalar_lea.vmem [#allocation3], 32
        %1307 = vst.msk [vmem:[%s1306] sm:$0xff] %vm584, %v1191
        %1308 = vst.msk [vmem:[%s1306 + $0x8] sm:$0xff] %vm584, %v1194
        %s1309 = scalar_lea.vmem [#allocation3], 48
        %1310 = vst.msk [vmem:[%s1309] sm:$0xff] %vm584, %v1199
        %1311 = vst.msk [vmem:[%s1309 + $0x8] sm:$0xff] %vm584, %v1202
        %s1312 = scalar_lea.vmem [#allocation3], 64
        %1313 = vst.msk [vmem:[%s1312] sm:$0xff] %vm584, %v1207
        %1314 = vst.msk [vmem:[%s1312 + $0x8] sm:$0xff] %vm584, %v1210
        %s1315 = scalar_lea.vmem [#allocation3], 80
        %1316 = vst.msk [vmem:[%s1315] sm:$0xff] %vm584, %v1215
        %1317 = vst.msk [vmem:[%s1315 + $0x8] sm:$0xff] %vm584, %v1218
        %s1318 = scalar_lea.vmem [#allocation3], 96
        %1319 = vst.msk [vmem:[%s1318] sm:$0xff] %vm584, %v1223
        %1320 = vst.msk [vmem:[%s1318 + $0x8] sm:$0xff] %vm584, %v1226
        %s1321 = scalar_lea.vmem [#allocation3], 112
        %1322 = vst.msk [vmem:[%s1321] sm:$0xff] %vm584, %v1231
        %1323 = vst.msk [vmem:[%s1321 + $0x8] sm:$0xff] %vm584, %v1234
        %s1324 = scalar_lea.vmem [#allocation3], 128
        %1325 = vst.msk [vmem:[%s1324] sm:$0xff] %vm584, %v1239
        %1326 = vst.msk [vmem:[%s1324 + $0x8] sm:$0xff] %vm584, %v1242
        %s1327 = scalar_lea.vmem [#allocation3], 144
        %1328 = vst.msk [vmem:[%s1327] sm:$0xff] %vm584, %v1247
        %1329 = vst.msk [vmem:[%s1327 + $0x8] sm:$0xff] %vm584, %v1250
        %s1330 = scalar_lea.vmem [#allocation3], 160
        %1331 = vst.msk [vmem:[%s1330] sm:$0xff] %vm584, %v1255
        %1332 = vst.msk [vmem:[%s1330 + $0x8] sm:$0xff] %vm584, %v1258
        %s1333 = scalar_lea.vmem [#allocation3], 176
        %1334 = vst.msk [vmem:[%s1333] sm:$0xff] %vm584, %v1263
        %1335 = vst.msk [vmem:[%s1333 + $0x8] sm:$0xff] %vm584, %v1266
        %s1336 = scalar_lea.vmem [#allocation3], 192
        %1337 = vst.msk [vmem:[%s1336] sm:$0xff] %vm584, %v1271
        %1338 = vst.msk [vmem:[%s1336 + $0x8] sm:$0xff] %vm584, %v1274
        %s1339 = scalar_lea.vmem [#allocation3], 208
        %1340 = vst.msk [vmem:[%s1339] sm:$0xff] %vm584, %v1279
        %1341 = vst.msk [vmem:[%s1339 + $0x8] sm:$0xff] %vm584, %v1282
        %s1342 = scalar_lea.vmem [#allocation3], 224
        %1343 = vst.msk [vmem:[%s1342] sm:$0xff] %vm584, %v1287
        %1344 = vst.msk [vmem:[%s1342 + $0x8] sm:$0xff] %vm584, %v1290
        %s1345 = scalar_lea.vmem [#allocation3], 240
        %1346 = vst.msk [vmem:[%s1345] sm:$0xff] %vm584, %v1295
        %1347 = vst.msk [vmem:[%s1345 + $0x8] sm:$0xff] %vm584, %v1298
        %v1348 = vld [vmem:[#allocation3] sm:$0xff]
        %v1349 = vld [vmem:[#allocation3 + $0x8] sm:$0xff]
        %v1350 = vld [vmem:[#allocation3 + $0x10] sm:$0xff]
        %v1351 = vld [vmem:[#allocation3 + $0x18] sm:$0xff]
        %v1352 = vld [vmem:[#allocation3 + $0x20] sm:$0xff]
        %v1353 = vld [vmem:[#allocation3 + $0x28] sm:$0xff]
        %v1354 = vld [vmem:[#allocation3 + $0x30] sm:$0xff]
        %v1355 = vld [vmem:[#allocation3 + $0x38] sm:$0xff]
        %v1356 = vld [vmem:[#allocation3 + $0x40] sm:$0xff]
        %v1357 = vld [vmem:[#allocation3 + $0x48] sm:$0xff]
        %v1358 = vld [vmem:[#allocation3 + $0x50] sm:$0xff]
        %v1359 = vld [vmem:[#allocation3 + $0x58] sm:$0xff]
        %v1360 = vld [vmem:[#allocation3 + $0x60] sm:$0xff]
        %v1361 = vld [vmem:[#allocation3 + $0x68] sm:$0xff]
        %v1362 = vld [vmem:[#allocation3 + $0x70] sm:$0xff]
        %v1363 = vld [vmem:[#allocation3 + $0x78] sm:$0xff]
        %v1364 = vld [vmem:[#allocation3 + $0x80] sm:$0xff]
        %v1365 = vld [vmem:[#allocation3 + $0x88] sm:$0xff]
        %v1366 = vld [vmem:[#allocation3 + $0x90] sm:$0xff]
        %v1367 = vld [vmem:[#allocation3 + $0x98] sm:$0xff]
        %v1368 = vld [vmem:[#allocation3 + $0xa0] sm:$0xff]
        %v1369 = vld [vmem:[#allocation3 + $0xa8] sm:$0xff]
        %v1370 = vld [vmem:[#allocation3 + $0xb0] sm:$0xff]
        %v1371 = vld [vmem:[#allocation3 + $0xb8] sm:$0xff]
        %v1372 = vld [vmem:[#allocation3 + $0xc0] sm:$0xff]
        %v1373 = vld [vmem:[#allocation3 + $0xc8] sm:$0xff]
        %v1374 = vld [vmem:[#allocation3 + $0xd0] sm:$0xff]
        %v1375 = vld [vmem:[#allocation3 + $0xd8] sm:$0xff]
        %v1376 = vld [vmem:[#allocation3 + $0xe0] sm:$0xff]
        %v1377 = vld [vmem:[#allocation3 + $0xe8] sm:$0xff]
        %v1378 = vld [vmem:[#allocation3 + $0xf0] sm:$0xff]
        %v1379 = vld [vmem:[#allocation3 + $0xf8] sm:$0xff]
        %v1380 = vld [vmem:[%s358] sm:$0x7]
        %v1381 = vld [vmem:[%s358 + $0x4] sm:$0x7]
        %v1382 = vld [vmem:[%s358 + $0x8] sm:$0x7]
        %v1383 = vlaneseq
        %v1384 = vshrl.u32 %v1383, 7
        %v1385 = vsub.s32 0, %v1384
        %v1386 = vrot.slane %v1380, %v1385
        %v1387 = vmul.f32 %v1348, %v1386
        %v1388 = vmul.f32 %v1349, %v1386
        %v1389 = vmul.f32 %v1350, %v1386
        %v1390 = vmul.f32 %v1351, %v1386
        %v1391 = vmul.f32 %v1352, %v1386
        %v1392 = vmul.f32 %v1353, %v1386
        %v1393 = vmul.f32 %v1354, %v1386
        %v1394 = vmul.f32 %v1355, %v1386
        %v1395 = vmul.f32 %v1356, %v1386
        %v1396 = vmul.f32 %v1357, %v1386
        %v1397 = vmul.f32 %v1358, %v1386
        %v1398 = vmul.f32 %v1359, %v1386
        %v1399 = vmul.f32 %v1360, %v1386
        %v1400 = vmul.f32 %v1361, %v1386
        %v1401 = vmul.f32 %v1362, %v1386
        %v1402 = vmul.f32 %v1363, %v1386
        %v1403 = vmul.f32 %v1364, %v1386
        %v1404 = vmul.f32 %v1365, %v1386
        %v1405 = vmul.f32 %v1366, %v1386
        %v1406 = vmul.f32 %v1367, %v1386
        %v1407 = vmul.f32 %v1368, %v1386
        %v1408 = vmul.f32 %v1369, %v1386
        %v1409 = vmul.f32 %v1370, %v1386
        %v1410 = vmul.f32 %v1371, %v1386
        %v1411 = vmul.f32 %v1372, %v1386
        %v1412 = vmul.f32 %v1373, %v1386
        %v1413 = vmul.f32 %v1374, %v1386
        %v1414 = vmul.f32 %v1375, %v1386
        %v1415 = vadd.f32 %v1387, 0.0
        %v1416 = vadd.f32 %v1388, 0.0
        %v1417 = vadd.f32 %v1389, 0.0
        %v1418 = vadd.f32 %v1390, 0.0
        %v1419 = vadd.f32 %v1391, 0.0
        %v1420 = vadd.f32 %v1392, 0.0
        %v1421 = vadd.f32 %v1393, 0.0
        %v1422 = vadd.f32 %v1394, 0.0
        %v1423 = vadd.f32 %v1395, 0.0
        %v1424 = vadd.f32 %v1396, 0.0
        %v1425 = vadd.f32 %v1397, 0.0
        %v1426 = vadd.f32 %v1398, 0.0
        %v1427 = vadd.f32 %v1399, 0.0
        %v1428 = vadd.f32 %v1400, 0.0
        %v1429 = vadd.f32 %v1401, 0.0
        %v1430 = vadd.f32 %v1402, 0.0
        %v1431 = vadd.f32 %v1403, 0.0
        %v1432 = vadd.f32 %v1404, 0.0
        %v1433 = vadd.f32 %v1405, 0.0
        %v1434 = vadd.f32 %v1406, 0.0
        %v1435 = vadd.f32 %v1407, 0.0
        %v1436 = vadd.f32 %v1408, 0.0
        %v1437 = vadd.f32 %v1409, 0.0
        %v1438 = vadd.f32 %v1410, 0.0
        %v1439 = vadd.f32 %v1411, 0.0
        %v1440 = vadd.f32 %v1412, 0.0
        %v1441 = vadd.f32 %v1413, 0.0
        %v1442 = vadd.f32 %v1414, 0.0
        %v1443 = vlaneseq
        %v1444 = vshrl.u32 %v1443, 7
        %v1445 = vsub.s32 1, %v1444
        %v1446 = vrot.slane %v1380, %v1445
        %v1447 = vmul.f32 %v1348, %v1446
        %v1448 = vmul.f32 %v1349, %v1446
        %v1449 = vmul.f32 %v1350, %v1446
        %v1450 = vmul.f32 %v1351, %v1446
        %v1451 = vmul.f32 %v1352, %v1446
        %v1452 = vmul.f32 %v1353, %v1446
        %v1453 = vmul.f32 %v1354, %v1446
        %v1454 = vmul.f32 %v1355, %v1446
        %v1455 = vmul.f32 %v1356, %v1446
        %v1456 = vmul.f32 %v1357, %v1446
        %v1457 = vmul.f32 %v1358, %v1446
        %v1458 = vmul.f32 %v1359, %v1446
        %v1459 = vmul.f32 %v1360, %v1446
        %v1460 = vmul.f32 %v1361, %v1446
        %v1461 = vmul.f32 %v1362, %v1446
        %v1462 = vmul.f32 %v1363, %v1446
        %v1463 = vmul.f32 %v1364, %v1446
        %v1464 = vmul.f32 %v1365, %v1446
        %v1465 = vmul.f32 %v1366, %v1446
        %v1466 = vmul.f32 %v1367, %v1446
        %v1467 = vmul.f32 %v1368, %v1446
        %v1468 = vmul.f32 %v1369, %v1446
        %v1469 = vmul.f32 %v1370, %v1446
        %v1470 = vmul.f32 %v1371, %v1446
        %v1471 = vmul.f32 %v1372, %v1446
        %v1472 = vmul.f32 %v1373, %v1446
        %v1473 = vmul.f32 %v1374, %v1446
        %v1474 = vmul.f32 %v1375, %v1446
        %vm1503 = vcmask 1046528
        %v1504 = vrot.slane %v1447, 1
        %v1505 = vrot.slane %v1448, 1
        %v1506 = vsel %vm1503, %v1504, %v1505
        %v1507 = vrot.slane %v1449, 1
        %v1508 = vrot.slane %v1450, 1
        %v1509 = vsel %vm1503, %v1507, %v1508
        %v1510 = vrot.slane %v1451, 1
        %v1511 = vrot.slane %v1452, 1
        %v1512 = vsel %vm1503, %v1510, %v1511
        %v1513 = vrot.slane %v1453, 1
        %v1514 = vrot.slane %v1454, 1
        %v1515 = vsel %vm1503, %v1513, %v1514
        %v1516 = vrot.slane %v1455, 1
        %v1517 = vrot.slane %v1456, 1
        %v1518 = vsel %vm1503, %v1516, %v1517
        %v1519 = vrot.slane %v1457, 1
        %v1520 = vrot.slane %v1458, 1
        %v1521 = vsel %vm1503, %v1519, %v1520
        %v1522 = vrot.slane %v1459, 1
        %v1523 = vrot.slane %v1460, 1
        %v1524 = vsel %vm1503, %v1522, %v1523
        %v1525 = vrot.slane %v1461, 1
        %v1526 = vrot.slane %v1462, 1
        %v1527 = vsel %vm1503, %v1525, %v1526
        %v1528 = vrot.slane %v1463, 1
        %v1529 = vrot.slane %v1464, 1
        %v1530 = vsel %vm1503, %v1528, %v1529
        %v1531 = vrot.slane %v1465, 1
        %v1532 = vrot.slane %v1466, 1
        %v1533 = vsel %vm1503, %v1531, %v1532
        %v1534 = vrot.slane %v1467, 1
        %v1535 = vrot.slane %v1468, 1
        %v1536 = vsel %vm1503, %v1534, %v1535
        %v1537 = vrot.slane %v1469, 1
        %v1538 = vrot.slane %v1470, 1
        %v1539 = vsel %vm1503, %v1537, %v1538
        %v1540 = vrot.slane %v1471, 1
        %v1541 = vrot.slane %v1472, 1
        %v1542 = vsel %vm1503, %v1540, %v1541
        %v1543 = vrot.slane %v1473, 1
        %v1544 = vrot.slane %v1474, 1
        %v1545 = vsel %vm1503, %v1543, %v1544
        %v1574 = vadd.f32 %v1415, %v1506
        %v1575 = vadd.f32 %v1416, %v1505
        %v1576 = vadd.f32 %v1417, %v1509
        %v1577 = vadd.f32 %v1418, %v1508
        %v1578 = vadd.f32 %v1419, %v1512
        %v1579 = vadd.f32 %v1420, %v1511
        %v1580 = vadd.f32 %v1421, %v1515
        %v1581 = vadd.f32 %v1422, %v1514
        %v1582 = vadd.f32 %v1423, %v1518
        %v1583 = vadd.f32 %v1424, %v1517
        %v1584 = vadd.f32 %v1425, %v1521
        %v1585 = vadd.f32 %v1426, %v1520
        %v1586 = vadd.f32 %v1427, %v1524
        %v1587 = vadd.f32 %v1428, %v1523
        %v1588 = vadd.f32 %v1429, %v1527
        %v1589 = vadd.f32 %v1430, %v1526
        %v1590 = vadd.f32 %v1431, %v1530
        %v1591 = vadd.f32 %v1432, %v1529
        %v1592 = vadd.f32 %v1433, %v1533
        %v1593 = vadd.f32 %v1434, %v1532
        %v1594 = vadd.f32 %v1435, %v1536
        %v1595 = vadd.f32 %v1436, %v1535
        %v1596 = vadd.f32 %v1437, %v1539
        %v1597 = vadd.f32 %v1438, %v1538
        %v1598 = vadd.f32 %v1439, %v1542
        %v1599 = vadd.f32 %v1440, %v1541
        %v1600 = vadd.f32 %v1441, %v1545
        %v1601 = vadd.f32 %v1442, %v1544
        %v1602 = vlaneseq
        %v1603 = vshrl.u32 %v1602, 7
        %v1604 = vsub.s32 2, %v1603
        %v1605 = vrot.slane %v1380, %v1604
        %v1606 = vmul.f32 %v1348, %v1605
        %v1607 = vmul.f32 %v1349, %v1605
        %v1608 = vmul.f32 %v1350, %v1605
        %v1609 = vmul.f32 %v1351, %v1605
        %v1610 = vmul.f32 %v1352, %v1605
        %v1611 = vmul.f32 %v1353, %v1605
        %v1612 = vmul.f32 %v1354, %v1605
        %v1613 = vmul.f32 %v1355, %v1605
        %v1614 = vmul.f32 %v1356, %v1605
        %v1615 = vmul.f32 %v1357, %v1605
        %v1616 = vmul.f32 %v1358, %v1605
        %v1617 = vmul.f32 %v1359, %v1605
        %v1618 = vmul.f32 %v1360, %v1605
        %v1619 = vmul.f32 %v1361, %v1605
        %v1620 = vmul.f32 %v1362, %v1605
        %v1621 = vmul.f32 %v1363, %v1605
        %v1622 = vmul.f32 %v1364, %v1605
        %v1623 = vmul.f32 %v1365, %v1605
        %v1624 = vmul.f32 %v1366, %v1605
        %v1625 = vmul.f32 %v1367, %v1605
        %v1626 = vmul.f32 %v1368, %v1605
        %v1627 = vmul.f32 %v1369, %v1605
        %v1628 = vmul.f32 %v1370, %v1605
        %v1629 = vmul.f32 %v1371, %v1605
        %v1630 = vmul.f32 %v1372, %v1605
        %v1631 = vmul.f32 %v1373, %v1605
        %v1632 = vmul.f32 %v1374, %v1605
        %v1633 = vmul.f32 %v1375, %v1605
        %vm1662 = vcmask 1045504
        %v1663 = vrot.slane %v1606, 2
        %v1664 = vrot.slane %v1607, 2
        %v1665 = vsel %vm1662, %v1663, %v1664
        %v1666 = vrot.slane %v1608, 2
        %v1667 = vrot.slane %v1609, 2
        %v1668 = vsel %vm1662, %v1666, %v1667
        %v1669 = vrot.slane %v1610, 2
        %v1670 = vrot.slane %v1611, 2
        %v1671 = vsel %vm1662, %v1669, %v1670
        %v1672 = vrot.slane %v1612, 2
        %v1673 = vrot.slane %v1613, 2
        %v1674 = vsel %vm1662, %v1672, %v1673
        %v1675 = vrot.slane %v1614, 2
        %v1676 = vrot.slane %v1615, 2
        %v1677 = vsel %vm1662, %v1675, %v1676
        %v1678 = vrot.slane %v1616, 2
        %v1679 = vrot.slane %v1617, 2
        %v1680 = vsel %vm1662, %v1678, %v1679
        %v1681 = vrot.slane %v1618, 2
        %v1682 = vrot.slane %v1619, 2
        %v1683 = vsel %vm1662, %v1681, %v1682
        %v1684 = vrot.slane %v1620, 2
        %v1685 = vrot.slane %v1621, 2
        %v1686 = vsel %vm1662, %v1684, %v1685
        %v1687 = vrot.slane %v1622, 2
        %v1688 = vrot.slane %v1623, 2
        %v1689 = vsel %vm1662, %v1687, %v1688
        %v1690 = vrot.slane %v1624, 2
        %v1691 = vrot.slane %v1625, 2
        %v1692 = vsel %vm1662, %v1690, %v1691
        %v1693 = vrot.slane %v1626, 2
        %v1694 = vrot.slane %v1627, 2
        %v1695 = vsel %vm1662, %v1693, %v1694
        %v1696 = vrot.slane %v1628, 2
        %v1697 = vrot.slane %v1629, 2
        %v1698 = vsel %vm1662, %v1696, %v1697
        %v1699 = vrot.slane %v1630, 2
        %v1700 = vrot.slane %v1631, 2
        %v1701 = vsel %vm1662, %v1699, %v1700
        %v1702 = vrot.slane %v1632, 2
        %v1703 = vrot.slane %v1633, 2
        %v1704 = vsel %vm1662, %v1702, %v1703
        %v1733 = vadd.f32 %v1574, %v1665
        %v1734 = vadd.f32 %v1575, %v1664
        %v1735 = vadd.f32 %v1576, %v1668
        %v1736 = vadd.f32 %v1577, %v1667
        %v1737 = vadd.f32 %v1578, %v1671
        %v1738 = vadd.f32 %v1579, %v1670
        %v1739 = vadd.f32 %v1580, %v1674
        %v1740 = vadd.f32 %v1581, %v1673
        %v1741 = vadd.f32 %v1582, %v1677
        %v1742 = vadd.f32 %v1583, %v1676
        %v1743 = vadd.f32 %v1584, %v1680
        %v1744 = vadd.f32 %v1585, %v1679
        %v1745 = vadd.f32 %v1586, %v1683
        %v1746 = vadd.f32 %v1587, %v1682
        %v1747 = vadd.f32 %v1588, %v1686
        %v1748 = vadd.f32 %v1589, %v1685
        %v1749 = vadd.f32 %v1590, %v1689
        %v1750 = vadd.f32 %v1591, %v1688
        %v1751 = vadd.f32 %v1592, %v1692
        %v1752 = vadd.f32 %v1593, %v1691
        %v1753 = vadd.f32 %v1594, %v1695
        %v1754 = vadd.f32 %v1595, %v1694
        %v1755 = vadd.f32 %v1596, %v1698
        %v1756 = vadd.f32 %v1597, %v1697
        %v1757 = vadd.f32 %v1598, %v1701
        %v1758 = vadd.f32 %v1599, %v1700
        %v1759 = vadd.f32 %v1600, %v1704
        %v1760 = vadd.f32 %v1601, %v1703
        %v1761 = vlaneseq
        %v1762 = vshrl.u32 %v1761, 7
        %v1763 = vsub.s32 0, %v1762
        %v1764 = vrot.slane %v1381, %v1763
        %v1765 = vmul.f32 %v1350, %v1764
        %v1766 = vmul.f32 %v1351, %v1764
        %v1767 = vmul.f32 %v1352, %v1764
        %v1768 = vmul.f32 %v1353, %v1764
        %v1769 = vmul.f32 %v1354, %v1764
        %v1770 = vmul.f32 %v1355, %v1764
        %v1771 = vmul.f32 %v1356, %v1764
        %v1772 = vmul.f32 %v1357, %v1764
        %v1773 = vmul.f32 %v1358, %v1764
        %v1774 = vmul.f32 %v1359, %v1764
        %v1775 = vmul.f32 %v1360, %v1764
        %v1776 = vmul.f32 %v1361, %v1764
        %v1777 = vmul.f32 %v1362, %v1764
        %v1778 = vmul.f32 %v1363, %v1764
        %v1779 = vmul.f32 %v1364, %v1764
        %v1780 = vmul.f32 %v1365, %v1764
        %v1781 = vmul.f32 %v1366, %v1764
        %v1782 = vmul.f32 %v1367, %v1764
        %v1783 = vmul.f32 %v1368, %v1764
        %v1784 = vmul.f32 %v1369, %v1764
        %v1785 = vmul.f32 %v1370, %v1764
        %v1786 = vmul.f32 %v1371, %v1764
        %v1787 = vmul.f32 %v1372, %v1764
        %v1788 = vmul.f32 %v1373, %v1764
        %v1789 = vmul.f32 %v1374, %v1764
        %v1790 = vmul.f32 %v1375, %v1764
        %v1791 = vmul.f32 %v1376, %v1764
        %v1792 = vmul.f32 %v1377, %v1764
        %v1793 = vadd.f32 %v1733, %v1765
        %v1794 = vadd.f32 %v1734, %v1766
        %v1795 = vadd.f32 %v1735, %v1767
        %v1796 = vadd.f32 %v1736, %v1768
        %v1797 = vadd.f32 %v1737, %v1769
        %v1798 = vadd.f32 %v1738, %v1770
        %v1799 = vadd.f32 %v1739, %v1771
        %v1800 = vadd.f32 %v1740, %v1772
        %v1801 = vadd.f32 %v1741, %v1773
        %v1802 = vadd.f32 %v1742, %v1774
        %v1803 = vadd.f32 %v1743, %v1775
        %v1804 = vadd.f32 %v1744, %v1776
        %v1805 = vadd.f32 %v1745, %v1777
        %v1806 = vadd.f32 %v1746, %v1778
        %v1807 = vadd.f32 %v1747, %v1779
        %v1808 = vadd.f32 %v1748, %v1780
        %v1809 = vadd.f32 %v1749, %v1781
        %v1810 = vadd.f32 %v1750, %v1782
        %v1811 = vadd.f32 %v1751, %v1783
        %v1812 = vadd.f32 %v1752, %v1784
        %v1813 = vadd.f32 %v1753, %v1785
        %v1814 = vadd.f32 %v1754, %v1786
        %v1815 = vadd.f32 %v1755, %v1787
        %v1816 = vadd.f32 %v1756, %v1788
        %v1817 = vadd.f32 %v1757, %v1789
        %v1818 = vadd.f32 %v1758, %v1790
        %v1819 = vadd.f32 %v1759, %v1791
        %v1820 = vadd.f32 %v1760, %v1792
        %v1821 = vlaneseq
        %v1822 = vshrl.u32 %v1821, 7
        %v1823 = vsub.s32 1, %v1822
        %v1824 = vrot.slane %v1381, %v1823
        %v1825 = vmul.f32 %v1350, %v1824
        %v1826 = vmul.f32 %v1351, %v1824
        %v1827 = vmul.f32 %v1352, %v1824
        %v1828 = vmul.f32 %v1353, %v1824
        %v1829 = vmul.f32 %v1354, %v1824
        %v1830 = vmul.f32 %v1355, %v1824
        %v1831 = vmul.f32 %v1356, %v1824
        %v1832 = vmul.f32 %v1357, %v1824
        %v1833 = vmul.f32 %v1358, %v1824
        %v1834 = vmul.f32 %v1359, %v1824
        %v1835 = vmul.f32 %v1360, %v1824
        %v1836 = vmul.f32 %v1361, %v1824
        %v1837 = vmul.f32 %v1362, %v1824
        %v1838 = vmul.f32 %v1363, %v1824
        %v1839 = vmul.f32 %v1364, %v1824
        %v1840 = vmul.f32 %v1365, %v1824
        %v1841 = vmul.f32 %v1366, %v1824
        %v1842 = vmul.f32 %v1367, %v1824
        %v1843 = vmul.f32 %v1368, %v1824
        %v1844 = vmul.f32 %v1369, %v1824
        %v1845 = vmul.f32 %v1370, %v1824
        %v1846 = vmul.f32 %v1371, %v1824
        %v1847 = vmul.f32 %v1372, %v1824
        %v1848 = vmul.f32 %v1373, %v1824
        %v1849 = vmul.f32 %v1374, %v1824
        %v1850 = vmul.f32 %v1375, %v1824
        %v1851 = vmul.f32 %v1376, %v1824
        %v1852 = vmul.f32 %v1377, %v1824
        %v1881 = vrot.slane %v1825, 1
        %v1882 = vrot.slane %v1826, 1
        %v1883 = vsel %vm1503, %v1881, %v1882
        %v1884 = vrot.slane %v1827, 1
        %v1885 = vrot.slane %v1828, 1
        %v1886 = vsel %vm1503, %v1884, %v1885
        %v1887 = vrot.slane %v1829, 1
        %v1888 = vrot.slane %v1830, 1
        %v1889 = vsel %vm1503, %v1887, %v1888
        %v1890 = vrot.slane %v1831, 1
        %v1891 = vrot.slane %v1832, 1
        %v1892 = vsel %vm1503, %v1890, %v1891
        %v1893 = vrot.slane %v1833, 1
        %v1894 = vrot.slane %v1834, 1
        %v1895 = vsel %vm1503, %v1893, %v1894
        %v1896 = vrot.slane %v1835, 1
        %v1897 = vrot.slane %v1836, 1
        %v1898 = vsel %vm1503, %v1896, %v1897
        %v1899 = vrot.slane %v1837, 1
        %v1900 = vrot.slane %v1838, 1
        %v1901 = vsel %vm1503, %v1899, %v1900
        %v1902 = vrot.slane %v1839, 1
        %v1903 = vrot.slane %v1840, 1
        %v1904 = vsel %vm1503, %v1902, %v1903
        %v1905 = vrot.slane %v1841, 1
        %v1906 = vrot.slane %v1842, 1
        %v1907 = vsel %vm1503, %v1905, %v1906
        %v1908 = vrot.slane %v1843, 1
        %v1909 = vrot.slane %v1844, 1
        %v1910 = vsel %vm1503, %v1908, %v1909
        %v1911 = vrot.slane %v1845, 1
        %v1912 = vrot.slane %v1846, 1
        %v1913 = vsel %vm1503, %v1911, %v1912
        %v1914 = vrot.slane %v1847, 1
        %v1915 = vrot.slane %v1848, 1
        %v1916 = vsel %vm1503, %v1914, %v1915
        %v1917 = vrot.slane %v1849, 1
        %v1918 = vrot.slane %v1850, 1
        %v1919 = vsel %vm1503, %v1917, %v1918
        %v1920 = vrot.slane %v1851, 1
        %v1921 = vrot.slane %v1852, 1
        %v1922 = vsel %vm1503, %v1920, %v1921
        %v1951 = vadd.f32 %v1793, %v1883
        %v1952 = vadd.f32 %v1794, %v1882
        %v1953 = vadd.f32 %v1795, %v1886
        %v1954 = vadd.f32 %v1796, %v1885
        %v1955 = vadd.f32 %v1797, %v1889
        %v1956 = vadd.f32 %v1798, %v1888
        %v1957 = vadd.f32 %v1799, %v1892
        %v1958 = vadd.f32 %v1800, %v1891
        %v1959 = vadd.f32 %v1801, %v1895
        %v1960 = vadd.f32 %v1802, %v1894
        %v1961 = vadd.f32 %v1803, %v1898
        %v1962 = vadd.f32 %v1804, %v1897
        %v1963 = vadd.f32 %v1805, %v1901
        %v1964 = vadd.f32 %v1806, %v1900
        %v1965 = vadd.f32 %v1807, %v1904
        %v1966 = vadd.f32 %v1808, %v1903
        %v1967 = vadd.f32 %v1809, %v1907
        %v1968 = vadd.f32 %v1810, %v1906
        %v1969 = vadd.f32 %v1811, %v1910
        %v1970 = vadd.f32 %v1812, %v1909
        %v1971 = vadd.f32 %v1813, %v1913
        %v1972 = vadd.f32 %v1814, %v1912
        %v1973 = vadd.f32 %v1815, %v1916
        %v1974 = vadd.f32 %v1816, %v1915
        %v1975 = vadd.f32 %v1817, %v1919
        %v1976 = vadd.f32 %v1818, %v1918
        %v1977 = vadd.f32 %v1819, %v1922
        %v1978 = vadd.f32 %v1820, %v1921
        %v1979 = vlaneseq
        %v1980 = vshrl.u32 %v1979, 7
        %v1981 = vsub.s32 2, %v1980
        %v1982 = vrot.slane %v1381, %v1981
        %v1983 = vmul.f32 %v1350, %v1982
        %v1984 = vmul.f32 %v1351, %v1982
        %v1985 = vmul.f32 %v1352, %v1982
        %v1986 = vmul.f32 %v1353, %v1982
        %v1987 = vmul.f32 %v1354, %v1982
        %v1988 = vmul.f32 %v1355, %v1982
        %v1989 = vmul.f32 %v1356, %v1982
        %v1990 = vmul.f32 %v1357, %v1982
        %v1991 = vmul.f32 %v1358, %v1982
        %v1992 = vmul.f32 %v1359, %v1982
        %v1993 = vmul.f32 %v1360, %v1982
        %v1994 = vmul.f32 %v1361, %v1982
        %v1995 = vmul.f32 %v1362, %v1982
        %v1996 = vmul.f32 %v1363, %v1982
        %v1997 = vmul.f32 %v1364, %v1982
        %v1998 = vmul.f32 %v1365, %v1982
        %v1999 = vmul.f32 %v1366, %v1982
        %v2000 = vmul.f32 %v1367, %v1982
        %v2001 = vmul.f32 %v1368, %v1982
        %v2002 = vmul.f32 %v1369, %v1982
        %v2003 = vmul.f32 %v1370, %v1982
        %v2004 = vmul.f32 %v1371, %v1982
        %v2005 = vmul.f32 %v1372, %v1982
        %v2006 = vmul.f32 %v1373, %v1982
        %v2007 = vmul.f32 %v1374, %v1982
        %v2008 = vmul.f32 %v1375, %v1982
        %v2009 = vmul.f32 %v1376, %v1982
        %v2010 = vmul.f32 %v1377, %v1982
        %v2039 = vrot.slane %v1983, 2
        %v2040 = vrot.slane %v1984, 2
        %v2041 = vsel %vm1662, %v2039, %v2040
        %v2042 = vrot.slane %v1985, 2
        %v2043 = vrot.slane %v1986, 2
        %v2044 = vsel %vm1662, %v2042, %v2043
        %v2045 = vrot.slane %v1987, 2
        %v2046 = vrot.slane %v1988, 2
        %v2047 = vsel %vm1662, %v2045, %v2046
        %v2048 = vrot.slane %v1989, 2
        %v2049 = vrot.slane %v1990, 2
        %v2050 = vsel %vm1662, %v2048, %v2049
        %v2051 = vrot.slane %v1991, 2
        %v2052 = vrot.slane %v1992, 2
        %v2053 = vsel %vm1662, %v2051, %v2052
        %v2054 = vrot.slane %v1993, 2
        %v2055 = vrot.slane %v1994, 2
        %v2056 = vsel %vm1662, %v2054, %v2055
        %v2057 = vrot.slane %v1995, 2
        %v2058 = vrot.slane %v1996, 2
        %v2059 = vsel %vm1662, %v2057, %v2058
        %v2060 = vrot.slane %v1997, 2
        %v2061 = vrot.slane %v1998, 2
        %v2062 = vsel %vm1662, %v2060, %v2061
        %v2063 = vrot.slane %v1999, 2
        %v2064 = vrot.slane %v2000, 2
        %v2065 = vsel %vm1662, %v2063, %v2064
        %v2066 = vrot.slane %v2001, 2
        %v2067 = vrot.slane %v2002, 2
        %v2068 = vsel %vm1662, %v2066, %v2067
        %v2069 = vrot.slane %v2003, 2
        %v2070 = vrot.slane %v2004, 2
        %v2071 = vsel %vm1662, %v2069, %v2070
        %v2072 = vrot.slane %v2005, 2
        %v2073 = vrot.slane %v2006, 2
        %v2074 = vsel %vm1662, %v2072, %v2073
        %v2075 = vrot.slane %v2007, 2
        %v2076 = vrot.slane %v2008, 2
        %v2077 = vsel %vm1662, %v2075, %v2076
        %v2078 = vrot.slane %v2009, 2
        %v2079 = vrot.slane %v2010, 2
        %v2080 = vsel %vm1662, %v2078, %v2079
        %v2109 = vadd.f32 %v1951, %v2041
        %v2110 = vadd.f32 %v1952, %v2040
        %v2111 = vadd.f32 %v1953, %v2044
        %v2112 = vadd.f32 %v1954, %v2043
        %v2113 = vadd.f32 %v1955, %v2047
        %v2114 = vadd.f32 %v1956, %v2046
        %v2115 = vadd.f32 %v1957, %v2050
        %v2116 = vadd.f32 %v1958, %v2049
        %v2117 = vadd.f32 %v1959, %v2053
        %v2118 = vadd.f32 %v1960, %v2052
        %v2119 = vadd.f32 %v1961, %v2056
        %v2120 = vadd.f32 %v1962, %v2055
        %v2121 = vadd.f32 %v1963, %v2059
        %v2122 = vadd.f32 %v1964, %v2058
        %v2123 = vadd.f32 %v1965, %v2062
        %v2124 = vadd.f32 %v1966, %v2061
        %v2125 = vadd.f32 %v1967, %v2065
        %v2126 = vadd.f32 %v1968, %v2064
        %v2127 = vadd.f32 %v1969, %v2068
        %v2128 = vadd.f32 %v1970, %v2067
        %v2129 = vadd.f32 %v1971, %v2071
        %v2130 = vadd.f32 %v1972, %v2070
        %v2131 = vadd.f32 %v1973, %v2074
        %v2132 = vadd.f32 %v1974, %v2073
        %v2133 = vadd.f32 %v1975, %v2077
        %v2134 = vadd.f32 %v1976, %v2076
        %v2135 = vadd.f32 %v1977, %v2080
        %v2136 = vadd.f32 %v1978, %v2079
        %v2137 = vlaneseq
        %v2138 = vshrl.u32 %v2137, 7
        %v2139 = vsub.s32 0, %v2138
        %v2140 = vrot.slane %v1382, %v2139
        %v2141 = vmul.f32 %v1352, %v2140
        %v2142 = vmul.f32 %v1353, %v2140
        %v2143 = vmul.f32 %v1354, %v2140
        %v2144 = vmul.f32 %v1355, %v2140
        %v2145 = vmul.f32 %v1356, %v2140
        %v2146 = vmul.f32 %v1357, %v2140
        %v2147 = vmul.f32 %v1358, %v2140
        %v2148 = vmul.f32 %v1359, %v2140
        %v2149 = vmul.f32 %v1360, %v2140
        %v2150 = vmul.f32 %v1361, %v2140
        %v2151 = vmul.f32 %v1362, %v2140
        %v2152 = vmul.f32 %v1363, %v2140
        %v2153 = vmul.f32 %v1364, %v2140
        %v2154 = vmul.f32 %v1365, %v2140
        %v2155 = vmul.f32 %v1366, %v2140
        %v2156 = vmul.f32 %v1367, %v2140
        %v2157 = vmul.f32 %v1368, %v2140
        %v2158 = vmul.f32 %v1369, %v2140
        %v2159 = vmul.f32 %v1370, %v2140
        %v2160 = vmul.f32 %v1371, %v2140
        %v2161 = vmul.f32 %v1372, %v2140
        %v2162 = vmul.f32 %v1373, %v2140
        %v2163 = vmul.f32 %v1374, %v2140
        %v2164 = vmul.f32 %v1375, %v2140
        %v2165 = vmul.f32 %v1376, %v2140
        %v2166 = vmul.f32 %v1377, %v2140
        %v2167 = vmul.f32 %v1378, %v2140
        %v2168 = vmul.f32 %v1379, %v2140
        %v2169 = vadd.f32 %v2109, %v2141
        %v2170 = vadd.f32 %v2110, %v2142
        %v2171 = vadd.f32 %v2111, %v2143
        %v2172 = vadd.f32 %v2112, %v2144
        %v2173 = vadd.f32 %v2113, %v2145
        %v2174 = vadd.f32 %v2114, %v2146
        %v2175 = vadd.f32 %v2115, %v2147
        %v2176 = vadd.f32 %v2116, %v2148
        %v2177 = vadd.f32 %v2117, %v2149
        %v2178 = vadd.f32 %v2118, %v2150
        %v2179 = vadd.f32 %v2119, %v2151
        %v2180 = vadd.f32 %v2120, %v2152
        %v2181 = vadd.f32 %v2121, %v2153
        %v2182 = vadd.f32 %v2122, %v2154
        %v2183 = vadd.f32 %v2123, %v2155
        %v2184 = vadd.f32 %v2124, %v2156
        %v2185 = vadd.f32 %v2125, %v2157
        %v2186 = vadd.f32 %v2126, %v2158
        %v2187 = vadd.f32 %v2127, %v2159
        %v2188 = vadd.f32 %v2128, %v2160
        %v2189 = vadd.f32 %v2129, %v2161
        %v2190 = vadd.f32 %v2130, %v2162
        %v2191 = vadd.f32 %v2131, %v2163
        %v2192 = vadd.f32 %v2132, %v2164
        %v2193 = vadd.f32 %v2133, %v2165
        %v2194 = vadd.f32 %v2134, %v2166
        %v2195 = vadd.f32 %v2135, %v2167
        %v2196 = vadd.f32 %v2136, %v2168
        %v2197 = vlaneseq
        %v2198 = vshrl.u32 %v2197, 7
        %v2199 = vsub.s32 1, %v2198
        %v2200 = vrot.slane %v1382, %v2199
        %v2201 = vmul.f32 %v1352, %v2200
        %v2202 = vmul.f32 %v1353, %v2200
        %v2203 = vmul.f32 %v1354, %v2200
        %v2204 = vmul.f32 %v1355, %v2200
        %v2205 = vmul.f32 %v1356, %v2200
        %v2206 = vmul.f32 %v1357, %v2200
        %v2207 = vmul.f32 %v1358, %v2200
        %v2208 = vmul.f32 %v1359, %v2200
        %v2209 = vmul.f32 %v1360, %v2200
        %v2210 = vmul.f32 %v1361, %v2200
        %v2211 = vmul.f32 %v1362, %v2200
        %v2212 = vmul.f32 %v1363, %v2200
        %v2213 = vmul.f32 %v1364, %v2200
        %v2214 = vmul.f32 %v1365, %v2200
        %v2215 = vmul.f32 %v1366, %v2200
        %v2216 = vmul.f32 %v1367, %v2200
        %v2217 = vmul.f32 %v1368, %v2200
        %v2218 = vmul.f32 %v1369, %v2200
        %v2219 = vmul.f32 %v1370, %v2200
        %v2220 = vmul.f32 %v1371, %v2200
        %v2221 = vmul.f32 %v1372, %v2200
        %v2222 = vmul.f32 %v1373, %v2200
        %v2223 = vmul.f32 %v1374, %v2200
        %v2224 = vmul.f32 %v1375, %v2200
        %v2225 = vmul.f32 %v1376, %v2200
        %v2226 = vmul.f32 %v1377, %v2200
        %v2227 = vmul.f32 %v1378, %v2200
        %v2228 = vmul.f32 %v1379, %v2200
        %v2257 = vrot.slane %v2201, 1
        %v2258 = vrot.slane %v2202, 1
        %v2259 = vsel %vm1503, %v2257, %v2258
        %v2260 = vrot.slane %v2203, 1
        %v2261 = vrot.slane %v2204, 1
        %v2262 = vsel %vm1503, %v2260, %v2261
        %v2263 = vrot.slane %v2205, 1
        %v2264 = vrot.slane %v2206, 1
        %v2265 = vsel %vm1503, %v2263, %v2264
        %v2266 = vrot.slane %v2207, 1
        %v2267 = vrot.slane %v2208, 1
        %v2268 = vsel %vm1503, %v2266, %v2267
        %v2269 = vrot.slane %v2209, 1
        %v2270 = vrot.slane %v2210, 1
        %v2271 = vsel %vm1503, %v2269, %v2270
        %v2272 = vrot.slane %v2211, 1
        %v2273 = vrot.slane %v2212, 1
        %v2274 = vsel %vm1503, %v2272, %v2273
        %v2275 = vrot.slane %v2213, 1
        %v2276 = vrot.slane %v2214, 1
        %v2277 = vsel %vm1503, %v2275, %v2276
        %v2278 = vrot.slane %v2215, 1
        %v2279 = vrot.slane %v2216, 1
        %v2280 = vsel %vm1503, %v2278, %v2279
        %v2281 = vrot.slane %v2217, 1
        %v2282 = vrot.slane %v2218, 1
        %v2283 = vsel %vm1503, %v2281, %v2282
        %v2284 = vrot.slane %v2219, 1
        %v2285 = vrot.slane %v2220, 1
        %v2286 = vsel %vm1503, %v2284, %v2285
        %v2287 = vrot.slane %v2221, 1
        %v2288 = vrot.slane %v2222, 1
        %v2289 = vsel %vm1503, %v2287, %v2288
        %v2290 = vrot.slane %v2223, 1
        %v2291 = vrot.slane %v2224, 1
        %v2292 = vsel %vm1503, %v2290, %v2291
        %v2293 = vrot.slane %v2225, 1
        %v2294 = vrot.slane %v2226, 1
        %v2295 = vsel %vm1503, %v2293, %v2294
        %v2296 = vrot.slane %v2227, 1
        %v2297 = vrot.slane %v2228, 1
        %v2298 = vsel %vm1503, %v2296, %v2297
        %v2327 = vadd.f32 %v2169, %v2259
        %v2328 = vadd.f32 %v2170, %v2258
        %v2329 = vadd.f32 %v2171, %v2262
        %v2330 = vadd.f32 %v2172, %v2261
        %v2331 = vadd.f32 %v2173, %v2265
        %v2332 = vadd.f32 %v2174, %v2264
        %v2333 = vadd.f32 %v2175, %v2268
        %v2334 = vadd.f32 %v2176, %v2267
        %v2335 = vadd.f32 %v2177, %v2271
        %v2336 = vadd.f32 %v2178, %v2270
        %v2337 = vadd.f32 %v2179, %v2274
        %v2338 = vadd.f32 %v2180, %v2273
        %v2339 = vadd.f32 %v2181, %v2277
        %v2340 = vadd.f32 %v2182, %v2276
        %v2341 = vadd.f32 %v2183, %v2280
        %v2342 = vadd.f32 %v2184, %v2279
        %v2343 = vadd.f32 %v2185, %v2283
        %v2344 = vadd.f32 %v2186, %v2282
        %v2345 = vadd.f32 %v2187, %v2286
        %v2346 = vadd.f32 %v2188, %v2285
        %v2347 = vadd.f32 %v2189, %v2289
        %v2348 = vadd.f32 %v2190, %v2288
        %v2349 = vadd.f32 %v2191, %v2292
        %v2350 = vadd.f32 %v2192, %v2291
        %v2351 = vadd.f32 %v2193, %v2295
        %v2352 = vadd.f32 %v2194, %v2294
        %v2353 = vadd.f32 %v2195, %v2298
        %v2354 = vadd.f32 %v2196, %v2297
        %v2355 = vlaneseq
        %v2356 = vshrl.u32 %v2355, 7
        %v2357 = vsub.s32 2, %v2356
        %v2358 = vrot.slane %v1382, %v2357
        %v2359 = vmul.f32 %v1352, %v2358
        %v2360 = vmul.f32 %v1353, %v2358
        %v2361 = vmul.f32 %v1354, %v2358
        %v2362 = vmul.f32 %v1355, %v2358
        %v2363 = vmul.f32 %v1356, %v2358
        %v2364 = vmul.f32 %v1357, %v2358
        %v2365 = vmul.f32 %v1358, %v2358
        %v2366 = vmul.f32 %v1359, %v2358
        %v2367 = vmul.f32 %v1360, %v2358
        %v2368 = vmul.f32 %v1361, %v2358
        %v2369 = vmul.f32 %v1362, %v2358
        %v2370 = vmul.f32 %v1363, %v2358
        %v2371 = vmul.f32 %v1364, %v2358
        %v2372 = vmul.f32 %v1365, %v2358
        %v2373 = vmul.f32 %v1366, %v2358
        %v2374 = vmul.f32 %v1367, %v2358
        %v2375 = vmul.f32 %v1368, %v2358
        %v2376 = vmul.f32 %v1369, %v2358
        %v2377 = vmul.f32 %v1370, %v2358
        %v2378 = vmul.f32 %v1371, %v2358
        %v2379 = vmul.f32 %v1372, %v2358
        %v2380 = vmul.f32 %v1373, %v2358
        %v2381 = vmul.f32 %v1374, %v2358
        %v2382 = vmul.f32 %v1375, %v2358
        %v2383 = vmul.f32 %v1376, %v2358
        %v2384 = vmul.f32 %v1377, %v2358
        %v2385 = vmul.f32 %v1378, %v2358
        %v2386 = vmul.f32 %v1379, %v2358
        %v2415 = vrot.slane %v2359, 2
        %v2416 = vrot.slane %v2360, 2
        %v2417 = vsel %vm1662, %v2415, %v2416
        %v2418 = vrot.slane %v2361, 2
        %v2419 = vrot.slane %v2362, 2
        %v2420 = vsel %vm1662, %v2418, %v2419
        %v2421 = vrot.slane %v2363, 2
        %v2422 = vrot.slane %v2364, 2
        %v2423 = vsel %vm1662, %v2421, %v2422
        %v2424 = vrot.slane %v2365, 2
        %v2425 = vrot.slane %v2366, 2
        %v2426 = vsel %vm1662, %v2424, %v2425
        %v2427 = vrot.slane %v2367, 2
        %v2428 = vrot.slane %v2368, 2
        %v2429 = vsel %vm1662, %v2427, %v2428
        %v2430 = vrot.slane %v2369, 2
        %v2431 = vrot.slane %v2370, 2
        %v2432 = vsel %vm1662, %v2430, %v2431
        %v2433 = vrot.slane %v2371, 2
        %v2434 = vrot.slane %v2372, 2
        %v2435 = vsel %vm1662, %v2433, %v2434
        %v2436 = vrot.slane %v2373, 2
        %v2437 = vrot.slane %v2374, 2
        %v2438 = vsel %vm1662, %v2436, %v2437
        %v2439 = vrot.slane %v2375, 2
        %v2440 = vrot.slane %v2376, 2
        %v2441 = vsel %vm1662, %v2439, %v2440
        %v2442 = vrot.slane %v2377, 2
        %v2443 = vrot.slane %v2378, 2
        %v2444 = vsel %vm1662, %v2442, %v2443
        %v2445 = vrot.slane %v2379, 2
        %v2446 = vrot.slane %v2380, 2
        %v2447 = vsel %vm1662, %v2445, %v2446
        %v2448 = vrot.slane %v2381, 2
        %v2449 = vrot.slane %v2382, 2
        %v2450 = vsel %vm1662, %v2448, %v2449
        %v2451 = vrot.slane %v2383, 2
        %v2452 = vrot.slane %v2384, 2
        %v2453 = vsel %vm1662, %v2451, %v2452
        %v2454 = vrot.slane %v2385, 2
        %v2455 = vrot.slane %v2386, 2
        %v2456 = vsel %vm1662, %v2454, %v2455
        %v2485 = vadd.f32 %v2327, %v2417
        %v2486 = vadd.f32 %v2328, %v2416
        %v2487 = vadd.f32 %v2329, %v2420
        %v2488 = vadd.f32 %v2330, %v2419
        %v2489 = vadd.f32 %v2331, %v2423
        %v2490 = vadd.f32 %v2332, %v2422
        %v2491 = vadd.f32 %v2333, %v2426
        %v2492 = vadd.f32 %v2334, %v2425
        %v2493 = vadd.f32 %v2335, %v2429
        %v2494 = vadd.f32 %v2336, %v2428
        %v2495 = vadd.f32 %v2337, %v2432
        %v2496 = vadd.f32 %v2338, %v2431
        %v2497 = vadd.f32 %v2339, %v2435
        %v2498 = vadd.f32 %v2340, %v2434
        %v2499 = vadd.f32 %v2341, %v2438
        %v2500 = vadd.f32 %v2342, %v2437
        %v2501 = vadd.f32 %v2343, %v2441
        %v2502 = vadd.f32 %v2344, %v2440
        %v2503 = vadd.f32 %v2345, %v2444
        %v2504 = vadd.f32 %v2346, %v2443
        %v2505 = vadd.f32 %v2347, %v2447
        %v2506 = vadd.f32 %v2348, %v2446
        %v2507 = vadd.f32 %v2349, %v2450
        %v2508 = vadd.f32 %v2350, %v2449
        %v2509 = vadd.f32 %v2351, %v2453
        %v2510 = vadd.f32 %v2352, %v2452
        %v2511 = vadd.f32 %v2353, %v2456
        %v2512 = vadd.f32 %v2354, %v2455
        %v2513 = vld [vmem:[%s361] sm:$0x1]
        %v2515 = vlaneseq
        %v2516 = vshrl.u32 %v2515, 7
        %v2517 = vsub.s32 0, %v2516
        %v2518 = vrot.slane %v2513, %v2517
        %v2520 = vadd.f32 %v2485, %v2518
        %v2521 = vadd.f32 %v2486, %v2518
        %v2522 = vadd.f32 %v2487, %v2518
        %v2523 = vadd.f32 %v2488, %v2518
        %v2524 = vadd.f32 %v2489, %v2518
        %v2525 = vadd.f32 %v2490, %v2518
        %v2526 = vadd.f32 %v2491, %v2518
        %v2527 = vadd.f32 %v2492, %v2518
        %v2528 = vadd.f32 %v2493, %v2518
        %v2529 = vadd.f32 %v2494, %v2518
        %v2530 = vadd.f32 %v2495, %v2518
        %v2531 = vadd.f32 %v2496, %v2518
        %v2532 = vadd.f32 %v2497, %v2518
        %v2533 = vadd.f32 %v2498, %v2518
        %v2534 = vadd.f32 %v2499, %v2518
        %v2535 = vadd.f32 %v2500, %v2518
        %v2536 = vadd.f32 %v2501, %v2518
        %v2537 = vadd.f32 %v2502, %v2518
        %v2538 = vadd.f32 %v2503, %v2518
        %v2539 = vadd.f32 %v2504, %v2518
        %v2540 = vadd.f32 %v2505, %v2518
        %v2541 = vadd.f32 %v2506, %v2518
        %v2542 = vadd.f32 %v2507, %v2518
        %v2543 = vadd.f32 %v2508, %v2518
        %v2544 = vadd.f32 %v2509, %v2518
        %v2545 = vadd.f32 %v2510, %v2518
        %v2546 = vadd.f32 %v2511, %v2518
        %v2547 = vadd.f32 %v2512, %v2518
        %v2576 = vrot.slane %v1350, 1
        %v2577 = vrot.slane %v1351, 1
        %v2578 = vsel %vm1503, %v2576, %v2577
        %v2579 = vrot.slane %v1352, 1
        %v2580 = vrot.slane %v1353, 1
        %v2581 = vsel %vm1503, %v2579, %v2580
        %v2582 = vrot.slane %v1354, 1
        %v2583 = vrot.slane %v1355, 1
        %v2584 = vsel %vm1503, %v2582, %v2583
        %v2585 = vrot.slane %v1356, 1
        %v2586 = vrot.slane %v1357, 1
        %v2587 = vsel %vm1503, %v2585, %v2586
        %v2588 = vrot.slane %v1358, 1
        %v2589 = vrot.slane %v1359, 1
        %v2590 = vsel %vm1503, %v2588, %v2589
        %v2591 = vrot.slane %v1360, 1
        %v2592 = vrot.slane %v1361, 1
        %v2593 = vsel %vm1503, %v2591, %v2592
        %v2594 = vrot.slane %v1362, 1
        %v2595 = vrot.slane %v1363, 1
        %v2596 = vsel %vm1503, %v2594, %v2595
        %v2597 = vrot.slane %v1364, 1
        %v2598 = vrot.slane %v1365, 1
        %v2599 = vsel %vm1503, %v2597, %v2598
        %v2600 = vrot.slane %v1366, 1
        %v2601 = vrot.slane %v1367, 1
        %v2602 = vsel %vm1503, %v2600, %v2601
        %v2603 = vrot.slane %v1368, 1
        %v2604 = vrot.slane %v1369, 1
        %v2605 = vsel %vm1503, %v2603, %v2604
        %v2606 = vrot.slane %v1370, 1
        %v2607 = vrot.slane %v1371, 1
        %v2608 = vsel %vm1503, %v2606, %v2607
        %v2609 = vrot.slane %v1372, 1
        %v2610 = vrot.slane %v1373, 1
        %v2611 = vsel %vm1503, %v2609, %v2610
        %v2612 = vrot.slane %v1374, 1
        %v2613 = vrot.slane %v1375, 1
        %v2614 = vsel %vm1503, %v2612, %v2613
        %v2615 = vrot.slane %v1376, 1
        %v2616 = vrot.slane %v1377, 1
        %v2617 = vsel %vm1503, %v2615, %v2616
        %v2646 = vadd.f32 %v2520, %v2578
        %v2647 = vadd.f32 %v2521, %v2577
        %v2648 = vadd.f32 %v2522, %v2581
        %v2649 = vadd.f32 %v2523, %v2580
        %v2650 = vadd.f32 %v2524, %v2584
        %v2651 = vadd.f32 %v2525, %v2583
        %v2652 = vadd.f32 %v2526, %v2587
        %v2653 = vadd.f32 %v2527, %v2586
        %v2654 = vadd.f32 %v2528, %v2590
        %v2655 = vadd.f32 %v2529, %v2589
        %v2656 = vadd.f32 %v2530, %v2593
        %v2657 = vadd.f32 %v2531, %v2592
        %v2658 = vadd.f32 %v2532, %v2596
        %v2659 = vadd.f32 %v2533, %v2595
        %v2660 = vadd.f32 %v2534, %v2599
        %v2661 = vadd.f32 %v2535, %v2598
        %v2662 = vadd.f32 %v2536, %v2602
        %v2663 = vadd.f32 %v2537, %v2601
        %v2664 = vadd.f32 %v2538, %v2605
        %v2665 = vadd.f32 %v2539, %v2604
        %v2666 = vadd.f32 %v2540, %v2608
        %v2667 = vadd.f32 %v2541, %v2607
        %v2668 = vadd.f32 %v2542, %v2611
        %v2669 = vadd.f32 %v2543, %v2610
        %v2670 = vadd.f32 %v2544, %v2614
        %v2671 = vadd.f32 %v2545, %v2613
        %v2672 = vadd.f32 %v2546, %v2617
        %v2673 = vadd.f32 %v2547, %v2616
        %2674 = vst.msk [vmem:[%s369] sm:$0xff] %vm584, %v2646
        %vm2675 = vcmask 521216
        %2676 = vst.msk [vmem:[%s369 + $0x8] sm:$0x3f] %vm2675, %v2647
        %2677 = vst.msk [vmem:[%s369 + $0x10] sm:$0xff] %vm584, %v2648
        %2678 = vst.msk [vmem:[%s369 + $0x18] sm:$0x3f] %vm2675, %v2649
        %2679 = vst.msk [vmem:[%s369 + $0x20] sm:$0xff] %vm584, %v2650
        %2680 = vst.msk [vmem:[%s369 + $0x28] sm:$0x3f] %vm2675, %v2651
        %2681 = vst.msk [vmem:[%s369 + $0x30] sm:$0xff] %vm584, %v2652
        %2682 = vst.msk [vmem:[%s369 + $0x38] sm:$0x3f] %vm2675, %v2653
        %2683 = vst.msk [vmem:[%s369 + $0x40] sm:$0xff] %vm584, %v2654
        %2684 = vst.msk [vmem:[%s369 + $0x48] sm:$0x3f] %vm2675, %v2655
        %2685 = vst.msk [vmem:[%s369 + $0x50] sm:$0xff] %vm584, %v2656
        %2686 = vst.msk [vmem:[%s369 + $0x58] sm:$0x3f] %vm2675, %v2657
        %2687 = vst.msk [vmem:[%s369 + $0x60] sm:$0xff] %vm584, %v2658
        %2688 = vst.msk [vmem:[%s369 + $0x68] sm:$0x3f] %vm2675, %v2659
        %2689 = vst.msk [vmem:[%s369 + $0x70] sm:$0xff] %vm584, %v2660
        %2690 = vst.msk [vmem:[%s369 + $0x78] sm:$0x3f] %vm2675, %v2661
        %2691 = vst.msk [vmem:[%s369 + $0x80] sm:$0xff] %vm584, %v2662
        %2692 = vst.msk [vmem:[%s369 + $0x88] sm:$0x3f] %vm2675, %v2663
        %2693 = vst.msk [vmem:[%s369 + $0x90] sm:$0xff] %vm584, %v2664
        %2694 = vst.msk [vmem:[%s369 + $0x98] sm:$0x3f] %vm2675, %v2665
        %2695 = vst.msk [vmem:[%s369 + $0xa0] sm:$0xff] %vm584, %v2666
        %2696 = vst.msk [vmem:[%s369 + $0xa8] sm:$0x3f] %vm2675, %v2667
        %2697 = vst.msk [vmem:[%s369 + $0xb0] sm:$0xff] %vm584, %v2668
        %2698 = vst.msk [vmem:[%s369 + $0xb8] sm:$0x3f] %vm2675, %v2669
        %2699 = vst.msk [vmem:[%s369 + $0xc0] sm:$0xff] %vm584, %v2670
        %2700 = vst.msk [vmem:[%s369 + $0xc8] sm:$0x3f] %vm2675, %v2671
        %2701 = vst.msk [vmem:[%s369 + $0xd0] sm:$0xff] %vm584, %v2672
        %2702 = vst.msk [vmem:[%s369 + $0xd8] sm:$0x3f] %vm2675, %v2673
      $region52: #{ldp_projector.3} parent=43 // pred_fallthru
        _
      %p2703 = scmp.lt.s32.totalorder %s22, 1
      %s2704 = scalar_select %p2703, %s22, 1
      %p2705 = scmp.lt.s32.totalorder %s23, 0
      %s2706 = scalar_select %p2705, %s23, 0
      %s2707 = smul.addr %s2704, 28
      %s2708 = sadd.s32 %s2706, %s2707
      %s2709 = smul.addr %s2708, 8
      %s2710 = scalar_lea.vmem %s6, %s2709
      // Predicated region
      $region53: #{ldp_projector.3} parent=43 // pred_check
        %p2711 = pneg %p211
      $region54: #{ldp_projector.3} parent=43 // pred_check_branch
        %2713 = sbr.rel (%p2711) target = $region56
      $region55: #{ldp_projector.3} parent=43 // pred_region
        _
      $region56: #{ldp_projector.3} parent=43 // pred_fallthru
        _
    $region44: #{ldp_projector.3} parent=5 // pred_fallthru
      _
    %p2714 = scmp.le.s32.totalorder 2, %s12
    // Predicated region
    $region57: #{ldp_projector.3} parent=5 // pred_check
      %p2715 = pneg %p2714
    $region58: #{ldp_projector.3} parent=5 // pred_check_branch
      %2717 = sbr.rel (%p2715) target = $region60
    $region59: #{ldp_projector.3} parent=5 // pred_region
      %s2718 = ssub.s32 %s12, 2
      // Predicated region
      $region61: #{ldp_projector.3} parent=59 // pred_check
        %p2719 = pneg %p217
      $region62: #{ldp_projector.3} parent=59 // pred_check_branch
        %2721 = sbr.rel (%p2719) target = $region64
      $region63: #{ldp_projector.3} parent=59 // pred_region
        %p2722 = scmp.lt.s32.totalorder %s25, 1
        %s2723 = scalar_select %p2722, %s25, 1
        %p2724 = scmp.lt.s32.totalorder %s26, 0
        %s2725 = scalar_select %p2724, %s26, 0
        %s2726 = smul.addr %s2723, 28
        %s2727 = sadd.s32 %s2725, %s2726
        %s2728 = smul.addr %s2727, 8
        %s2729 = scalar_lea.vmem %s6, %s2728
      $region64: #{ldp_projector.3} parent=59 // pred_fallthru
        _
    $region60: #{ldp_projector.3} parent=5 // pred_fallthru
      _
  $region6: #{ldp_projector.3} parent=0 // loop_footer
    %s16 = sadd.s32 1, %s12
  $region7: #{ldp_projector.3} parent=0 // loop_footer_branch
    %11 = sbr.rel target = $region3
  $region8: #{ldp_projector.3} parent=0 // loop_exit
    _

</llo_original>
